<compile_context>
chip_gen: v7x
topology: tpu7x:2x2x1
jax: 0.10.0
libtpu: 0.0.40
codegen_flags: <defaults>
</compile_context>

<pallas_src>
import jax
import jax.numpy as jnp
from jax.experimental import pallas as pl
from jax.experimental.pallas import tpu as pltpu


def _make_inception_kernel(B, H, W, Hp, Wp, Cin, c1, c2, c3, c4p):
    c2a, c2b = c2
    c3a, c3b = c3
    Ct = c1 + c2a + c3a            # fused 1x1 output channels (paths 1/2/3)
    Cs = c1 + c2b + c3b + c4p      # stored output channels (>= true Cout)

    def kernel(x_ref,
               w123_ref, b123_ref,
               w2b_ref, b2b_ref,
               w3b_ref, b3b_ref,
               w4_ref, b4_ref,
               o_ref):
        x = x_ref[...]                                    # (B, Hp, Wp, Cin) bf16

        # Interior-validity mask over the padded spatial extent.
        row = jax.lax.broadcasted_iota(jnp.int32, (1, Hp, Wp, 1), 1)
        col = jax.lax.broadcasted_iota(jnp.int32, (1, Hp, Wp, 1), 2)
        valid = (row >= 2) & (row < 2 + H) & (col >= 2) & (col < 2 + W)

        # ---- fused 1x1 convs for paths 1/2/3: one MXU matmul ----
        xf = x.reshape(B * Hp * Wp, Cin)                  # bf16
        y = jnp.dot(xf, w123_ref[...], preferred_element_type=jnp.float32)
        y = jnp.maximum(y + b123_ref[...], 0.0).reshape(B, Hp, Wp, Ct)

        # Path 1 output: interior slice of the fused 1x1 result (stays f32).
        p1 = y[:, 2:2 + H, 2:2 + W, 0:c1].reshape(B * H * W, c1)

        # Zero the padding ring (1x1 conv of zero-pad is relu(bias), must be 0
        # for the 3x3/5x5 conv padding semantics).  Only the channels feeding
        # paths 2/3 are masked, and the mask runs in bf16.
        yz = jnp.where(valid, y[..., c1:Ct].astype(jnp.bfloat16),
                       jnp.zeros((), jnp.bfloat16))        # (B, Hp, Wp, c2a+c3a)
        y2 = yz[..., :c2a]                                 # (B, Hp, Wp, c2a)
        y3 = yz[..., c2a:]                                 # (B, Hp, Wp, c3a)

        def conv_accum(act, kk, off, w_ref, b_ref, cout):
            # act: (B, Hp, Wp, c) zero-padded bf16 activation.
            # Build the kx taps once on the full padded-H extent (K = kk*c),
            # then accumulate kk per-ky matmuls -> no kk*kk*c cols tensor.
            c = act.shape[-1]
            cols = jnp.concatenate(
                [act[:, :, off + kx: off + kx + W, :] for kx in range(kk)],
                axis=-1)                                   # (B, Hp, W, kk*c)
            acc = jnp.zeros((B * H * W, cout), jnp.float32)
            for ky in range(kk):
                lhs = cols[:, off + ky: off + ky + H].reshape(B * H * W, kk * c)
                acc = acc + jnp.dot(lhs, w_ref[ky],
                                    preferred_element_type=jnp.float32)
            return jnp.maximum(acc + b_ref[...], 0.0)      # f32 epilogue

        # ---- path 2: 3x3 conv (pad=1), 3 matmuls of K=3*c2a ----
        p2 = conv_accum(y2, 3, 1, w2b_ref, b2b_ref, c2b)

        # ---- path 3: 5x5 conv (pad=2), 5 matmuls of K=5*c3a ----
        p3 = conv_accum(y3, 5, 0, w3b_ref, b3b_ref, c3b)

        # ---- path 4: 3x3/s1 maxpool (-inf border, bf16) -> 1x1 conv + ReLU ----
        neg = jnp.asarray(-jnp.inf, x.dtype)
        xm = jnp.where(valid, x, neg)
        r = jnp.maximum(jnp.maximum(xm[:, 1:1 + H], xm[:, 2:2 + H]),
                        xm[:, 3:3 + H])                    # (B, H, Wp, Cin)
        pooled = jnp.maximum(jnp.maximum(r[:, :, 1:1 + W], r[:, :, 2:2 + W]),
                             r[:, :, 3:3 + W])             # (B, H, W, Cin) bf16
        z4 = jnp.dot(pooled.reshape(B * H * W, Cin), w4_ref[...],
                     preferred_element_type=jnp.float32)
        p4 = jnp.maximum(z4 + b4_ref[...], 0.0)            # (B*H*W, c4p)

        # ---- channel concat + single lane-dense (Cs % 128 == 0) store ----
        out = jnp.concatenate([p1, p2, p3, p4], axis=-1)   # (B*H*W, Cs) f32
        o_ref[...] = out.reshape(B, H, W, Cs)

    return kernel


def _vmem_budget_bytes():
    """~70% of the chip's physical VMEM (v7x: 64 MiB, v5e/v6e: 128 MiB)."""
    phys = None
    try:
        info = pltpu.get_tpu_info()
        phys = getattr(info, "vmem_capacity_bytes", None)
    except Exception:
        phys = None
    if not phys:
        kind = ""
        try:
            kind = jax.devices()[0].device_kind.lower()
        except Exception:
            pass
        phys = (64 << 20) if ("v7" in kind or "7x" in kind) else (128 << 20)
    return int(phys * 0.7)


def _block_vmem_bytes(B, H, W, Hp, Wp, Cin, c1, c2a, c2b, c3a, c3b, c4p):
    """Rough live-set estimate for one grid step (bf16 stream, f32 epilogues)."""
    Ct = c1 + c2a + c3a
    Cs = c1 + c2b + c3b + c4p
    byt = 0
    byt += 2 * (B * Hp * Wp * Cin * 2)                   # bf16 x block (double-buffered)
    byt += B * Hp * Wp * Ct * 4                          # fused 1x1 output (f32)
    byt += B * Hp * Wp * (c2a + c3a) * 2                 # masked bf16 activations
    byt += B * Hp * W * 5 * max(c2a, c3a) * 2            # widest im2col cols tensor
    byt += B * H * W * max(c2b, c3b) * 4                 # f32 conv accumulator
    byt += B * Hp * Wp * Cin * 2 + B * H * W * Cin * 2   # maxpool temporaries
    byt += 3 * (B * H * W * Cs * 4)                      # concat + buffered out block
    return byt


def _pick_block_n(N, fits, cap=32):
    """Largest divisor of N that fits the VMEM budget while keeping grid
    length >= 2 (so the 'parallel' batch axis can use both v7x TensorCores)."""
    best = 1
    for b in range(1, min(N, cap) + 1):
        if N % b:
            continue
        if N > 1 and N // b < 2:
            continue
        if fits(b):
            best = b
    return best


def inception_forward(x_nchw, params):
    """x_nchw: (N, Cin, H, W) float32 — matches the PyTorch module's input."""
    N, Cin, H, W = x_nchw.shape
    (w1, b1, w2a, b2a, w2b, b2b, w3a, b3a, w3b, b3b, w4, b4) = params
    c1 = w1.shape[1]
    c2a, c2b = w2b.shape[1], w2b.shape[2]
    c3a, c3b = w3b.shape[1], w3b.shape[2]
    c4 = w4.shape[1]
    Cout = c1 + c2b + c3b + c4

    # Lane-dense store: pad path-4 output channels so the stored channel
    # count is a multiple of 128 (zero columns come out of the MXU for free).
    pad_c = (-Cout) % 128
    c4p = c4 + pad_c
    Cs = Cout + pad_c

    # NHWC + bf16 activation stream + zero-pad: 2 on top/bottom/left,
    # right-pad so Wp % 8 == 0 (keeps in-kernel reshapes vreg-tile aligned).
    x = jnp.transpose(x_nchw, (0, 2, 3, 1)).astype(jnp.bfloat16)
    Hp = H + 4
    Wp = ((W + 4 + 7) // 8) * 8
    x = jnp.pad(x, ((0, 0), (2, 2), (2, Wp - W - 2), (0, 0)))

    # Trace-time parameter repacking:
    #  * fuse the three 1x1 convs on x into one weight/bias,
    #  * reshape 3x3/5x5 weights to (ky, kx*cin, cout) for per-ky accumulation,
    #  * zero-pad path-4 output channels to Cs, bf16 weights (f32 biases).
    w123 = jnp.concatenate([w1, w2a, w3a], axis=1).astype(jnp.bfloat16)
    b123 = jnp.concatenate([b1, b2a, b3a], axis=1)
    w2bf = w2b.reshape(3, 3 * c2a, c2b).astype(jnp.bfloat16)
    w3bf = w3b.reshape(5, 5 * c3a, c3b).astype(jnp.bfloat16)
    w4f = jnp.pad(w4, ((0, 0), (0, pad_c))).astype(jnp.bfloat16)
    b4f = jnp.pad(b4, ((0, 0), (0, pad_c)))
    packed = (w123, b123, w2bf, b2b, w3bf, b3b, w4f, b4f)

    budget = _vmem_budget_bytes()

    def fits(b):
        return _block_vmem_bytes(b, H, W, Hp, Wp, Cin,
                                 c1, c2a, c2b, c3a, c3b, c4p) <= budget // 2

    B = _pick_block_n(N, fits)
    # TODO(synk): for N == 1 on v7x, add an H-tiled 'parallel' axis (2-row
    # halo) so both TensorCores get work instead of a length-1 grid.

    kernel = _make_inception_kernel(B, H, W, Hp, Wp, Cin,
                                    c1, (c2a, c2b), (c3a, c3b), c4p)

    def rep_spec(p):
        nd = p.ndim
        return pl.BlockSpec(p.shape, lambda n: (0,) * nd)

    out_nhwc = pl.pallas_call(
        kernel,
        out_shape=jax.ShapeDtypeStruct((N, H, W, Cs), jnp.float32),
        grid=(N // B,),
        in_specs=[pl.BlockSpec((B, Hp, Wp, Cin), lambda n: (n, 0, 0, 0))]
                 + [rep_spec(p) for p in packed],
        out_specs=pl.BlockSpec((B, H, W, Cs), lambda n: (n, 0, 0, 0)),
        compiler_params=pltpu.CompilerParams(
            dimension_semantics=("parallel",),
            vmem_limit_bytes=int(budget)),
    )(x, *packed)

    return jnp.transpose(out_nhwc[..., :Cout], (0, 3, 1, 2))   # back to NCHW


# ---------------- parameter construction (deterministic, BN folded) ----------------
_EPS = 1e-5


def _folded_pointwise(key, cin, cout):
    kw, kb, kg, kbe = jax.random.split(key, 4)
    w = 0.1 * jax.random.normal(kw, (cin, cout), jnp.float32)
    b = 0.1 * jax.random.normal(kb, (cout,), jnp.float32)
    gamma = 1.0 + 0.1 * jax.random.normal(kg, (cout,), jnp.float32)
    beta = 0.1 * jax.random.normal(kbe, (cout,), jnp.float32)
    s = gamma / jnp.sqrt(1.0 + _EPS)
    return w * s[None, :], (b * s + beta)[None, :]


def _folded_spatial(key, ksize, cin, cout):
    kw, kb, kg, kbe = jax.random.split(key, 4)
    w = 0.1 * jax.random.normal(kw, (ksize * ksize, cin, cout), jnp.float32)
    b = 0.1 * jax.random.normal(kb, (cout,), jnp.float32)
    gamma = 1.0 + 0.1 * jax.random.normal(kg, (cout,), jnp.float32)
    beta = 0.1 * jax.random.normal(kbe, (cout,), jnp.float32)
    s = gamma / jnp.sqrt(1.0 + _EPS)
    return w * s[None, None, :], (b * s + beta)[None, :]


def init_inception_params(key, in_channels, c1, c2, c3, c4):
    k1, k2a, k2b, k3a, k3b, k4 = jax.random.split(key, 6)
    w1, b1 = _folded_pointwise(k1, in_channels, c1)
    w2a, b2a = _folded_pointwise(k2a, in_channels, c2[0])
    w2b, b2b = _folded_spatial(k2b, 3, c2[0], c2[1])
    w3a, b3a = _folded_pointwise(k3a, in_channels, c3[0])
    w3b, b3b = _folded_spatial(k3b, 5, c3[0], c3[1])
    w4, b4 = _folded_pointwise(k4, in_channels, c4)
    return (w1, b1, w2a, b2a, w2b, b2b, w3a, b3a, w3b, b3b, w4, b4)


# ---------------- pure-JAX reference for correctness check ----------------
def _ref_forward_nhwc(x, params):
    (w1, b1, w2a, b2a, w2b, b2b, w3a, b3a, w3b, b3b, w4, b4) = params
    dn = ('NHWC', 'HWIO', 'NHWC')

    def conv(x, w, b, k, pad):
        if w.ndim == 2:
            w4d = w.reshape(1, 1, *w.shape)
        else:
            w4d = w.reshape(k, k, w.shape[-2], w.shape[-1])
        y = jax.lax.conv_general_dilated(
            x, w4d, (1, 1), [(pad, pad), (pad, pad)], dimension_numbers=dn)
        return jnp.maximum(y + b.reshape(1, 1, 1, -1), 0.0)

    p1 = conv(x, w1, b1, 1, 0)
    p2 = conv(conv(x, w2a, b2a, 1, 0), w2b, b2b, 3, 1)
    p3 = conv(conv(x, w3a, b3a, 1, 0), w3b, b3b, 5, 2)
    pooled = jax.lax.reduce_window(
        x, -jnp.inf, jax.lax.max, (1, 3, 3, 1), (1, 1, 1, 1),
        [(0, 0), (1, 1), (1, 1), (0, 0)])
    p4 = conv(pooled, w4, b4, 1, 0)
    return jnp.concatenate([p1, p2, p3, p4], axis=-1)


if __name__ == "__main__":
    key = jax.random.PRNGKey(0)
    kx, kp = jax.random.split(key)

    # Small shapes consistent with the module: Inception(4, 8, (4, 8), (4, 8), 8)
    N, Cin, H, W = 2, 4, 16, 16
    c1, c2, c3, c4 = 8, (4, 8), (4, 8), 8

    x = jax.random.normal(kx, (N, Cin, H, W), jnp.float32)
    params = init_inception_params(kp, Cin, c1, c2, c3, c4)

    out = inception_forward(x, params)
    out = jax.block_until_ready(out)
    assert out.shape == (N, c1 + c2[1] + c3[1] + c4, H, W), out.shape

    ref = _ref_forward_nhwc(jnp.transpose(x, (0, 2, 3, 1)), params)
    ref = jnp.transpose(ref, (0, 3, 1, 2))
    assert jnp.allclose(out, ref, atol=5e-2, rtol=5e-2), \
        float(jnp.max(jnp.abs(out - ref)))

    print("KERNEL_OK")
</pallas_src>

<mosaic_0001>
module attributes {stable_mosaic.version = 11 : i64} {
  func.func @kernel(%arg0: i32, %arg1: memref<1x20x24x4xbf16, #tpu.memory_space<vmem>>, %arg2: memref<4x16xbf16, #tpu.memory_space<vmem>>, %arg3: memref<1x16xf32, #tpu.memory_space<vmem>>, %arg4: memref<3x12x8xbf16, #tpu.memory_space<vmem>>, %arg5: memref<1x8xf32, #tpu.memory_space<vmem>>, %arg6: memref<5x20x8xbf16, #tpu.memory_space<vmem>>, %arg7: memref<1x8xf32, #tpu.memory_space<vmem>>, %arg8: memref<4x104xbf16, #tpu.memory_space<vmem>>, %arg9: memref<1x104xf32, #tpu.memory_space<vmem>>, %arg10: memref<1x16x16x128xf32, #tpu.memory_space<vmem>>) attributes {dimension_semantics = [#tpu.dimension_semantics<parallel>], iteration_bounds = array<i64: 2>, scalar_prefetch = 0 : i64, scratch_operands = 0 : i64, tpu.core_type = #tpu.core_type<tc>, window_params = [{transform_indices = @transform_0, window_bounds = array<i64: 1, 20, 24, 4>}, {pipeline_mode = #tpu.pipeline_mode<synchronous>, transform_indices = @transform_1, window_bounds = array<i64: 4, 16>}, {pipeline_mode = #tpu.pipeline_mode<synchronous>, transform_indices = @transform_2, window_bounds = array<i64: 1, 16>}, {pipeline_mode = #tpu.pipeline_mode<synchronous>, transform_indices = @transform_3, window_bounds = array<i64: 3, 12, 8>}, {pipeline_mode = #tpu.pipeline_mode<synchronous>, transform_indices = @transform_4, window_bounds = array<i64: 1, 8>}, {pipeline_mode = #tpu.pipeline_mode<synchronous>, transform_indices = @transform_5, window_bounds = array<i64: 5, 20, 8>}, {pipeline_mode = #tpu.pipeline_mode<synchronous>, transform_indices = @transform_6, window_bounds = array<i64: 1, 8>}, {pipeline_mode = #tpu.pipeline_mode<synchronous>, transform_indices = @transform_7, window_bounds = array<i64: 4, 104>}, {pipeline_mode = #tpu.pipeline_mode<synchronous>, transform_indices = @transform_8, window_bounds = array<i64: 1, 104>}, {transform_indices = @transform_9, window_bounds = array<i64: 1, 16, 16, 128>}]} {
    %c0 = arith.constant 0 : index
    %c0_0 = arith.constant 0 : index
    %c0_1 = arith.constant 0 : index
    %c0_2 = arith.constant 0 : index
    %0 = vector.load %arg1[%c0, %c0_0, %c0_1, %c0_2] : memref<1x20x24x4xbf16, #tpu.memory_space<vmem>>, vector<1x20x24x4xbf16>
    %1 = tpu.iota {dimensions = array<i32: 1>} : vector<1x20x24x1xi32>
    %2 = tpu.iota {dimensions = array<i32: 2>} : vector<1x20x24x1xi32>
    %c2_i32 = arith.constant 2 : i32
    %3 = vector.broadcast %c2_i32 : i32 to vector<1x20x24x1xi32>
    %4 = arith.cmpi sge, %1, %3 : vector<1x20x24x1xi32>
    %c18_i32 = arith.constant 18 : i32
    %5 = vector.broadcast %c18_i32 : i32 to vector<1x20x24x1xi32>
    %6 = arith.cmpi slt, %1, %5 : vector<1x20x24x1xi32>
    %7 = arith.andi %4, %6 : vector<1x20x24x1xi1>
    %c2_i32_3 = arith.constant 2 : i32
    %8 = vector.broadcast %c2_i32_3 : i32 to vector<1x20x24x1xi32>
    %9 = arith.cmpi sge, %2, %8 : vector<1x20x24x1xi32>
    %10 = arith.andi %7, %9 : vector<1x20x24x1xi1>
    %c18_i32_4 = arith.constant 18 : i32
    %11 = vector.broadcast %c18_i32_4 : i32 to vector<1x20x24x1xi32>
    %12 = arith.cmpi slt, %2, %11 : vector<1x20x24x1xi32>
    %13 = arith.andi %10, %12 : vector<1x20x24x1xi1>
    %14 = vector.shape_cast %0 : vector<1x20x24x4xbf16> to vector<480x4xbf16>
    %c0_5 = arith.constant 0 : index
    %c0_6 = arith.constant 0 : index
    %15 = vector.load %arg2[%c0_5, %c0_6] : memref<4x16xbf16, #tpu.memory_space<vmem>>, vector<4x16xbf16>
    %cst = arith.constant dense<0.000000e+00> : vector<480x16xf32>
    %16 = tpu.matmul %14, %15, %cst {dimension_numbers = #tpu.dot_dimension_numbers<[1], [0], [0], [1], [0, 0, 1, 1], [], []>} : vector<480x4xbf16>, vector<4x16xbf16>, vector<480x16xf32> -> vector<480x16xf32>
    %c0_7 = arith.constant 0 : index
    %c0_8 = arith.constant 0 : index
    %17 = vector.load %arg3[%c0_7, %c0_8] : memref<1x16xf32, #tpu.memory_space<vmem>>, vector<1x16xf32>
    %18 = vector.broadcast %17 : vector<1x16xf32> to vector<480x16xf32>
    %19 = arith.addf %16, %18 : vector<480x16xf32>
    %cst_9 = arith.constant 0.000000e+00 : f32
    %20 = vector.broadcast %cst_9 : f32 to vector<480x16xf32>
    %21 = arith.maximumf %19, %20 : vector<480x16xf32>
    %22 = vector.shape_cast %21 : vector<480x16xf32> to vector<1x20x24x16xf32>
    %23 = vector.extract_strided_slice %22 {offsets = [0, 2, 2, 0], sizes = [1, 16, 16, 8], strides = [1, 1, 1, 1]} : vector<1x20x24x16xf32> to vector<1x16x16x8xf32>
    %24 = vector.shape_cast %23 : vector<1x16x16x8xf32> to vector<256x8xf32>
    %25 = vector.extract_strided_slice %22 {offsets = [0, 0, 0, 8], sizes = [1, 20, 24, 8], strides = [1, 1, 1, 1]} : vector<1x20x24x16xf32> to vector<1x20x24x8xf32>
    %26 = arith.truncf %25 : vector<1x20x24x8xf32> to vector<1x20x24x8xbf16>
    %cst_10 = arith.constant 0.000000e+00 : bf16
    %27 = vector.shape_cast %13 : vector<1x20x24x1xi1> to vector<1x20x24x1xi1>
    %28 = vector.broadcast %27 : vector<1x20x24x1xi1> to vector<1x20x24x8xi1>
    %29 = vector.broadcast %cst_10 : bf16 to vector<1x20x24x8xbf16>
    %30 = arith.select %28, %26, %29 : vector<1x20x24x8xi1>, vector<1x20x24x8xbf16>
    %31 = vector.extract_strided_slice %30 {offsets = [0, 0, 0, 0], sizes = [1, 20, 24, 4], strides = [1, 1, 1, 1]} : vector<1x20x24x8xbf16> to vector<1x20x24x4xbf16>
    %32 = vector.extract_strided_slice %30 {offsets = [0, 0, 0, 4], sizes = [1, 20, 24, 4], strides = [1, 1, 1, 1]} : vector<1x20x24x8xbf16> to vector<1x20x24x4xbf16>
    %33 = vector.extract_strided_slice %31 {offsets = [0, 0, 1, 0], sizes = [1, 20, 16, 4], strides = [1, 1, 1, 1]} : vector<1x20x24x4xbf16> to vector<1x20x16x4xbf16>
    %34 = vector.extract_strided_slice %31 {offsets = [0, 0, 2, 0], sizes = [1, 20, 16, 4], strides = [1, 1, 1, 1]} : vector<1x20x24x4xbf16> to vector<1x20x16x4xbf16>
    %35 = vector.extract_strided_slice %31 {offsets = [0, 0, 3, 0], sizes = [1, 20, 16, 4], strides = [1, 1, 1, 1]} : vector<1x20x24x4xbf16> to vector<1x20x16x4xbf16>
    %36 = tpu.concatenate %33, %34, %35 in 3 : vector<1x20x16x4xbf16>, vector<1x20x16x4xbf16>, vector<1x20x16x4xbf16> -> vector<1x20x16x12xbf16>
    %cst_11 = arith.constant 0.000000e+00 : f32
    %37 = vector.broadcast %cst_11 : f32 to vector<256x8xf32>
    %38 = vector.extract_strided_slice %36 {offsets = [0, 1, 0, 0], sizes = [1, 16, 16, 12], strides = [1, 1, 1, 1]} : vector<1x20x16x12xbf16> to vector<1x16x16x12xbf16>
    %39 = vector.shape_cast %38 : vector<1x16x16x12xbf16> to vector<256x12xbf16>
    %c0_12 = arith.constant 0 : index
    %c0_13 = arith.constant 0 : index
    %c0_14 = arith.constant 0 : index
    %40 = vector.load %arg4[%c0_12, %c0_13, %c0_14] : memref<3x12x8xbf16, #tpu.memory_space<vmem>>, vector<1x12x8xbf16>
    %41 = vector.shape_cast %40 : vector<1x12x8xbf16> to vector<12x8xbf16>
    %cst_15 = arith.constant dense<0.000000e+00> : vector<256x8xf32>
    %42 = tpu.matmul %39, %41, %cst_15 {dimension_numbers = #tpu.dot_dimension_numbers<[1], [0], [0], [1], [0, 0, 1, 1], [], []>} : vector<256x12xbf16>, vector<12x8xbf16>, vector<256x8xf32> -> vector<256x8xf32>
    %43 = arith.addf %37, %42 : vector<256x8xf32>
    %44 = vector.extract_strided_slice %36 {offsets = [0, 2, 0, 0], sizes = [1, 16, 16, 12], strides = [1, 1, 1, 1]} : vector<1x20x16x12xbf16> to vector<1x16x16x12xbf16>
    %45 = vector.shape_cast %44 : vector<1x16x16x12xbf16> to vector<256x12xbf16>
    %c1 = arith.constant 1 : index
    %c0_16 = arith.constant 0 : index
    %c0_17 = arith.constant 0 : index
    %46 = vector.load %arg4[%c1, %c0_16, %c0_17] : memref<3x12x8xbf16, #tpu.memory_space<vmem>>, vector<1x12x8xbf16>
    %47 = vector.shape_cast %46 : vector<1x12x8xbf16> to vector<12x8xbf16>
    %cst_18 = arith.constant dense<0.000000e+00> : vector<256x8xf32>
    %48 = tpu.matmul %45, %47, %cst_18 {dimension_numbers = #tpu.dot_dimension_numbers<[1], [0], [0], [1], [0, 0, 1, 1], [], []>} : vector<256x12xbf16>, vector<12x8xbf16>, vector<256x8xf32> -> vector<256x8xf32>
    %49 = arith.addf %43, %48 : vector<256x8xf32>
    %50 = vector.extract_strided_slice %36 {offsets = [0, 3, 0, 0], sizes = [1, 16, 16, 12], strides = [1, 1, 1, 1]} : vector<1x20x16x12xbf16> to vector<1x16x16x12xbf16>
    %51 = vector.shape_cast %50 : vector<1x16x16x12xbf16> to vector<256x12xbf16>
    %c2 = arith.constant 2 : index
    %c0_19 = arith.constant 0 : index
    %c0_20 = arith.constant 0 : index
    %52 = vector.load %arg4[%c2, %c0_19, %c0_20] : memref<3x12x8xbf16, #tpu.memory_space<vmem>>, vector<1x12x8xbf16>
    %53 = vector.shape_cast %52 : vector<1x12x8xbf16> to vector<12x8xbf16>
    %cst_21 = arith.constant dense<0.000000e+00> : vector<256x8xf32>
    %54 = tpu.matmul %51, %53, %cst_21 {dimension_numbers = #tpu.dot_dimension_numbers<[1], [0], [0], [1], [0, 0, 1, 1], [], []>} : vector<256x12xbf16>, vector<12x8xbf16>, vector<256x8xf32> -> vector<256x8xf32>
    %55 = arith.addf %49, %54 : vector<256x8xf32>
    %c0_22 = arith.constant 0 : index
    %c0_23 = arith.constant 0 : index
    %56 = vector.load %arg5[%c0_22, %c0_23] : memref<1x8xf32, #tpu.memory_space<vmem>>, vector<1x8xf32>
    %57 = vector.broadcast %56 : vector<1x8xf32> to vector<256x8xf32>
    %58 = arith.addf %55, %57 : vector<256x8xf32>
    %cst_24 = arith.constant 0.000000e+00 : f32
    %59 = vector.broadcast %cst_24 : f32 to vector<256x8xf32>
    %60 = arith.maximumf %58, %59 : vector<256x8xf32>
    %61 = vector.extract_strided_slice %32 {offsets = [0, 0, 0, 0], sizes = [1, 20, 16, 4], strides = [1, 1, 1, 1]} : vector<1x20x24x4xbf16> to vector<1x20x16x4xbf16>
    %62 = vector.extract_strided_slice %32 {offsets = [0, 0, 1, 0], sizes = [1, 20, 16, 4], strides = [1, 1, 1, 1]} : vector<1x20x24x4xbf16> to vector<1x20x16x4xbf16>
    %63 = vector.extract_strided_slice %32 {offsets = [0, 0, 2, 0], sizes = [1, 20, 16, 4], strides = [1, 1, 1, 1]} : vector<1x20x24x4xbf16> to vector<1x20x16x4xbf16>
    %64 = vector.extract_strided_slice %32 {offsets = [0, 0, 3, 0], sizes = [1, 20, 16, 4], strides = [1, 1, 1, 1]} : vector<1x20x24x4xbf16> to vector<1x20x16x4xbf16>
    %65 = vector.extract_strided_slice %32 {offsets = [0, 0, 4, 0], sizes = [1, 20, 16, 4], strides = [1, 1, 1, 1]} : vector<1x20x24x4xbf16> to vector<1x20x16x4xbf16>
    %66 = tpu.concatenate %61, %62, %63, %64, %65 in 3 : vector<1x20x16x4xbf16>, vector<1x20x16x4xbf16>, vector<1x20x16x4xbf16>, vector<1x20x16x4xbf16>, vector<1x20x16x4xbf16> -> vector<1x20x16x20xbf16>
    %cst_25 = arith.constant 0.000000e+00 : f32
    %67 = vector.broadcast %cst_25 : f32 to vector<256x8xf32>
    %68 = vector.extract_strided_slice %66 {offsets = [0, 0, 0, 0], sizes = [1, 16, 16, 20], strides = [1, 1, 1, 1]} : vector<1x20x16x20xbf16> to vector<1x16x16x20xbf16>
    %69 = vector.shape_cast %68 : vector<1x16x16x20xbf16> to vector<256x20xbf16>
    %c0_26 = arith.constant 0 : index
    %c0_27 = arith.constant 0 : index
    %c0_28 = arith.constant 0 : index
    %70 = vector.load %arg6[%c0_26, %c0_27, %c0_28] : memref<5x20x8xbf16, #tpu.memory_space<vmem>>, vector<1x20x8xbf16>
    %71 = vector.shape_cast %70 : vector<1x20x8xbf16> to vector<20x8xbf16>
    %cst_29 = arith.constant dense<0.000000e+00> : vector<256x8xf32>
    %72 = tpu.matmul %69, %71, %cst_29 {dimension_numbers = #tpu.dot_dimension_numbers<[1], [0], [0], [1], [0, 0, 1, 1], [], []>} : vector<256x20xbf16>, vector<20x8xbf16>, vector<256x8xf32> -> vector<256x8xf32>
    %73 = arith.addf %67, %72 : vector<256x8xf32>
    %74 = vector.extract_strided_slice %66 {offsets = [0, 1, 0, 0], sizes = [1, 16, 16, 20], strides = [1, 1, 1, 1]} : vector<1x20x16x20xbf16> to vector<1x16x16x20xbf16>
    %75 = vector.shape_cast %74 : vector<1x16x16x20xbf16> to vector<256x20xbf16>
    %c1_30 = arith.constant 1 : index
    %c0_31 = arith.constant 0 : index
    %c0_32 = arith.constant 0 : index
    %76 = vector.load %arg6[%c1_30, %c0_31, %c0_32] : memref<5x20x8xbf16, #tpu.memory_space<vmem>>, vector<1x20x8xbf16>
    %77 = vector.shape_cast %76 : vector<1x20x8xbf16> to vector<20x8xbf16>
    %cst_33 = arith.constant dense<0.000000e+00> : vector<256x8xf32>
    %78 = tpu.matmul %75, %77, %cst_33 {dimension_numbers = #tpu.dot_dimension_numbers<[1], [0], [0], [1], [0, 0, 1, 1], [], []>} : vector<256x20xbf16>, vector<20x8xbf16>, vector<256x8xf32> -> vector<256x8xf32>
    %79 = arith.addf %73, %78 : vector<256x8xf32>
    %80 = vector.extract_strided_slice %66 {offsets = [0, 2, 0, 0], sizes = [1, 16, 16, 20], strides = [1, 1, 1, 1]} : vector<1x20x16x20xbf16> to vector<1x16x16x20xbf16>
    %81 = vector.shape_cast %80 : vector<1x16x16x20xbf16> to vector<256x20xbf16>
    %c2_34 = arith.constant 2 : index
    %c0_35 = arith.constant 0 : index
    %c0_36 = arith.constant 0 : index
    %82 = vector.load %arg6[%c2_34, %c0_35, %c0_36] : memref<5x20x8xbf16, #tpu.memory_space<vmem>>, vector<1x20x8xbf16>
    %83 = vector.shape_cast %82 : vector<1x20x8xbf16> to vector<20x8xbf16>
    %cst_37 = arith.constant dense<0.000000e+00> : vector<256x8xf32>
    %84 = tpu.matmul %81, %83, %cst_37 {dimension_numbers = #tpu.dot_dimension_numbers<[1], [0], [0], [1], [0, 0, 1, 1], [], []>} : vector<256x20xbf16>, vector<20x8xbf16>, vector<256x8xf32> -> vector<256x8xf32>
    %85 = arith.addf %79, %84 : vector<256x8xf32>
    %86 = vector.extract_strided_slice %66 {offsets = [0, 3, 0, 0], sizes = [1, 16, 16, 20], strides = [1, 1, 1, 1]} : vector<1x20x16x20xbf16> to vector<1x16x16x20xbf16>
    %87 = vector.shape_cast %86 : vector<1x16x16x20xbf16> to vector<256x20xbf16>
    %c3 = arith.constant 3 : index
    %c0_38 = arith.constant 0 : index
    %c0_39 = arith.constant 0 : index
    %88 = vector.load %arg6[%c3, %c0_38, %c0_39] : memref<5x20x8xbf16, #tpu.memory_space<vmem>>, vector<1x20x8xbf16>
    %89 = vector.shape_cast %88 : vector<1x20x8xbf16> to vector<20x8xbf16>
    %cst_40 = arith.constant dense<0.000000e+00> : vector<256x8xf32>
    %90 = tpu.matmul %87, %89, %cst_40 {dimension_numbers = #tpu.dot_dimension_numbers<[1], [0], [0], [1], [0, 0, 1, 1], [], []>} : vector<256x20xbf16>, vector<20x8xbf16>, vector<256x8xf32> -> vector<256x8xf32>
    %91 = arith.addf %85, %90 : vector<256x8xf32>
    %92 = vector.extract_strided_slice %66 {offsets = [0, 4, 0, 0], sizes = [1, 16, 16, 20], strides = [1, 1, 1, 1]} : vector<1x20x16x20xbf16> to vector<1x16x16x20xbf16>
    %93 = vector.shape_cast %92 : vector<1x16x16x20xbf16> to vector<256x20xbf16>
    %c4 = arith.constant 4 : index
    %c0_41 = arith.constant 0 : index
    %c0_42 = arith.constant 0 : index
    %94 = vector.load %arg6[%c4, %c0_41, %c0_42] : memref<5x20x8xbf16, #tpu.memory_space<vmem>>, vector<1x20x8xbf16>
    %95 = vector.shape_cast %94 : vector<1x20x8xbf16> to vector<20x8xbf16>
    %cst_43 = arith.constant dense<0.000000e+00> : vector<256x8xf32>
    %96 = tpu.matmul %93, %95, %cst_43 {dimension_numbers = #tpu.dot_dimension_numbers<[1], [0], [0], [1], [0, 0, 1, 1], [], []>} : vector<256x20xbf16>, vector<20x8xbf16>, vector<256x8xf32> -> vector<256x8xf32>
    %97 = arith.addf %91, %96 : vector<256x8xf32>
    %c0_44 = arith.constant 0 : index
    %c0_45 = arith.constant 0 : index
    %98 = vector.load %arg7[%c0_44, %c0_45] : memref<1x8xf32, #tpu.memory_space<vmem>>, vector<1x8xf32>
    %99 = vector.broadcast %98 : vector<1x8xf32> to vector<256x8xf32>
    %100 = arith.addf %97, %99 : vector<256x8xf32>
    %cst_46 = arith.constant 0.000000e+00 : f32
    %101 = vector.broadcast %cst_46 : f32 to vector<256x8xf32>
    %102 = arith.maximumf %100, %101 : vector<256x8xf32>
    %cst_47 = arith.constant 0xFF80 : bf16
    %103 = vector.shape_cast %13 : vector<1x20x24x1xi1> to vector<1x20x24x1xi1>
    %104 = vector.broadcast %103 : vector<1x20x24x1xi1> to vector<1x20x24x4xi1>
    %105 = vector.broadcast %cst_47 : bf16 to vector<1x20x24x4xbf16>
    %106 = arith.select %104, %0, %105 : vector<1x20x24x4xi1>, vector<1x20x24x4xbf16>
    %107 = vector.extract_strided_slice %106 {offsets = [0, 1, 0, 0], sizes = [1, 16, 24, 4], strides = [1, 1, 1, 1]} : vector<1x20x24x4xbf16> to vector<1x16x24x4xbf16>
    %108 = vector.extract_strided_slice %106 {offsets = [0, 2, 0, 0], sizes = [1, 16, 24, 4], strides = [1, 1, 1, 1]} : vector<1x20x24x4xbf16> to vector<1x16x24x4xbf16>
    %109 = arith.maximumf %107, %108 : vector<1x16x24x4xbf16>
    %110 = vector.extract_strided_slice %106 {offsets = [0, 3, 0, 0], sizes = [1, 16, 24, 4], strides = [1, 1, 1, 1]} : vector<1x20x24x4xbf16> to vector<1x16x24x4xbf16>
    %111 = arith.maximumf %109, %110 : vector<1x16x24x4xbf16>
    %112 = vector.extract_strided_slice %111 {offsets = [0, 0, 1, 0], sizes = [1, 16, 16, 4], strides = [1, 1, 1, 1]} : vector<1x16x24x4xbf16> to vector<1x16x16x4xbf16>
    %113 = vector.extract_strided_slice %111 {offsets = [0, 0, 2, 0], sizes = [1, 16, 16, 4], strides = [1, 1, 1, 1]} : vector<1x16x24x4xbf16> to vector<1x16x16x4xbf16>
    %114 = arith.maximumf %112, %113 : vector<1x16x16x4xbf16>
    %115 = vector.extract_strided_slice %111 {offsets = [0, 0, 3, 0], sizes = [1, 16, 16, 4], strides = [1, 1, 1, 1]} : vector<1x16x24x4xbf16> to vector<1x16x16x4xbf16>
    %116 = arith.maximumf %114, %115 : vector<1x16x16x4xbf16>
    %117 = vector.shape_cast %116 : vector<1x16x16x4xbf16> to vector<256x4xbf16>
    %c0_48 = arith.constant 0 : index
    %c0_49 = arith.constant 0 : index
    %118 = vector.load %arg8[%c0_48, %c0_49] : memref<4x104xbf16, #tpu.memory_space<vmem>>, vector<4x104xbf16>
    %cst_50 = arith.constant dense<0.000000e+00> : vector<256x104xf32>
    %119 = tpu.matmul %117, %118, %cst_50 {dimension_numbers = #tpu.dot_dimension_numbers<[1], [0], [0], [1], [0, 0, 1, 1], [], []>} : vector<256x4xbf16>, vector<4x104xbf16>, vector<256x104xf32> -> vector<256x104xf32>
    %c0_51 = arith.constant 0 : index
    %c0_52 = arith.constant 0 : index
    %120 = vector.load %arg9[%c0_51, %c0_52] : memref<1x104xf32, #tpu.memory_space<vmem>>, vector<1x104xf32>
    %121 = vector.broadcast %120 : vector<1x104xf32> to vector<256x104xf32>
    %122 = arith.addf %119, %121 : vector<256x104xf32>
    %cst_53 = arith.constant 0.000000e+00 : f32
    %123 = vector.broadcast %cst_53 : f32 to vector<256x104xf32>
    %124 = arith.maximumf %122, %123 : vector<256x104xf32>
    %125 = tpu.concatenate %24, %60, %102, %124 in 1 : vector<256x8xf32>, vector<256x8xf32>, vector<256x8xf32>, vector<256x104xf32> -> vector<256x128xf32>
    %126 = vector.shape_cast %125 : vector<256x128xf32> to vector<1x16x16x128xf32>
    %c0_54 = arith.constant 0 : index
    %c0_55 = arith.constant 0 : index
    %c0_56 = arith.constant 0 : index
    %c0_57 = arith.constant 0 : index
    %127 = vector.load %arg10[%c0_54, %c0_55, %c0_56, %c0_57] : memref<1x16x16x128xf32, #tpu.memory_space<vmem>>, vector<1x16x16x128xf32>
    tpu.vector_store %arg10[%c0_54, %c0_55, %c0_56, %c0_57], %126 {strides = array<i32>} : memref<1x16x16x128xf32, #tpu.memory_space<vmem>>, vector<1x16x16x128xf32>,
    return
  }
  func.func @transform_0(%arg0: i32) -> (i32, i32, i32, i32) {
    %c0_i32 = arith.constant 0 : i32
    %c0_i32_0 = arith.constant 0 : i32
    %c0_i32_1 = arith.constant 0 : i32
    %c0_i32_2 = arith.constant 0 : i32
    return %arg0, %c0_i32, %c0_i32_0, %c0_i32_1 : i32, i32, i32, i32
  }
  func.func @transform_1(%arg0: i32) -> (i32, i32) {
    %c0_i32 = arith.constant 0 : i32
    %c0_i32_0 = arith.constant 0 : i32
    %c0_i32_1 = arith.constant 0 : i32
    return %c0_i32, %c0_i32_0 : i32, i32
  }
  func.func @transform_2(%arg0: i32) -> (i32, i32) {
    %c0_i32 = arith.constant 0 : i32
    %c0_i32_0 = arith.constant 0 : i32
    %c0_i32_1 = arith.constant 0 : i32
    return %c0_i32, %c0_i32_0 : i32, i32
  }
  func.func @transform_3(%arg0: i32) -> (i32, i32, i32) {
    %c0_i32 = arith.constant 0 : i32
    %c0_i32_0 = arith.constant 0 : i32
    %c0_i32_1 = arith.constant 0 : i32
    %c0_i32_2 = arith.constant 0 : i32
    return %c0_i32, %c0_i32_0, %c0_i32_1 : i32, i32, i32
  }
  func.func @transform_4(%arg0: i32) -> (i32, i32) {
    %c0_i32 = arith.constant 0 : i32
    %c0_i32_0 = arith.constant 0 : i32
    %c0_i32_1 = arith.constant 0 : i32
    return %c0_i32, %c0_i32_0 : i32, i32
  }
  func.func @transform_5(%arg0: i32) -> (i32, i32, i32) {
    %c0_i32 = arith.constant 0 : i32
    %c0_i32_0 = arith.constant 0 : i32
    %c0_i32_1 = arith.constant 0 : i32
    %c0_i32_2 = arith.constant 0 : i32
    return %c0_i32, %c0_i32_0, %c0_i32_1 : i32, i32, i32
  }
  func.func @transform_6(%arg0: i32) -> (i32, i32) {
    %c0_i32 = arith.constant 0 : i32
    %c0_i32_0 = arith.constant 0 : i32
    %c0_i32_1 = arith.constant 0 : i32
    return %c0_i32, %c0_i32_0 : i32, i32
  }
  func.func @transform_7(%arg0: i32) -> (i32, i32) {
    %c0_i32 = arith.constant 0 : i32
    %c0_i32_0 = arith.constant 0 : i32
    %c0_i32_1 = arith.constant 0 : i32
    return %c0_i32, %c0_i32_0 : i32, i32
  }
  func.func @transform_8(%arg0: i32) -> (i32, i32) {
    %c0_i32 = arith.constant 0 : i32
    %c0_i32_0 = arith.constant 0 : i32
    %c0_i32_1 = arith.constant 0 : i32
    return %c0_i32, %c0_i32_0 : i32, i32
  }
  func.func @transform_9(%arg0: i32) -> (i32, i32, i32, i32) {
    %c0_i32 = arith.constant 0 : i32
    %c0_i32_0 = arith.constant 0 : i32
    %c0_i32_1 = arith.constant 0 : i32
    %c0_i32_2 = arith.constant 0 : i32
    return %arg0, %c0_i32, %c0_i32_0, %c0_i32_1 : i32, i32, i32, i32
  }
}

</mosaic_0001>

<llo_original>
// kernel: tpu_custom_call.1
$region0: #{tpu_custom_call.1}
  #allocation0 [shape = 'u32[]', space=smem, size = 0x4, offset = 0x4, fixed_abs, tag = 'smem constant byte address 0x4 - core index']
  #allocation1 [shape = 'u32[144,128]{1,0:T(1,128)}', space=vmem, size = 0x12000, scoped, tag = 'internal scratch']
  %s0 = inlined_call_operand.hbm [shape: bf16[2,20,24,4], index: 0, kind: input, shape index: {}]
  %s1 = inlined_call_operand.hbm [shape: bf16[4,16], index: 1, kind: input, shape index: {}]
  %s2 = inlined_call_operand.hbm [shape: f32[1,16], index: 2, kind: input, shape index: {}]
  %s3 = inlined_call_operand.hbm [shape: bf16[3,12,8], index: 3, kind: input, shape index: {}]
  %s4 = inlined_call_operand.hbm [shape: f32[1,8], index: 4, kind: input, shape index: {}]
  %s5 = inlined_call_operand.hbm [shape: bf16[5,20,8], index: 5, kind: input, shape index: {}]
  %s6 = inlined_call_operand.hbm [shape: f32[1,8], index: 6, kind: input, shape index: {}]
  %s7 = inlined_call_operand.hbm [shape: bf16[4,104], index: 7, kind: input, shape index: {}]
  %s8 = inlined_call_operand.hbm [shape: f32[1,104], index: 8, kind: input, shape index: {}]
  %s9 = inlined_call_operand.hbm [shape: f32[2,16,16,128], index: 9, kind: output, shape index: {}]
  %s10 = sld [smem:[#allocation0]]
  $region105: #{tpu_custom_call.1} parent=0
    _
  %s12 = ssub.s32 1, %s10
  %s13 = scalar_select 0, %s12, %s10
  $region1: #{tpu_custom_call.1} parent=0
    #allocation2 [shape = 'u8[245760]{0}', space=vmem, size = 0x3c000, scoped, tag = 'input window, operand 0']
    #allocation3 [shape = 's32[2]{0}', space=sflag, size = 0x8, scoped, tag = 'scoped memory for tpu_custom_call.1']
    #allocation4 [shape = 's32[2]{0}', space=sflag, size = 0x8, scoped, tag = 'scoped memory for tpu_custom_call.1']
    #allocation5 [shape = 'u8[1024]{0}', space=vmem, size = 0x400, scoped, tag = 'input window, operand 1, single buffered']
    #allocation6 [shape = 's32[1]{0}', space=sflag, size = 0x4, scoped, tag = 'scoped memory for tpu_custom_call.1']
    #allocation7 [shape = 'u8[512]{0}', space=vmem, size = 0x400, scoped, tag = 'input window, operand 2, single buffered']
    #allocation8 [shape = 'u8[12288]{0}', space=vmem, size = 0x3000, scoped, tag = 'input window, operand 3, single buffered']
    #allocation9 [shape = 's32[1]{0}', space=sflag, size = 0x4, scoped, tag = 'scoped memory for tpu_custom_call.1']
    #allocation10 [shape = 'u8[512]{0}', space=vmem, size = 0x400, scoped, tag = 'input window, operand 4, single buffered']
    #allocation11 [shape = 'u8[30720]{0}', space=vmem, size = 0x7800, scoped, tag = 'input window, operand 5, single buffered']
    #allocation12 [shape = 's32[1]{0}', space=sflag, size = 0x4, scoped, tag = 'scoped memory for tpu_custom_call.1']
    #allocation13 [shape = 'u8[512]{0}', space=vmem, size = 0x400, scoped, tag = 'input window, operand 6, single buffered']
    #allocation14 [shape = 'u8[1024]{0}', space=vmem, size = 0x400, scoped, tag = 'input window, operand 7, single buffered']
    #allocation15 [shape = 's32[1]{0}', space=sflag, size = 0x4, scoped, tag = 'scoped memory for tpu_custom_call.1']
    #allocation16 [shape = 'u8[512]{0}', space=vmem, size = 0x400, scoped, tag = 'input window, operand 8, single buffered']
    #allocation17 [shape = 'u8[262144]{0}', space=vmem, size = 0x40000, scoped, tag = 'output window, operand 0']
    %14 = vsyncpa [#allocation3], 0
    %s15 = scalar_lea.sflag [#allocation3], 1
    %16 = vsyncpa %s15, 0
    %17 = vsyncpa [#allocation6], 0
    %18 = vsyncpa [#allocation9], 0
    %19 = vsyncpa [#allocation12], 0
    %20 = vsyncpa [#allocation15], 0
    %21 = vsyncpa [#allocation4], 0
    %s22 = scalar_lea.sflag [#allocation4], 1
    %23 = vsyncpa %s22, 0
    loop: start=0, step=1, limit=4
    $region2: #{tpu_custom_call.1} parent=1 // loop_pre_header
      _
    $region3: #{tpu_custom_call.1} parent=1 // loop_header
      %s25 = sphi 0, %s29
      %p26 = scmp.ge.s32.totalorder %s25, 4
      %s35 = sphi 0, %s37
      %s38 = sphi 0, %s35
      %s39 = sphi 0, %s38
      %s55 = sphi 0, %s39
      %s59 = sphi 0, %s59
      %s61 = sphi 0, %s59
      %s62 = sphi 0, %s61
      %s76 = sphi 0, %s62
      %s80 = sphi 0, %s80
      %s82 = sphi 0, %s80
      %s83 = sphi 0, %s82
      %s97 = sphi 0, %s83
      %s101 = sphi 0, %s101
      %s103 = sphi 0, %s101
      %s104 = sphi 0, %s103
      %s118 = sphi 0, %s104
      %s122 = sphi 0, %s122
      %s124 = sphi 0, %s122
      %s125 = sphi 0, %s124
      %s139 = sphi 0, %s125
      %s143 = sphi 0, %s143
      %s145 = sphi 0, %s143
      %s146 = sphi 0, %s145
      %s160 = sphi 0, %s146
      %s164 = sphi 0, %s164
      %s166 = sphi 0, %s164
      %s167 = sphi 0, %s166
      %s181 = sphi 0, %s167
      %s185 = sphi 0, %s185
      %s187 = sphi 0, %s185
      %s188 = sphi 0, %s187
      %s202 = sphi 0, %s188
      %s206 = sphi 0, %s206
      %s208 = sphi 0, %s206
      %s209 = sphi 0, %s208
      %s223 = sphi 0, %s209
      %s229 = sphi 0, %s231
      %s232 = sphi 0, %s229
      %s233 = sphi 0, %s232
      %s249 = sphi 0, %s233
    $region4: #{tpu_custom_call.1} parent=1 // loop_header_branch
      %28 = sbr.rel (%p26) target = $region8
    $region5: #{tpu_custom_call.1} parent=1 // loop_body
      %s30 = ssub.s32 %s25, 1
      %s31 = ssub.s32 %s25, 2
      %s32 = sadd.s32 %s25, 1
      %s33 = ssub.s32 %s25, %s32
      %p34 = scmp.eq.s32.totalorder %s33, 0
      %s36 = sadd.s32 %s35, 1
      %s37 = scalar_select %p34, %s35, %s36
      %p40 = pneg %p34
      %p41 = scmp.eq.s32.totalorder %s25, 1
      %p42 = por %p40, %p41
      %p43 = scmp.ne.s32.totalorder %s35, %s38
      %p44 = scmp.eq.s32.totalorder %s25, 0
      %p45 = por %p43, %p44
      %p46 = scmp.ne.s32.totalorder %s35, %s38
      %p47 = scmp.eq.s32.totalorder %s30, 1
      %p48 = por %p46, %p47
      %p49 = scmp.ne.s32.totalorder %s38, %s39
      %p50 = scmp.eq.s32.totalorder %s30, 0
      %p51 = por %p49, %p50
      %p52 = scmp.ne.s32.totalorder %s38, %s39
      %p53 = scmp.eq.s32.totalorder %s31, 1
      %p54 = por %p52, %p53
      %p56 = scmp.ne.s32.totalorder %s39, %s55
      %p57 = scmp.eq.s32.totalorder %s31, 0
      %p58 = por %p56, %p57
      %s60 = sadd.s32 %s59, 1
      %p63 = scmp.eq.s32.totalorder %s25, 1
      %p64 = scmp.ne.s32.totalorder %s59, %s61
      %p65 = scmp.eq.s32.totalorder %s25, 0
      %p66 = por %p64, %p65
      %p67 = scmp.ne.s32.totalorder %s59, %s61
      %p68 = scmp.eq.s32.totalorder %s30, 1
      %p69 = por %p67, %p68
      %p70 = scmp.ne.s32.totalorder %s61, %s62
      %p71 = scmp.eq.s32.totalorder %s30, 0
      %p72 = por %p70, %p71
      %p73 = scmp.ne.s32.totalorder %s61, %s62
      %p74 = scmp.eq.s32.totalorder %s31, 1
      %p75 = por %p73, %p74
      %p77 = scmp.ne.s32.totalorder %s62, %s76
      %p78 = scmp.eq.s32.totalorder %s31, 0
      %p79 = por %p77, %p78
      %s81 = sadd.s32 %s80, 1
      %p84 = scmp.eq.s32.totalorder %s25, 1
      %p85 = scmp.ne.s32.totalorder %s80, %s82
      %p86 = scmp.eq.s32.totalorder %s25, 0
      %p87 = por %p85, %p86
      %p88 = scmp.ne.s32.totalorder %s80, %s82
      %p89 = scmp.eq.s32.totalorder %s30, 1
      %p90 = por %p88, %p89
      %p91 = scmp.ne.s32.totalorder %s82, %s83
      %p92 = scmp.eq.s32.totalorder %s30, 0
      %p93 = por %p91, %p92
      %p94 = scmp.ne.s32.totalorder %s82, %s83
      %p95 = scmp.eq.s32.totalorder %s31, 1
      %p96 = por %p94, %p95
      %p98 = scmp.ne.s32.totalorder %s83, %s97
      %p99 = scmp.eq.s32.totalorder %s31, 0
      %p100 = por %p98, %p99
      %s102 = sadd.s32 %s101, 1
      %p105 = scmp.eq.s32.totalorder %s25, 1
      %p106 = scmp.ne.s32.totalorder %s101, %s103
      %p107 = scmp.eq.s32.totalorder %s25, 0
      %p108 = por %p106, %p107
      %p109 = scmp.ne.s32.totalorder %s101, %s103
      %p110 = scmp.eq.s32.totalorder %s30, 1
      %p111 = por %p109, %p110
      %p112 = scmp.ne.s32.totalorder %s103, %s104
      %p113 = scmp.eq.s32.totalorder %s30, 0
      %p114 = por %p112, %p113
      %p115 = scmp.ne.s32.totalorder %s103, %s104
      %p116 = scmp.eq.s32.totalorder %s31, 1
      %p117 = por %p115, %p116
      %p119 = scmp.ne.s32.totalorder %s104, %s118
      %p120 = scmp.eq.s32.totalorder %s31, 0
      %p121 = por %p119, %p120
      %s123 = sadd.s32 %s122, 1
      %p126 = scmp.eq.s32.totalorder %s25, 1
      %p127 = scmp.ne.s32.totalorder %s122, %s124
      %p128 = scmp.eq.s32.totalorder %s25, 0
      %p129 = por %p127, %p128
      %p130 = scmp.ne.s32.totalorder %s122, %s124
      %p131 = scmp.eq.s32.totalorder %s30, 1
      %p132 = por %p130, %p131
      %p133 = scmp.ne.s32.totalorder %s124, %s125
      %p134 = scmp.eq.s32.totalorder %s30, 0
      %p135 = por %p133, %p134
      %p136 = scmp.ne.s32.totalorder %s124, %s125
      %p137 = scmp.eq.s32.totalorder %s31, 1
      %p138 = por %p136, %p137
      %p140 = scmp.ne.s32.totalorder %s125, %s139
      %p141 = scmp.eq.s32.totalorder %s31, 0
      %p142 = por %p140, %p141
      %s144 = sadd.s32 %s143, 1
      %p147 = scmp.eq.s32.totalorder %s25, 1
      %p148 = scmp.ne.s32.totalorder %s143, %s145
      %p149 = scmp.eq.s32.totalorder %s25, 0
      %p150 = por %p148, %p149
      %p151 = scmp.ne.s32.totalorder %s143, %s145
      %p152 = scmp.eq.s32.totalorder %s30, 1
      %p153 = por %p151, %p152
      %p154 = scmp.ne.s32.totalorder %s145, %s146
      %p155 = scmp.eq.s32.totalorder %s30, 0
      %p156 = por %p154, %p155
      %p157 = scmp.ne.s32.totalorder %s145, %s146
      %p158 = scmp.eq.s32.totalorder %s31, 1
      %p159 = por %p157, %p158
      %p161 = scmp.ne.s32.totalorder %s146, %s160
      %p162 = scmp.eq.s32.totalorder %s31, 0
      %p163 = por %p161, %p162
      %s165 = sadd.s32 %s164, 1
      %p168 = scmp.eq.s32.totalorder %s25, 1
      %p169 = scmp.ne.s32.totalorder %s164, %s166
      %p170 = scmp.eq.s32.totalorder %s25, 0
      %p171 = por %p169, %p170
      %p172 = scmp.ne.s32.totalorder %s164, %s166
      %p173 = scmp.eq.s32.totalorder %s30, 1
      %p174 = por %p172, %p173
      %p175 = scmp.ne.s32.totalorder %s166, %s167
      %p176 = scmp.eq.s32.totalorder %s30, 0
      %p177 = por %p175, %p176
      %p178 = scmp.ne.s32.totalorder %s166, %s167
      %p179 = scmp.eq.s32.totalorder %s31, 1
      %p180 = por %p178, %p179
      %p182 = scmp.ne.s32.totalorder %s167, %s181
      %p183 = scmp.eq.s32.totalorder %s31, 0
      %p184 = por %p182, %p183
      %s186 = sadd.s32 %s185, 1
      %p189 = scmp.eq.s32.totalorder %s25, 1
      %p190 = scmp.ne.s32.totalorder %s185, %s187
      %p191 = scmp.eq.s32.totalorder %s25, 0
      %p192 = por %p190, %p191
      %p193 = scmp.ne.s32.totalorder %s185, %s187
      %p194 = scmp.eq.s32.totalorder %s30, 1
      %p195 = por %p193, %p194
      %p196 = scmp.ne.s32.totalorder %s187, %s188
      %p197 = scmp.eq.s32.totalorder %s30, 0
      %p198 = por %p196, %p197
      %p199 = scmp.ne.s32.totalorder %s187, %s188
      %p200 = scmp.eq.s32.totalorder %s31, 1
      %p201 = por %p199, %p200
      %p203 = scmp.ne.s32.totalorder %s188, %s202
      %p204 = scmp.eq.s32.totalorder %s31, 0
      %p205 = por %p203, %p204
      %s207 = sadd.s32 %s206, 1
      %p210 = scmp.eq.s32.totalorder %s25, 1
      %p211 = scmp.ne.s32.totalorder %s206, %s208
      %p212 = scmp.eq.s32.totalorder %s25, 0
      %p213 = por %p211, %p212
      %p214 = scmp.ne.s32.totalorder %s206, %s208
      %p215 = scmp.eq.s32.totalorder %s30, 1
      %p216 = por %p214, %p215
      %p217 = scmp.ne.s32.totalorder %s208, %s209
      %p218 = scmp.eq.s32.totalorder %s30, 0
      %p219 = por %p217, %p218
      %p220 = scmp.ne.s32.totalorder %s208, %s209
      %p221 = scmp.eq.s32.totalorder %s31, 1
      %p222 = por %p220, %p221
      %p224 = scmp.ne.s32.totalorder %s209, %s223
      %p225 = scmp.eq.s32.totalorder %s31, 0
      %p226 = por %p224, %p225
      %s227 = ssub.s32 %s25, %s32
      %p228 = scmp.eq.s32.totalorder %s227, 0
      %s230 = sadd.s32 %s229, 1
      %s231 = scalar_select %p228, %s229, %s230
      %p234 = pneg %p228
      %p235 = scmp.eq.s32.totalorder %s25, 1
      %p236 = por %p234, %p235
      %p237 = scmp.ne.s32.totalorder %s229, %s232
      %p238 = scmp.eq.s32.totalorder %s25, 0
      %p239 = por %p237, %p238
      %p240 = scmp.ne.s32.totalorder %s229, %s232
      %p241 = scmp.eq.s32.totalorder %s30, 1
      %p242 = por %p240, %p241
      %p243 = scmp.ne.s32.totalorder %s232, %s233
      %p244 = scmp.eq.s32.totalorder %s30, 0
      %p245 = por %p243, %p244
      %p246 = scmp.ne.s32.totalorder %s232, %s233
      %p247 = scmp.eq.s32.totalorder %s31, 1
      %p248 = por %p246, %p247
      %p250 = scmp.ne.s32.totalorder %s233, %s249
      %p251 = scmp.eq.s32.totalorder %s31, 0
      %p252 = por %p250, %p251
      %p253 = scmp.le.s32.totalorder 1, %s25
      %p254 = scmp.lt.s32.totalorder %s25, 3
      %p255 = pnand %p253, %p254
      %p256 = pneg %p255
      // Predicated region
      $region9: #{tpu_custom_call.1} parent=5 // pred_check
        _
      $region10: #{tpu_custom_call.1} parent=5 // pred_check_branch
        %258 = sbr.rel (%p255) target = $region12
      $region11: #{tpu_custom_call.1} parent=5 // pred_region
        %s259 = ssub.s32 %s25, 1
        // Predicated region
        $region13: #{tpu_custom_call.1} parent=11 // pred_check
          %p260 = pneg %p72
        $region14: #{tpu_custom_call.1} parent=11 // pred_check_branch
          %262 = sbr.rel (%p260) target = $region16
        $region15: #{tpu_custom_call.1} parent=11 // pred_region
          %s264 = ssub.s32 32, 32
          %265 = vsyncadd [#allocation6], %s264
          %s267 = sshll.u32 [#allocation5], 4
          %s268 = int_to_ptr.vmem [resolvable:$true] %s267
          %270 = dma.hbm_to_vmem [thread:$0]  %s1, 32, %s268, [#allocation6]
        $region16: #{tpu_custom_call.1} parent=11 // pred_fallthru
          _
        // Predicated region
        $region17: #{tpu_custom_call.1} parent=11 // pred_check
          %p271 = pneg %p93
        $region18: #{tpu_custom_call.1} parent=11 // pred_check_branch
          %273 = sbr.rel (%p271) target = $region20
        $region19: #{tpu_custom_call.1} parent=11 // pred_region
          %s275 = ssub.s32 16, 16
          %276 = vsyncadd [#allocation6], %s275
          %s278 = sshll.u32 [#allocation7], 4
          %s279 = int_to_ptr.vmem [resolvable:$true] %s278
          %281 = dma.hbm_to_vmem [thread:$0]  %s2, 16, %s279, [#allocation6]
        $region20: #{tpu_custom_call.1} parent=11 // pred_fallthru
          _
        // Predicated region
        $region21: #{tpu_custom_call.1} parent=11 // pred_check
          %p282 = pneg %p114
        $region22: #{tpu_custom_call.1} parent=11 // pred_check_branch
          %284 = sbr.rel (%p282) target = $region24
        $region23: #{tpu_custom_call.1} parent=11 // pred_region
          %s286 = ssub.s32 384, 384
          %287 = vsyncadd [#allocation9], %s286
          %s288 = sshll.u32 [#allocation8], 4
          %s289 = int_to_ptr.vmem [resolvable:$true] %s288
          %294 = dma.hbm_to_vmem [thread:$0]  %s3, 384, %s289, [#allocation9], 64, 64, 4
        $region24: #{tpu_custom_call.1} parent=11 // pred_fallthru
          _
        // Predicated region
        $region25: #{tpu_custom_call.1} parent=11 // pred_check
          %p295 = pneg %p135
        $region26: #{tpu_custom_call.1} parent=11 // pred_check_branch
          %297 = sbr.rel (%p295) target = $region28
        $region27: #{tpu_custom_call.1} parent=11 // pred_region
          %s299 = ssub.s32 16, 16
          %300 = vsyncadd [#allocation9], %s299
          %s302 = sshll.u32 [#allocation10], 4
          %s303 = int_to_ptr.vmem [resolvable:$true] %s302
          %305 = dma.hbm_to_vmem [thread:$0]  %s4, 16, %s303, [#allocation9]
        $region28: #{tpu_custom_call.1} parent=11 // pred_fallthru
          _
        // Predicated region
        $region29: #{tpu_custom_call.1} parent=11 // pred_check
          %p306 = pneg %p156
        $region30: #{tpu_custom_call.1} parent=11 // pred_check_branch
          %308 = sbr.rel (%p306) target = $region32
        $region31: #{tpu_custom_call.1} parent=11 // pred_region
          %s310 = ssub.s32 960, 960
          %311 = vsyncadd [#allocation12], %s310
          %s312 = sshll.u32 [#allocation11], 4
          %s313 = int_to_ptr.vmem [resolvable:$true] %s312
          %318 = dma.hbm_to_vmem [thread:$0]  %s5, 960, %s313, [#allocation12], 64, 64, 4
        $region32: #{tpu_custom_call.1} parent=11 // pred_fallthru
          _
        // Predicated region
        $region33: #{tpu_custom_call.1} parent=11 // pred_check
          %p319 = pneg %p177
        $region34: #{tpu_custom_call.1} parent=11 // pred_check_branch
          %321 = sbr.rel (%p319) target = $region36
        $region35: #{tpu_custom_call.1} parent=11 // pred_region
          %s323 = ssub.s32 16, 16
          %324 = vsyncadd [#allocation12], %s323
          %s326 = sshll.u32 [#allocation13], 4
          %s327 = int_to_ptr.vmem [resolvable:$true] %s326
          %329 = dma.hbm_to_vmem [thread:$0]  %s6, 16, %s327, [#allocation12]
        $region36: #{tpu_custom_call.1} parent=11 // pred_fallthru
          _
        // Predicated region
        $region37: #{tpu_custom_call.1} parent=11 // pred_check
          %p330 = pneg %p198
        $region38: #{tpu_custom_call.1} parent=11 // pred_check_branch
          %332 = sbr.rel (%p330) target = $region40
        $region39: #{tpu_custom_call.1} parent=11 // pred_region
          %s334 = ssub.s32 32, 32
          %335 = vsyncadd [#allocation15], %s334
          %s337 = sshll.u32 [#allocation14], 4
          %s338 = int_to_ptr.vmem [resolvable:$true] %s337
          %340 = dma.hbm_to_vmem [thread:$0]  %s7, 32, %s338, [#allocation15]
        $region40: #{tpu_custom_call.1} parent=11 // pred_fallthru
          _
        // Predicated region
        $region41: #{tpu_custom_call.1} parent=11 // pred_check
          %p341 = pneg %p219
        $region42: #{tpu_custom_call.1} parent=11 // pred_check_branch
          %343 = sbr.rel (%p341) target = $region44
        $region43: #{tpu_custom_call.1} parent=11 // pred_region
          %s345 = ssub.s32 16, 16
          %346 = vsyncadd [#allocation15], %s345
          %s348 = sshll.u32 [#allocation16], 4
          %s349 = int_to_ptr.vmem [resolvable:$true] %s348
          %351 = dma.hbm_to_vmem [thread:$0]  %s8, 16, %s349, [#allocation15]
        $region44: #{tpu_custom_call.1} parent=11 // pred_fallthru
          _
      $region12: #{tpu_custom_call.1} parent=5 // pred_fallthru
        _
      %p352 = scmp.lt.s32.totalorder %s25, 2
      // Predicated region
      $region45: #{tpu_custom_call.1} parent=5 // pred_check
        %p353 = pneg %p352
      $region46: #{tpu_custom_call.1} parent=5 // pred_check_branch
        %355 = sbr.rel (%p353) target = $region48
      $region47: #{tpu_custom_call.1} parent=5 // pred_region
        // Predicated region
        $region49: #{tpu_custom_call.1} parent=47 // pred_check
          %p356 = pneg %p45
        $region50: #{tpu_custom_call.1} parent=47 // pred_check_branch
          %358 = sbr.rel (%p356) target = $region52
        $region51: #{tpu_custom_call.1} parent=47 // pred_region
          %s359 = sand.u32 %s35, 1
          %s360 = scalar_lea.sflag [#allocation3], %s359
          %s361 = sand.u32 %s35, 1
          %s362 = smul.addr %s361, 240
          %s363 = scalar_lea.vmem [#allocation2], %s362
          %s365 = ssub.s32 3840, 3840
          %366 = vsyncadd %s360, %s365
          %s367 = smul.addr %s25, 60
          %s368 = smul.addr %s367, 64
          %s369 = scalar_lea.hbm %s0, %s368
          %s370 = sshll.u32 %s363, 4
          %s371 = int_to_ptr.vmem [resolvable:$true] %s370
          %376 = dma.hbm_to_vmem [thread:$0]  %s369, 3840, %s371, %s360, 64, 64, 4
        $region52: #{tpu_custom_call.1} parent=47 // pred_fallthru
          _
      $region48: #{tpu_custom_call.1} parent=5 // pred_fallthru
        _
      %p377 = scmp.le.s32.totalorder 1, %s25
      %p378 = scmp.lt.s32.totalorder %s25, 3
      %p379 = pnand %p377, %p378
      %p380 = pneg %p379
      // Predicated region
      $region53: #{tpu_custom_call.1} parent=5 // pred_check
        _
      $region54: #{tpu_custom_call.1} parent=5 // pred_check_branch
        %382 = sbr.rel (%p379) target = $region56
      $region55: #{tpu_custom_call.1} parent=5 // pred_region
        %s383 = ssub.s32 %s25, 1
        %s384 = sand.u32 %s38, 1
        %s385 = scalar_lea.sflag [#allocation3], %s384
        %s386 = sand.u32 %s38, 1
        %s387 = smul.addr %s386, 240
        %s388 = scalar_lea.vmem [#allocation2], %s387
        // Predicated region
        $region57: #{tpu_custom_call.1} parent=55 // pred_check
          %p389 = pneg %p51
        $region58: #{tpu_custom_call.1} parent=55 // pred_check_branch
          %391 = sbr.rel (%p389) target = $region60
        $region59: #{tpu_custom_call.1} parent=55 // pred_region
          %392 = dma.done %s385, 3840
        $region60: #{tpu_custom_call.1} parent=55 // pred_fallthru
          _
        // Predicated region
        $region61: #{tpu_custom_call.1} parent=55 // pred_check
          %p393 = pneg %p72
        $region62: #{tpu_custom_call.1} parent=55 // pred_check_branch
          %395 = sbr.rel (%p393) target = $region64
        $region63: #{tpu_custom_call.1} parent=55 // pred_region
          %396 = dma.done [#allocation6], 32
        $region64: #{tpu_custom_call.1} parent=55 // pred_fallthru
          _
        // Predicated region
        $region65: #{tpu_custom_call.1} parent=55 // pred_check
          %p397 = pneg %p93
        $region66: #{tpu_custom_call.1} parent=55 // pred_check_branch
          %399 = sbr.rel (%p397) target = $region68
        $region67: #{tpu_custom_call.1} parent=55 // pred_region
          %400 = dma.done [#allocation6], 16
        $region68: #{tpu_custom_call.1} parent=55 // pred_fallthru
          _
        // Predicated region
        $region69: #{tpu_custom_call.1} parent=55 // pred_check
          %p401 = pneg %p114
        $region70: #{tpu_custom_call.1} parent=55 // pred_check_branch
          %403 = sbr.rel (%p401) target = $region72
        $region71: #{tpu_custom_call.1} parent=55 // pred_region
          %404 = dma.done [#allocation9], 384
        $region72: #{tpu_custom_call.1} parent=55 // pred_fallthru
          _
        // Predicated region
        $region73: #{tpu_custom_call.1} parent=55 // pred_check
          %p405 = pneg %p135
        $region74: #{tpu_custom_call.1} parent=55 // pred_check_branch
          %407 = sbr.rel (%p405) target = $region76
        $region75: #{tpu_custom_call.1} parent=55 // pred_region
          %408 = dma.done [#allocation9], 16
        $region76: #{tpu_custom_call.1} parent=55 // pred_fallthru
          _
        // Predicated region
        $region77: #{tpu_custom_call.1} parent=55 // pred_check
          %p409 = pneg %p156
        $region78: #{tpu_custom_call.1} parent=55 // pred_check_branch
          %411 = sbr.rel (%p409) target = $region80
        $region79: #{tpu_custom_call.1} parent=55 // pred_region
          %412 = dma.done [#allocation12], 960
        $region80: #{tpu_custom_call.1} parent=55 // pred_fallthru
          _
        // Predicated region
        $region81: #{tpu_custom_call.1} parent=55 // pred_check
          %p413 = pneg %p177
        $region82: #{tpu_custom_call.1} parent=55 // pred_check_branch
          %415 = sbr.rel (%p413) target = $region84
        $region83: #{tpu_custom_call.1} parent=55 // pred_region
          %416 = dma.done [#allocation12], 16
        $region84: #{tpu_custom_call.1} parent=55 // pred_fallthru
          _
        // Predicated region
        $region85: #{tpu_custom_call.1} parent=55 // pred_check
          %p417 = pneg %p198
        $region86: #{tpu_custom_call.1} parent=55 // pred_check_branch
          %419 = sbr.rel (%p417) target = $region88
        $region87: #{tpu_custom_call.1} parent=55 // pred_region
          %420 = dma.done [#allocation15], 32
        $region88: #{tpu_custom_call.1} parent=55 // pred_fallthru
          _
        // Predicated region
        $region89: #{tpu_custom_call.1} parent=55 // pred_check
          %p421 = pneg %p219
        $region90: #{tpu_custom_call.1} parent=55 // pred_check_branch
          %423 = sbr.rel (%p421) target = $region92
        $region91: #{tpu_custom_call.1} parent=55 // pred_region
          %424 = dma.done [#allocation15], 16
        $region92: #{tpu_custom_call.1} parent=55 // pred_fallthru
          _
        %s425 = sand.u32 %s38, 1
        %s426 = scalar_lea.sflag [#allocation3], %s425
        %s427 = sand.u32 %s38, 1
        %s428 = smul.addr %s427, 240
        %s429 = scalar_lea.vmem [#allocation2], %s428
        %p430 = pneg %p51
        %p431 = pneg %p48
        %p432 = pneg %p72
        %p433 = pneg %p69
        %p434 = pneg %p93
        %p435 = pneg %p90
        %p436 = pneg %p114
        %p437 = pneg %p111
        %p438 = pneg %p135
        %p439 = pneg %p132
        %p440 = pneg %p156
        %p441 = pneg %p153
        %p442 = pneg %p177
        %p443 = pneg %p174
        %p444 = pneg %p198
        %p445 = pneg %p195
        %p446 = pneg %p219
        %p447 = pneg %p216
        %p448 = pneg %p245
        %p449 = pneg %p242
        %s450 = sand.u32 %s232, 1
        %s451 = scalar_lea.sflag [#allocation4], %s450
        %s452 = sand.u32 %s232, 1
        %s453 = smul.addr %s452, 256
        %s454 = scalar_lea.vmem [#allocation17], %s453
        %v459 = vld [vmem:[%s388] sm:$0xf]
        %v460 = vld [vmem:[%s388 + $0x4] sm:$0xf]
        %v461 = vld [vmem:[%s388 + $0x8] sm:$0xf]
        %v462 = vld [vmem:[%s388 + $0xc] sm:$0xf]
        %v463 = vld [vmem:[%s388 + $0x10] sm:$0xf]
        %v464 = vld [vmem:[%s388 + $0x14] sm:$0xf]
        %v465 = vld [vmem:[%s388 + $0x18] sm:$0xf]
        %v466 = vld [vmem:[%s388 + $0x1c] sm:$0xf]
        %v467 = vld [vmem:[%s388 + $0x20] sm:$0xf]
        %v468 = vld [vmem:[%s388 + $0x24] sm:$0xf]
        %v469 = vld [vmem:[%s388 + $0x28] sm:$0xf]
        %v470 = vld [vmem:[%s388 + $0x2c] sm:$0xf]
        %v471 = vld [vmem:[%s388 + $0x30] sm:$0xf]
        %v472 = vld [vmem:[%s388 + $0x34] sm:$0xf]
        %v473 = vld [vmem:[%s388 + $0x38] sm:$0xf]
        %v474 = vld [vmem:[%s388 + $0x3c] sm:$0xf]
        %v475 = vld [vmem:[%s388 + $0x40] sm:$0xf]
        %v476 = vld [vmem:[%s388 + $0x44] sm:$0xf]
        %v477 = vld [vmem:[%s388 + $0x48] sm:$0xf]
        %v478 = vld [vmem:[%s388 + $0x4c] sm:$0xf]
        %v479 = vld [vmem:[%s388 + $0x50] sm:$0xf]
        %v480 = vld [vmem:[%s388 + $0x54] sm:$0xf]
        %v481 = vld [vmem:[%s388 + $0x58] sm:$0xf]
        %v482 = vld [vmem:[%s388 + $0x5c] sm:$0xf]
        %v483 = vld [vmem:[%s388 + $0x60] sm:$0xf]
        %v484 = vld [vmem:[%s388 + $0x64] sm:$0xf]
        %v485 = vld [vmem:[%s388 + $0x68] sm:$0xf]
        %v486 = vld [vmem:[%s388 + $0x6c] sm:$0xf]
        %v487 = vld [vmem:[%s388 + $0x70] sm:$0xf]
        %v488 = vld [vmem:[%s388 + $0x74] sm:$0xf]
        %v489 = vld [vmem:[%s388 + $0x78] sm:$0xf]
        %v490 = vld [vmem:[%s388 + $0x7c] sm:$0xf]
        %v491 = vld [vmem:[%s388 + $0x80] sm:$0xf]
        %v492 = vld [vmem:[%s388 + $0x84] sm:$0xf]
        %v493 = vld [vmem:[%s388 + $0x88] sm:$0xf]
        %v494 = vld [vmem:[%s388 + $0x8c] sm:$0xf]
        %v495 = vld [vmem:[%s388 + $0x90] sm:$0xf]
        %v496 = vld [vmem:[%s388 + $0x94] sm:$0xf]
        %v497 = vld [vmem:[%s388 + $0x98] sm:$0xf]
        %v498 = vld [vmem:[%s388 + $0x9c] sm:$0xf]
        %v499 = vld [vmem:[%s388 + $0xa0] sm:$0xf]
        %v500 = vld [vmem:[%s388 + $0xa4] sm:$0xf]
        %v501 = vld [vmem:[%s388 + $0xa8] sm:$0xf]
        %v502 = vld [vmem:[%s388 + $0xac] sm:$0xf]
        %v503 = vld [vmem:[%s388 + $0xb0] sm:$0xf]
        %v504 = vld [vmem:[%s388 + $0xb4] sm:$0xf]
        %v505 = vld [vmem:[%s388 + $0xb8] sm:$0xf]
        %v506 = vld [vmem:[%s388 + $0xbc] sm:$0xf]
        %v507 = vld [vmem:[%s388 + $0xc0] sm:$0xf]
        %v508 = vld [vmem:[%s388 + $0xc4] sm:$0xf]
        %v509 = vld [vmem:[%s388 + $0xc8] sm:$0xf]
        %v510 = vld [vmem:[%s388 + $0xcc] sm:$0xf]
        %v511 = vld [vmem:[%s388 + $0xd0] sm:$0xf]
        %v512 = vld [vmem:[%s388 + $0xd4] sm:$0xf]
        %v513 = vld [vmem:[%s388 + $0xd8] sm:$0xf]
        %v514 = vld [vmem:[%s388 + $0xdc] sm:$0xf]
        %v515 = vld [vmem:[%s388 + $0xe0] sm:$0xf]
        %v516 = vld [vmem:[%s388 + $0xe4] sm:$0xf]
        %v517 = vld [vmem:[%s388 + $0xe8] sm:$0xf]
        %v518 = vld [vmem:[%s388 + $0xec] sm:$0xf]
        %v519 = vlaneseq
        %v520 = vshrl.u32 %v519, 7
        %v521 = vadd.s32 %v520, 8
        %v522 = vadd.s32 %v520, 16
        %vm523 = vcmp.ge.s32.totalorder %v520, 2
        %vm524 = vcmp.ge.s32.totalorder %v521, 2
        %vm525 = vcmp.ge.s32.totalorder %v522, 2
        %vm526 = vmand 0, %vm523
        %vm527 = vmand 0, %vm524
        %vm528 = vmand 0, %vm525
        %vm529 = vmand 1, %vm523
        %vm530 = vmand 1, %vm524
        %vm531 = vmand 1, %vm525
        %vm532 = vcmp.lt.s32.totalorder %v520, 18
        %vm533 = vcmp.lt.s32.totalorder %v521, 18
        %vm534 = vcmp.lt.s32.totalorder %v522, 18
        %vm535 = vmand %vm526, %vm532
        %vm536 = vmand %vm527, %vm533
        %vm537 = vmand %vm528, %vm534
        %vm538 = vmand %vm529, %vm532
        %vm539 = vmand %vm530, %vm533
        %vm540 = vmand %vm531, %vm534
        %v541 = vld [vmem:[#allocation5] sm:$0x3]
        %v542 = vld [vmem:[#allocation7] sm:$0x1]
        %v544 = vlaneseq
        %v545 = vshrl.u32 %v544, 7
        %v546 = vsub.s32 0, %v545
        %v547 = vrot.slane %v542, %v546
        %v609 = vunpack.c.l.b16 %v459
        %v610 = vunpack.c.l.b16 %v460
        %v611 = vunpack.c.l.b16 %v461
        %v612 = vunpack.c.l.b16 %v462
        %v613 = vunpack.c.l.b16 %v463
        %v614 = vunpack.c.l.b16 %v464
        %v615 = vunpack.c.l.b16 %v465
        %v616 = vunpack.c.l.b16 %v466
        %v617 = vunpack.c.l.b16 %v467
        %v618 = vunpack.c.l.b16 %v468
        %v619 = vunpack.c.l.b16 %v469
        %v620 = vunpack.c.l.b16 %v470
        %v621 = vunpack.c.l.b16 %v471
        %v622 = vunpack.c.l.b16 %v472
        %v623 = vunpack.c.l.b16 %v473
        %v624 = vunpack.c.l.b16 %v474
        %v625 = vunpack.c.l.b16 %v475
        %v626 = vunpack.c.l.b16 %v476
        %v627 = vunpack.c.l.b16 %v477
        %v628 = vunpack.c.l.b16 %v478
        %v629 = vunpack.c.l.b16 %v479
        %v630 = vunpack.c.l.b16 %v480
        %v631 = vunpack.c.l.b16 %v481
        %v632 = vunpack.c.l.b16 %v482
        %v633 = vunpack.c.l.b16 %v483
        %v634 = vunpack.c.l.b16 %v484
        %v635 = vunpack.c.l.b16 %v485
        %v636 = vunpack.c.l.b16 %v486
        %v637 = vunpack.c.l.b16 %v487
        %v638 = vunpack.c.l.b16 %v488
        %v639 = vunpack.c.l.b16 %v489
        %v640 = vunpack.c.l.b16 %v490
        %v641 = vunpack.c.l.b16 %v491
        %v642 = vunpack.c.l.b16 %v492
        %v643 = vunpack.c.l.b16 %v493
        %v644 = vunpack.c.l.b16 %v494
        %v645 = vunpack.c.l.b16 %v495
        %v646 = vunpack.c.l.b16 %v496
        %v647 = vunpack.c.l.b16 %v497
        %v648 = vunpack.c.l.b16 %v498
        %v649 = vunpack.c.l.b16 %v499
        %v650 = vunpack.c.l.b16 %v500
        %v651 = vunpack.c.l.b16 %v501
        %v652 = vunpack.c.l.b16 %v502
        %v653 = vunpack.c.l.b16 %v503
        %v654 = vunpack.c.l.b16 %v504
        %v655 = vunpack.c.l.b16 %v505
        %v656 = vunpack.c.l.b16 %v506
        %v657 = vunpack.c.l.b16 %v507
        %v658 = vunpack.c.l.b16 %v508
        %v659 = vunpack.c.l.b16 %v509
        %v660 = vunpack.c.l.b16 %v510
        %v661 = vunpack.c.l.b16 %v511
        %v662 = vunpack.c.l.b16 %v512
        %v663 = vunpack.c.l.b16 %v513
        %v664 = vunpack.c.l.b16 %v514
        %v665 = vunpack.c.l.b16 %v515
        %v666 = vunpack.c.l.b16 %v516
        %v667 = vunpack.c.l.b16 %v517
        %v668 = vunpack.c.l.b16 %v518
        %v669 = vpack.c.b16 %v610, %v609
        %v670 = vpack.c.b16 %v612, %v611
        %v671 = vpack.c.b16 %v614, %v613
        %v672 = vpack.c.b16 %v616, %v615
        %v673 = vpack.c.b16 %v618, %v617
        %v674 = vpack.c.b16 %v620, %v619
        %v675 = vpack.c.b16 %v622, %v621
        %v676 = vpack.c.b16 %v624, %v623
        %v677 = vpack.c.b16 %v626, %v625
        %v678 = vpack.c.b16 %v628, %v627
        %v679 = vpack.c.b16 %v630, %v629
        %v680 = vpack.c.b16 %v632, %v631
        %v681 = vpack.c.b16 %v634, %v633
        %v682 = vpack.c.b16 %v636, %v635
        %v683 = vpack.c.b16 %v638, %v637
        %v684 = vpack.c.b16 %v640, %v639
        %v685 = vpack.c.b16 %v642, %v641
        %v686 = vpack.c.b16 %v644, %v643
        %v687 = vpack.c.b16 %v646, %v645
        %v688 = vpack.c.b16 %v648, %v647
        %v689 = vpack.c.b16 %v650, %v649
        %v690 = vpack.c.b16 %v652, %v651
        %v691 = vpack.c.b16 %v654, %v653
        %v692 = vpack.c.b16 %v656, %v655
        %v693 = vpack.c.b16 %v658, %v657
        %v694 = vpack.c.b16 %v660, %v659
        %v695 = vpack.c.b16 %v662, %v661
        %v696 = vpack.c.b16 %v664, %v663
        %v697 = vpack.c.b16 %v666, %v665
        %v698 = vpack.c.b16 %v668, %v667
        %vm699 = vcmask 31744
        %v701 = vsel %vm699, %v669, 0
        %v704 = vsel %vm699, %v670, 0
        %v707 = vsel %vm699, %v671, 0
        %v710 = vsel %vm699, %v672, 0
        %v713 = vsel %vm699, %v673, 0
        %v716 = vsel %vm699, %v674, 0
        %v719 = vsel %vm699, %v675, 0
        %v722 = vsel %vm699, %v676, 0
        %v725 = vsel %vm699, %v677, 0
        %v728 = vsel %vm699, %v678, 0
        %v731 = vsel %vm699, %v679, 0
        %v734 = vsel %vm699, %v680, 0
        %v737 = vsel %vm699, %v681, 0
        %v740 = vsel %vm699, %v682, 0
        %v743 = vsel %vm699, %v683, 0
        %v746 = vsel %vm699, %v684, 0
        %v749 = vsel %vm699, %v685, 0
        %v752 = vsel %vm699, %v686, 0
        %v755 = vsel %vm699, %v687, 0
        %v758 = vsel %vm699, %v688, 0
        %v761 = vsel %vm699, %v689, 0
        %v764 = vsel %vm699, %v690, 0
        %v767 = vsel %vm699, %v691, 0
        %v770 = vsel %vm699, %v692, 0
        %v773 = vsel %vm699, %v693, 0
        %v776 = vsel %vm699, %v694, 0
        %v779 = vsel %vm699, %v695, 0
        %v782 = vsel %vm699, %v696, 0
        %v785 = vsel %vm699, %v697, 0
        %v788 = vsel %vm699, %v698, 0
        %vm790 = vcmask 1041408
        %v792 = vsel %vm790, %v541, 0
        %794 = vmatprep.subr.bf16.mxu0 0
        %795 = vmatpush1.bf16.msra.mxu0 %v792
        %796 = vmatprep.subr.bf16.mxu0 0
        %797 = vmatpush1.bf16.msra.mxu0 0
        %798 = vmatprep.subr.bf16.mxu0 0
        %799 = vmatpush1.bf16.msra.mxu0 0
        %800 = vmatprep.subr.bf16.mxu0 0
        %801 = vmatpush1.bf16.msra.mxu0 0
        %802 = vmatprep.subr.bf16.mxu0 0
        %803 = vmatpush1.bf16.msra.mxu0 0
        %804 = vmatprep.subr.bf16.mxu0 0
        %805 = vmatpush1.bf16.msra.mxu0 0
        %806 = vmatprep.subr.bf16.mxu0 0
        %807 = vmatpush1.bf16.msra.mxu0 0
        %808 = vmatprep.subr.bf16.mxu0 0
        %809 = vmatpush1.bf16.msra.mxu0 0
        %810 = vmatprep.subr.bf16.mxu0 0
        %811 = vmatpush1.bf16.msra.mxu0 0
        %812 = vmatprep.subr.bf16.mxu0 0
        %813 = vmatpush1.bf16.msra.mxu0 0
        %814 = vmatprep.subr.bf16.mxu0 0
        %815 = vmatpush1.bf16.msra.mxu0 0
        %816 = vmatprep.subr.bf16.mxu0 0
        %817 = vmatpush1.bf16.msra.mxu0 0
        %818 = vmatprep.subr.bf16.mxu0 0
        %819 = vmatpush1.bf16.msra.mxu0 0
        %820 = vmatprep.subr.bf16.mxu0 0
        %821 = vmatpush1.bf16.msra.mxu0 0
        %822 = vmatprep.subr.bf16.mxu0 0
        %823 = vmatpush1.bf16.msra.mxu0 0
        %824 = vmatprep.subr.bf16.mxu0 0
        %825 = vmatpush1.bf16.msra.mxu0 0
        %826 = vmatprep.mubr.bf16.mxu0 0
        %827 = vmatmul.mubr.bf16.gmra.mrb[0].mxu0 %v701
        %v828 = vpop.f32.mrb[0].mxu0
        %v829 = vadd.f32 %v547, %v828
        %v830 = vpop.f32.mrb[0].mxu0
        %v831 = vpop.f32.mrb[0].mxu0
        %v832 = vadd.f32 %v547, %v831
        %v833 = vpop.f32.mrb[0].mxu0
        %834 = vmatprep.mubr.bf16.mxu0 0
        %835 = vmatmul.mubr.bf16.gmra.mrb[0].mxu0 %v704
        %v836 = vpop.f32.mrb[0].mxu0
        %v837 = vadd.f32 %v547, %v836
        %v838 = vpop.f32.mrb[0].mxu0
        %v839 = vpop.f32.mrb[0].mxu0
        %v840 = vadd.f32 %v547, %v839
        %v841 = vpop.f32.mrb[0].mxu0
        %842 = vmatprep.mubr.bf16.mxu0 0
        %843 = vmatmul.mubr.bf16.gmra.mrb[0].mxu0 %v707
        %v844 = vpop.f32.mrb[0].mxu0
        %v845 = vadd.f32 %v547, %v844
        %v846 = vpop.f32.mrb[0].mxu0
        %v847 = vpop.f32.mrb[0].mxu0
        %v848 = vadd.f32 %v547, %v847
        %v849 = vpop.f32.mrb[0].mxu0
        %850 = vmatprep.mubr.bf16.mxu0 0
        %851 = vmatmul.mubr.bf16.gmra.mrb[0].mxu0 %v710
        %v852 = vpop.f32.mrb[0].mxu0
        %v853 = vadd.f32 %v547, %v852
        %v854 = vpop.f32.mrb[0].mxu0
        %v855 = vpop.f32.mrb[0].mxu0
        %v856 = vadd.f32 %v547, %v855
        %v857 = vpop.f32.mrb[0].mxu0
        %858 = vmatprep.mubr.bf16.mxu0 0
        %859 = vmatmul.mubr.bf16.gmra.mrb[0].mxu0 %v713
        %v860 = vpop.f32.mrb[0].mxu0
        %v861 = vadd.f32 %v547, %v860
        %v862 = vpop.f32.mrb[0].mxu0
        %v863 = vpop.f32.mrb[0].mxu0
        %v864 = vadd.f32 %v547, %v863
        %v865 = vpop.f32.mrb[0].mxu0
        %866 = vmatprep.mubr.bf16.mxu0 0
        %867 = vmatmul.mubr.bf16.gmra.mrb[0].mxu0 %v716
        %v868 = vpop.f32.mrb[0].mxu0
        %v869 = vadd.f32 %v547, %v868
        %v870 = vpop.f32.mrb[0].mxu0
        %v871 = vpop.f32.mrb[0].mxu0
        %v872 = vadd.f32 %v547, %v871
        %v873 = vpop.f32.mrb[0].mxu0
        %874 = vmatprep.mubr.bf16.mxu0 0
        %875 = vmatmul.mubr.bf16.gmra.mrb[0].mxu0 %v719
        %v876 = vpop.f32.mrb[0].mxu0
        %v877 = vadd.f32 %v547, %v876
        %v878 = vpop.f32.mrb[0].mxu0
        %v879 = vpop.f32.mrb[0].mxu0
        %v880 = vadd.f32 %v547, %v879
        %v881 = vpop.f32.mrb[0].mxu0
        %882 = vmatprep.mubr.bf16.mxu0 0
        %883 = vmatmul.mubr.bf16.gmra.mrb[0].mxu0 %v722
        %v884 = vpop.f32.mrb[0].mxu0
        %v885 = vadd.f32 %v547, %v884
        %v886 = vpop.f32.mrb[0].mxu0
        %v887 = vpop.f32.mrb[0].mxu0
        %v888 = vadd.f32 %v547, %v887
        %v889 = vpop.f32.mrb[0].mxu0
        %890 = vmatprep.mubr.bf16.mxu0 0
        %891 = vmatmul.mubr.bf16.gmra.mrb[0].mxu0 %v725
        %v892 = vpop.f32.mrb[0].mxu0
        %v893 = vadd.f32 %v547, %v892
        %v894 = vpop.f32.mrb[0].mxu0
        %v895 = vpop.f32.mrb[0].mxu0
        %v896 = vadd.f32 %v547, %v895
        %v897 = vpop.f32.mrb[0].mxu0
        %898 = vmatprep.mubr.bf16.mxu0 0
        %899 = vmatmul.mubr.bf16.gmra.mrb[0].mxu0 %v728
        %v900 = vpop.f32.mrb[0].mxu0
        %v901 = vadd.f32 %v547, %v900
        %v902 = vpop.f32.mrb[0].mxu0
        %v903 = vpop.f32.mrb[0].mxu0
        %v904 = vadd.f32 %v547, %v903
        %v905 = vpop.f32.mrb[0].mxu0
        %906 = vmatprep.mubr.bf16.mxu0 0
        %907 = vmatmul.mubr.bf16.gmra.mrb[0].mxu0 %v731
        %v908 = vpop.f32.mrb[0].mxu0
        %v909 = vadd.f32 %v547, %v908
        %v910 = vpop.f32.mrb[0].mxu0
        %v911 = vpop.f32.mrb[0].mxu0
        %v912 = vadd.f32 %v547, %v911
        %v913 = vpop.f32.mrb[0].mxu0
        %914 = vmatprep.mubr.bf16.mxu0 0
        %915 = vmatmul.mubr.bf16.gmra.mrb[0].mxu0 %v734
        %v916 = vpop.f32.mrb[0].mxu0
        %v917 = vadd.f32 %v547, %v916
        %v918 = vpop.f32.mrb[0].mxu0
        %v919 = vpop.f32.mrb[0].mxu0
        %v920 = vadd.f32 %v547, %v919
        %v921 = vpop.f32.mrb[0].mxu0
        %922 = vmatprep.mubr.bf16.mxu0 0
        %923 = vmatmul.mubr.bf16.gmra.mrb[0].mxu0 %v737
        %v924 = vpop.f32.mrb[0].mxu0
        %v925 = vadd.f32 %v547, %v924
        %v926 = vpop.f32.mrb[0].mxu0
        %v927 = vpop.f32.mrb[0].mxu0
        %v928 = vadd.f32 %v547, %v927
        %v929 = vpop.f32.mrb[0].mxu0
        %930 = vmatprep.mubr.bf16.mxu0 0
        %931 = vmatmul.mubr.bf16.gmra.mrb[0].mxu0 %v740
        %v932 = vpop.f32.mrb[0].mxu0
        %v933 = vadd.f32 %v547, %v932
        %v934 = vpop.f32.mrb[0].mxu0
        %v935 = vpop.f32.mrb[0].mxu0
        %v936 = vadd.f32 %v547, %v935
        %v937 = vpop.f32.mrb[0].mxu0
        %938 = vmatprep.mubr.bf16.mxu0 0
        %939 = vmatmul.mubr.bf16.gmra.mrb[0].mxu0 %v743
        %v940 = vpop.f32.mrb[0].mxu0
        %v941 = vadd.f32 %v547, %v940
        %v942 = vpop.f32.mrb[0].mxu0
        %v943 = vpop.f32.mrb[0].mxu0
        %v944 = vadd.f32 %v547, %v943
        %v945 = vpop.f32.mrb[0].mxu0
        %946 = vmatprep.mubr.bf16.mxu0 0
        %947 = vmatmul.mubr.bf16.gmra.mrb[0].mxu0 %v746
        %v948 = vpop.f32.mrb[0].mxu0
        %v949 = vadd.f32 %v547, %v948
        %v950 = vpop.f32.mrb[0].mxu0
        %v951 = vpop.f32.mrb[0].mxu0
        %v952 = vadd.f32 %v547, %v951
        %v953 = vpop.f32.mrb[0].mxu0
        %954 = vmatprep.mubr.bf16.mxu0 0
        %955 = vmatmul.mubr.bf16.gmra.mrb[0].mxu0 %v749
        %v956 = vpop.f32.mrb[0].mxu0
        %v957 = vadd.f32 %v547, %v956
        %v958 = vpop.f32.mrb[0].mxu0
        %v959 = vpop.f32.mrb[0].mxu0
        %v960 = vadd.f32 %v547, %v959
        %v961 = vpop.f32.mrb[0].mxu0
        %962 = vmatprep.mubr.bf16.mxu0 0
        %963 = vmatmul.mubr.bf16.gmra.mrb[0].mxu0 %v752
        %v964 = vpop.f32.mrb[0].mxu0
        %v965 = vadd.f32 %v547, %v964
        %v966 = vpop.f32.mrb[0].mxu0
        %v967 = vpop.f32.mrb[0].mxu0
        %v968 = vadd.f32 %v547, %v967
        %v969 = vpop.f32.mrb[0].mxu0
        %970 = vmatprep.mubr.bf16.mxu0 0
        %971 = vmatmul.mubr.bf16.gmra.mrb[0].mxu0 %v755
        %v972 = vpop.f32.mrb[0].mxu0
        %v973 = vadd.f32 %v547, %v972
        %v974 = vpop.f32.mrb[0].mxu0
        %v975 = vpop.f32.mrb[0].mxu0
        %v976 = vadd.f32 %v547, %v975
        %v977 = vpop.f32.mrb[0].mxu0
        %978 = vmatprep.mubr.bf16.mxu0 0
        %979 = vmatmul.mubr.bf16.gmra.mrb[0].mxu0 %v758
        %v980 = vpop.f32.mrb[0].mxu0
        %v981 = vadd.f32 %v547, %v980
        %v982 = vpop.f32.mrb[0].mxu0
        %v983 = vpop.f32.mrb[0].mxu0
        %v984 = vadd.f32 %v547, %v983
        %v985 = vpop.f32.mrb[0].mxu0
        %986 = vmatprep.mubr.bf16.mxu0 0
        %987 = vmatmul.mubr.bf16.gmra.mrb[0].mxu0 %v761
        %v988 = vpop.f32.mrb[0].mxu0
        %v989 = vadd.f32 %v547, %v988
        %v990 = vpop.f32.mrb[0].mxu0
        %v991 = vpop.f32.mrb[0].mxu0
        %v992 = vadd.f32 %v547, %v991
        %v993 = vpop.f32.mrb[0].mxu0
        %994 = vmatprep.mubr.bf16.mxu0 0
        %995 = vmatmul.mubr.bf16.gmra.mrb[0].mxu0 %v764
        %v996 = vpop.f32.mrb[0].mxu0
        %v997 = vadd.f32 %v547, %v996
        %v998 = vpop.f32.mrb[0].mxu0
        %v999 = vpop.f32.mrb[0].mxu0
        %v1000 = vadd.f32 %v547, %v999
        %v1001 = vpop.f32.mrb[0].mxu0
        %1002 = vmatprep.mubr.bf16.mxu0 0
        %1003 = vmatmul.mubr.bf16.gmra.mrb[0].mxu0 %v767
        %v1004 = vpop.f32.mrb[0].mxu0
        %v1005 = vadd.f32 %v547, %v1004
        %v1006 = vpop.f32.mrb[0].mxu0
        %v1007 = vpop.f32.mrb[0].mxu0
        %v1008 = vadd.f32 %v547, %v1007
        %v1009 = vpop.f32.mrb[0].mxu0
        %1010 = vmatprep.mubr.bf16.mxu0 0
        %1011 = vmatmul.mubr.bf16.gmra.mrb[0].mxu0 %v770
        %v1012 = vpop.f32.mrb[0].mxu0
        %v1013 = vadd.f32 %v547, %v1012
        %v1014 = vpop.f32.mrb[0].mxu0
        %v1015 = vpop.f32.mrb[0].mxu0
        %v1016 = vadd.f32 %v547, %v1015
        %v1017 = vpop.f32.mrb[0].mxu0
        %1018 = vmatprep.mubr.bf16.mxu0 0
        %1019 = vmatmul.mubr.bf16.gmra.mrb[0].mxu0 %v773
        %v1020 = vpop.f32.mrb[0].mxu0
        %v1021 = vadd.f32 %v547, %v1020
        %v1022 = vpop.f32.mrb[0].mxu0
        %v1023 = vpop.f32.mrb[0].mxu0
        %v1024 = vadd.f32 %v547, %v1023
        %v1025 = vpop.f32.mrb[0].mxu0
        %1026 = vmatprep.mubr.bf16.mxu0 0
        %1027 = vmatmul.mubr.bf16.gmra.mrb[0].mxu0 %v776
        %v1028 = vpop.f32.mrb[0].mxu0
        %v1029 = vadd.f32 %v547, %v1028
        %v1030 = vpop.f32.mrb[0].mxu0
        %v1031 = vpop.f32.mrb[0].mxu0
        %v1032 = vadd.f32 %v547, %v1031
        %v1033 = vpop.f32.mrb[0].mxu0
        %1034 = vmatprep.mubr.bf16.mxu0 0
        %1035 = vmatmul.mubr.bf16.gmra.mrb[0].mxu0 %v779
        %v1036 = vpop.f32.mrb[0].mxu0
        %v1037 = vadd.f32 %v547, %v1036
        %v1038 = vpop.f32.mrb[0].mxu0
        %v1039 = vpop.f32.mrb[0].mxu0
        %v1040 = vadd.f32 %v547, %v1039
        %v1041 = vpop.f32.mrb[0].mxu0
        %1042 = vmatprep.mubr.bf16.mxu0 0
        %1043 = vmatmul.mubr.bf16.gmra.mrb[0].mxu0 %v782
        %v1044 = vpop.f32.mrb[0].mxu0
        %v1045 = vadd.f32 %v547, %v1044
        %v1046 = vpop.f32.mrb[0].mxu0
        %v1047 = vpop.f32.mrb[0].mxu0
        %v1048 = vadd.f32 %v547, %v1047
        %v1049 = vpop.f32.mrb[0].mxu0
        %1050 = vmatprep.mubr.bf16.mxu0 0
        %1051 = vmatmul.mubr.bf16.gmra.mrb[0].mxu0 %v785
        %v1052 = vpop.f32.mrb[0].mxu0
        %v1053 = vadd.f32 %v547, %v1052
        %v1054 = vpop.f32.mrb[0].mxu0
        %v1055 = vpop.f32.mrb[0].mxu0
        %v1056 = vadd.f32 %v547, %v1055
        %v1057 = vpop.f32.mrb[0].mxu0
        %1058 = vmatprep.mubr.bf16.mxu0 0
        %1059 = vmatmul.mubr.bf16.gmra.mrb[0].mxu0 %v788
        %v1060 = vpop.f32.mrb[0].mxu0
        %v1061 = vadd.f32 %v547, %v1060
        %v1062 = vpop.f32.mrb[0].mxu0
        %v1063 = vpop.f32.mrb[0].mxu0
        %v1064 = vadd.f32 %v547, %v1063
        %v1065 = vpop.f32.mrb[0].mxu0
        %1066 = vdwg.mxu0
        %v1067 = vmax.f32 %v829, 0.0
        %v1068 = vmax.f32 %v832, 0.0
        %v1069 = vmax.f32 %v837, 0.0
        %v1070 = vmax.f32 %v840, 0.0
        %v1071 = vmax.f32 %v845, 0.0
        %v1072 = vmax.f32 %v848, 0.0
        %v1073 = vmax.f32 %v853, 0.0
        %v1074 = vmax.f32 %v856, 0.0
        %v1075 = vmax.f32 %v861, 0.0
        %v1076 = vmax.f32 %v864, 0.0
        %v1077 = vmax.f32 %v869, 0.0
        %v1078 = vmax.f32 %v872, 0.0
        %v1079 = vmax.f32 %v877, 0.0
        %v1080 = vmax.f32 %v880, 0.0
        %v1081 = vmax.f32 %v885, 0.0
        %v1082 = vmax.f32 %v888, 0.0
        %v1083 = vmax.f32 %v893, 0.0
        %v1084 = vmax.f32 %v896, 0.0
        %v1085 = vmax.f32 %v901, 0.0
        %v1086 = vmax.f32 %v904, 0.0
        %v1087 = vmax.f32 %v909, 0.0
        %v1088 = vmax.f32 %v912, 0.0
        %v1089 = vmax.f32 %v917, 0.0
        %v1090 = vmax.f32 %v920, 0.0
        %v1091 = vmax.f32 %v925, 0.0
        %v1092 = vmax.f32 %v928, 0.0
        %v1093 = vmax.f32 %v933, 0.0
        %v1094 = vmax.f32 %v936, 0.0
        %v1095 = vmax.f32 %v941, 0.0
        %v1096 = vmax.f32 %v944, 0.0
        %v1097 = vmax.f32 %v949, 0.0
        %v1098 = vmax.f32 %v952, 0.0
        %v1099 = vmax.f32 %v957, 0.0
        %v1100 = vmax.f32 %v960, 0.0
        %v1101 = vmax.f32 %v965, 0.0
        %v1102 = vmax.f32 %v968, 0.0
        %v1103 = vmax.f32 %v973, 0.0
        %v1104 = vmax.f32 %v976, 0.0
        %v1105 = vmax.f32 %v981, 0.0
        %v1106 = vmax.f32 %v984, 0.0
        %v1107 = vmax.f32 %v989, 0.0
        %v1108 = vmax.f32 %v992, 0.0
        %v1109 = vmax.f32 %v997, 0.0
        %v1110 = vmax.f32 %v1000, 0.0
        %v1111 = vmax.f32 %v1005, 0.0
        %v1112 = vmax.f32 %v1008, 0.0
        %v1113 = vmax.f32 %v1013, 0.0
        %v1114 = vmax.f32 %v1016, 0.0
        %v1115 = vmax.f32 %v1021, 0.0
        %v1116 = vmax.f32 %v1024, 0.0
        %v1117 = vmax.f32 %v1029, 0.0
        %v1118 = vmax.f32 %v1032, 0.0
        %v1119 = vmax.f32 %v1037, 0.0
        %v1120 = vmax.f32 %v1040, 0.0
        %v1121 = vmax.f32 %v1045, 0.0
        %v1122 = vmax.f32 %v1048, 0.0
        %v1123 = vmax.f32 %v1053, 0.0
        %v1124 = vmax.f32 %v1056, 0.0
        %v1125 = vmax.f32 %v1061, 0.0
        %v1126 = vmax.f32 %v1064, 0.0
        %vm1175 = vcmask 1045504
        %v1176 = vrot.slane %v1073, 2
        %v1177 = vrot.slane %v1074, 2
        %v1178 = vsel %vm1175, %v1176, %v1177
        %v1179 = vrot.slane %v1075, 2
        %v1180 = vsel %vm1175, %v1177, %v1179
        %v1181 = vrot.slane %v1076, 2
        %v1182 = vrot.slane %v1077, 2
        %v1183 = vsel %vm1175, %v1181, %v1182
        %v1184 = vrot.slane %v1078, 2
        %v1185 = vsel %vm1175, %v1182, %v1184
        %v1186 = vrot.slane %v1079, 2
        %v1187 = vrot.slane %v1080, 2
        %v1188 = vsel %vm1175, %v1186, %v1187
        %v1189 = vrot.slane %v1081, 2
        %v1190 = vsel %vm1175, %v1187, %v1189
        %v1191 = vrot.slane %v1082, 2
        %v1192 = vrot.slane %v1083, 2
        %v1193 = vsel %vm1175, %v1191, %v1192
        %v1194 = vrot.slane %v1084, 2
        %v1195 = vsel %vm1175, %v1192, %v1194
        %v1196 = vrot.slane %v1085, 2
        %v1197 = vrot.slane %v1086, 2
        %v1198 = vsel %vm1175, %v1196, %v1197
        %v1199 = vrot.slane %v1087, 2
        %v1200 = vsel %vm1175, %v1197, %v1199
        %v1201 = vrot.slane %v1088, 2
        %v1202 = vrot.slane %v1089, 2
        %v1203 = vsel %vm1175, %v1201, %v1202
        %v1204 = vrot.slane %v1090, 2
        %v1205 = vsel %vm1175, %v1202, %v1204
        %v1206 = vrot.slane %v1091, 2
        %v1207 = vrot.slane %v1092, 2
        %v1208 = vsel %vm1175, %v1206, %v1207
        %v1209 = vrot.slane %v1093, 2
        %v1210 = vsel %vm1175, %v1207, %v1209
        %v1211 = vrot.slane %v1094, 2
        %v1212 = vrot.slane %v1095, 2
        %v1213 = vsel %vm1175, %v1211, %v1212
        %v1214 = vrot.slane %v1096, 2
        %v1215 = vsel %vm1175, %v1212, %v1214
        %v1216 = vrot.slane %v1097, 2
        %v1217 = vrot.slane %v1098, 2
        %v1218 = vsel %vm1175, %v1216, %v1217
        %v1219 = vrot.slane %v1099, 2
        %v1220 = vsel %vm1175, %v1217, %v1219
        %v1221 = vrot.slane %v1100, 2
        %v1222 = vrot.slane %v1101, 2
        %v1223 = vsel %vm1175, %v1221, %v1222
        %v1224 = vrot.slane %v1102, 2
        %v1225 = vsel %vm1175, %v1222, %v1224
        %v1226 = vrot.slane %v1103, 2
        %v1227 = vrot.slane %v1104, 2
        %v1228 = vsel %vm1175, %v1226, %v1227
        %v1229 = vrot.slane %v1105, 2
        %v1230 = vsel %vm1175, %v1227, %v1229
        %v1231 = vrot.slane %v1106, 2
        %v1232 = vrot.slane %v1107, 2
        %v1233 = vsel %vm1175, %v1231, %v1232
        %v1234 = vrot.slane %v1108, 2
        %v1235 = vsel %vm1175, %v1232, %v1234
        %v1236 = vrot.slane %v1109, 2
        %v1237 = vrot.slane %v1110, 2
        %v1238 = vsel %vm1175, %v1236, %v1237
        %v1239 = vrot.slane %v1111, 2
        %v1240 = vsel %vm1175, %v1237, %v1239
        %v1241 = vrot.slane %v1112, 2
        %v1242 = vrot.slane %v1113, 2
        %v1243 = vsel %vm1175, %v1241, %v1242
        %v1244 = vrot.slane %v1114, 2
        %v1245 = vsel %vm1175, %v1242, %v1244
        %v1246 = vrot.slane %v1115, 2
        %v1247 = vrot.slane %v1116, 2
        %v1248 = vsel %vm1175, %v1246, %v1247
        %v1249 = vrot.slane %v1117, 2
        %v1250 = vsel %vm1175, %v1247, %v1249
        %v1251 = vrot.slane %v1118, 2
        %v1252 = vrot.slane %v1119, 2
        %v1253 = vsel %vm1175, %v1251, %v1252
        %v1254 = vrot.slane %v1120, 2
        %v1255 = vsel %vm1175, %v1252, %v1254
        %v1288 = vpack.c.bf16 %v1068, %v1067
        %v1289 = vpack.c.bf16 %v1069, %v1069
        %v1290 = vpack.c.bf16 %v1071, %v1070
        %v1291 = vpack.c.bf16 %v1072, %v1072
        %v1292 = vpack.c.bf16 %v1074, %v1073
        %v1293 = vpack.c.bf16 %v1075, %v1075
        %v1294 = vpack.c.bf16 %v1077, %v1076
        %v1295 = vpack.c.bf16 %v1078, %v1078
        %v1296 = vpack.c.bf16 %v1080, %v1079
        %v1297 = vpack.c.bf16 %v1081, %v1081
        %v1298 = vpack.c.bf16 %v1083, %v1082
        %v1299 = vpack.c.bf16 %v1084, %v1084
        %v1300 = vpack.c.bf16 %v1086, %v1085
        %v1301 = vpack.c.bf16 %v1087, %v1087
        %v1302 = vpack.c.bf16 %v1089, %v1088
        %v1303 = vpack.c.bf16 %v1090, %v1090
        %v1304 = vpack.c.bf16 %v1092, %v1091
        %v1305 = vpack.c.bf16 %v1093, %v1093
        %v1306 = vpack.c.bf16 %v1095, %v1094
        %v1307 = vpack.c.bf16 %v1096, %v1096
        %v1308 = vpack.c.bf16 %v1098, %v1097
        %v1309 = vpack.c.bf16 %v1099, %v1099
        %v1310 = vpack.c.bf16 %v1101, %v1100
        %v1311 = vpack.c.bf16 %v1102, %v1102
        %v1312 = vpack.c.bf16 %v1104, %v1103
        %v1313 = vpack.c.bf16 %v1105, %v1105
        %v1314 = vpack.c.bf16 %v1107, %v1106
        %v1315 = vpack.c.bf16 %v1108, %v1108
        %v1316 = vpack.c.bf16 %v1110, %v1109
        %v1317 = vpack.c.bf16 %v1111, %v1111
        %v1318 = vpack.c.bf16 %v1113, %v1112
        %v1319 = vpack.c.bf16 %v1114, %v1114
        %v1320 = vpack.c.bf16 %v1116, %v1115
        %v1321 = vpack.c.bf16 %v1117, %v1117
        %v1322 = vpack.c.bf16 %v1119, %v1118
        %v1323 = vpack.c.bf16 %v1120, %v1120
        %v1324 = vpack.c.bf16 %v1122, %v1121
        %v1325 = vpack.c.bf16 %v1123, %v1123
        %v1326 = vpack.c.bf16 %v1125, %v1124
        %v1327 = vpack.c.bf16 %v1126, %v1126
        %v1328 = vsel %vm535, 1, 0
        %v1329 = vsel %vm536, 1, 0
        %v1330 = vsel %vm537, 1, 0
        %v1331 = vsel %vm538, 1, 0
        %v1332 = vsel %vm539, 1, 0
        %v1333 = vsel %vm540, 1, 0
        %vm1334 = vcmp.eq.s32.totalorder %v1328, 1
        %vm1335 = vcmp.eq.s32.totalorder %v1329, 1
        %vm1336 = vcmp.eq.s32.totalorder %v1330, 1
        %vm1337 = vcmp.eq.s32.totalorder %v1331, 1
        %vm1338 = vcmp.eq.s32.totalorder %v1332, 1
        %vm1339 = vcmp.eq.s32.totalorder %v1333, 1
        %vm1340 = vmpackc.low %vm1334, %vm1334
        %vm1341 = vmpackc.low %vm1335, %vm1335
        %vm1342 = vmpackc.low %vm1336, %vm1336
        %vm1343 = vmpackc.low %vm1337, %vm1337
        %vm1344 = vmpackc.low %vm1338, %vm1338
        %vm1345 = vmpackc.low %vm1339, %vm1339
        %v1346 = vsel %vm1340, 65537, 0
        %v1347 = vsel %vm1341, 65537, 0
        %v1348 = vsel %vm1342, 65537, 0
        %v1349 = vsel %vm1343, 65537, 0
        %v1350 = vsel %vm1344, 65537, 0
        %v1351 = vsel %vm1345, 65537, 0
        %v1352 = vunpack.c.l.b16 %v1346
        %v1353 = vunpack.c.l.b16 %v1347
        %v1354 = vunpack.c.l.b16 %v1348
        %v1355 = vunpack.c.l.b16 %v1349
        %v1356 = vunpack.c.l.b16 %v1350
        %v1357 = vunpack.c.l.b16 %v1351
        %v1358 = vpack.c.b16 %v1353, %v1352
        %v1359 = vpack.c.b16 %v1354, %v1354
        %v1360 = vpack.c.b16 %v1356, %v1355
        %v1361 = vpack.c.b16 %v1357, %v1357
        %vm1362 = vcmp.ne.s16.totalorder %v1358, 0
        %vm1363 = vcmp.ne.s16.totalorder %v1359, 0
        %vm1364 = vcmp.ne.s16.totalorder %v1360, 0
        %vm1365 = vcmp.ne.s16.totalorder %v1361, 0
        %v1366 = vsel %vm1362, %v1288, 0
        %v1367 = vsel %vm1363, %v1289, 0
        %v1368 = vsel %vm1362, %v1290, 0
        %v1369 = vsel %vm1363, %v1291, 0
        %v1370 = vsel %vm1364, %v1292, 0
        %v1371 = vsel %vm1365, %v1293, 0
        %v1372 = vsel %vm1364, %v1294, 0
        %v1373 = vsel %vm1365, %v1295, 0
        %v1374 = vsel %vm1364, %v1296, 0
        %v1375 = vsel %vm1365, %v1297, 0
        %v1376 = vsel %vm1364, %v1298, 0
        %v1377 = vsel %vm1365, %v1299, 0
        %v1378 = vsel %vm1364, %v1300, 0
        %v1379 = vsel %vm1365, %v1301, 0
        %v1380 = vsel %vm1364, %v1302, 0
        %v1381 = vsel %vm1365, %v1303, 0
        %v1382 = vsel %vm1364, %v1304, 0
        %v1383 = vsel %vm1365, %v1305, 0
        %v1384 = vsel %vm1364, %v1306, 0
        %v1385 = vsel %vm1365, %v1307, 0
        %v1386 = vsel %vm1364, %v1308, 0
        %v1387 = vsel %vm1365, %v1309, 0
        %v1388 = vsel %vm1364, %v1310, 0
        %v1389 = vsel %vm1365, %v1311, 0
        %v1390 = vsel %vm1364, %v1312, 0
        %v1391 = vsel %vm1365, %v1313, 0
        %v1392 = vsel %vm1364, %v1314, 0
        %v1393 = vsel %vm1365, %v1315, 0
        %v1394 = vsel %vm1364, %v1316, 0
        %v1395 = vsel %vm1365, %v1317, 0
        %v1396 = vsel %vm1364, %v1318, 0
        %v1397 = vsel %vm1365, %v1319, 0
        %v1398 = vsel %vm1364, %v1320, 0
        %v1399 = vsel %vm1365, %v1321, 0
        %v1400 = vsel %vm1364, %v1322, 0
        %v1401 = vsel %vm1365, %v1323, 0
        %v1402 = vsel %vm1362, %v1324, 0
        %v1403 = vsel %vm1363, %v1325, 0
        %v1404 = vsel %vm1362, %v1326, 0
        %v1405 = vsel %vm1363, %v1327, 0
        %1442 = vrot.lane.b32.xlu0 %v1368, 120
        %v1443 = vpop.permute.xlu0 %1442
        %1444 = vrot.lane.b32.xlu0 %v1369, 120
        %v1445 = vpop.permute.xlu0 %1444
        %1446 = vrot.lane.b32.xlu0 %v1370, 120
        %v1447 = vpop.permute.xlu0 %1446
        %1448 = vrot.lane.b32.xlu0 %v1371, 120
        %v1449 = vpop.permute.xlu0 %1448
        %1450 = vrot.lane.b32.xlu0 %v1372, 120
        %v1451 = vpop.permute.xlu0 %1450
        %1452 = vrot.lane.b32.xlu0 %v1373, 120
        %v1453 = vpop.permute.xlu0 %1452
        %1454 = vrot.lane.b32.xlu0 %v1374, 120
        %v1455 = vpop.permute.xlu0 %1454
        %1456 = vrot.lane.b32.xlu0 %v1375, 120
        %v1457 = vpop.permute.xlu0 %1456
        %1458 = vrot.lane.b32.xlu0 %v1376, 120
        %v1459 = vpop.permute.xlu0 %1458
        %1460 = vrot.lane.b32.xlu0 %v1377, 120
        %v1461 = vpop.permute.xlu0 %1460
        %1462 = vrot.lane.b32.xlu0 %v1378, 120
        %v1463 = vpop.permute.xlu0 %1462
        %1464 = vrot.lane.b32.xlu0 %v1379, 120
        %v1465 = vpop.permute.xlu0 %1464
        %1466 = vrot.lane.b32.xlu0 %v1380, 120
        %v1467 = vpop.permute.xlu0 %1466
        %1468 = vrot.lane.b32.xlu0 %v1381, 120
        %v1469 = vpop.permute.xlu0 %1468
        %1470 = vrot.lane.b32.xlu0 %v1382, 120
        %v1471 = vpop.permute.xlu0 %1470
        %1472 = vrot.lane.b32.xlu0 %v1383, 120
        %v1473 = vpop.permute.xlu0 %1472
        %1474 = vrot.lane.b32.xlu0 %v1384, 120
        %v1475 = vpop.permute.xlu0 %1474
        %1476 = vrot.lane.b32.xlu0 %v1385, 120
        %v1477 = vpop.permute.xlu0 %1476
        %1478 = vrot.lane.b32.xlu0 %v1386, 120
        %v1479 = vpop.permute.xlu0 %1478
        %1480 = vrot.lane.b32.xlu0 %v1387, 120
        %v1481 = vpop.permute.xlu0 %1480
        %1482 = vrot.lane.b32.xlu0 %v1388, 120
        %v1483 = vpop.permute.xlu0 %1482
        %1484 = vrot.lane.b32.xlu0 %v1389, 120
        %v1485 = vpop.permute.xlu0 %1484
        %1486 = vrot.lane.b32.xlu0 %v1390, 120
        %v1487 = vpop.permute.xlu0 %1486
        %1488 = vrot.lane.b32.xlu0 %v1391, 120
        %v1489 = vpop.permute.xlu0 %1488
        %1490 = vrot.lane.b32.xlu0 %v1392, 120
        %v1491 = vpop.permute.xlu0 %1490
        %1492 = vrot.lane.b32.xlu0 %v1393, 120
        %v1493 = vpop.permute.xlu0 %1492
        %1494 = vrot.lane.b32.xlu0 %v1394, 120
        %v1495 = vpop.permute.xlu0 %1494
        %1496 = vrot.lane.b32.xlu0 %v1395, 120
        %v1497 = vpop.permute.xlu0 %1496
        %1498 = vrot.lane.b32.xlu0 %v1396, 120
        %v1499 = vpop.permute.xlu0 %1498
        %1500 = vrot.lane.b32.xlu0 %v1397, 120
        %v1501 = vpop.permute.xlu0 %1500
        %1502 = vrot.lane.b32.xlu0 %v1398, 120
        %v1503 = vpop.permute.xlu0 %1502
        %1504 = vrot.lane.b32.xlu0 %v1399, 120
        %v1505 = vpop.permute.xlu0 %1504
        %1506 = vrot.lane.b32.xlu0 %v1400, 120
        %v1507 = vpop.permute.xlu0 %1506
        %1508 = vrot.lane.b32.xlu0 %v1401, 120
        %v1509 = vpop.permute.xlu0 %1508
        %1510 = vrot.lane.b32.xlu0 %v1402, 120
        %v1511 = vpop.permute.xlu0 %1510
        %1512 = vrot.lane.b32.xlu0 %v1403, 120
        %v1513 = vpop.permute.xlu0 %1512
        %vm1514 = vsmask.f32 7424
        %v1516 = vshrl.u32 %v1368, 16
        %v1518 = vshll.u32 %v1368, 16
        %v1520 = vrot.slane %v1518, 1
        %v1521 = vor.u32 %v1516, %v1520
        %v1523 = vshll.u32 %v1369, 16
        %v1525 = vrot.slane %v1523, 1
        %v1526 = vsel %vm1514, %v1521, %v1525
        %v1527 = vshrl.u32 %v1369, 16
        %v1530 = vshrl.u32 %v1370, 16
        %v1532 = vshll.u32 %v1370, 16
        %v1534 = vrot.slane %v1532, 1
        %v1535 = vor.u32 %v1530, %v1534
        %v1537 = vshll.u32 %v1371, 16
        %v1539 = vrot.slane %v1537, 1
        %v1540 = vsel %vm1514, %v1535, %v1539
        %v1541 = vshrl.u32 %v1371, 16
        %v1544 = vshrl.u32 %v1372, 16
        %v1546 = vshll.u32 %v1372, 16
        %v1548 = vrot.slane %v1546, 1
        %v1549 = vor.u32 %v1544, %v1548
        %v1551 = vshll.u32 %v1373, 16
        %v1553 = vrot.slane %v1551, 1
        %v1554 = vsel %vm1514, %v1549, %v1553
        %v1555 = vshrl.u32 %v1373, 16
        %v1558 = vshrl.u32 %v1374, 16
        %v1560 = vshll.u32 %v1374, 16
        %v1562 = vrot.slane %v1560, 1
        %v1563 = vor.u32 %v1558, %v1562
        %v1565 = vshll.u32 %v1375, 16
        %v1567 = vrot.slane %v1565, 1
        %v1568 = vsel %vm1514, %v1563, %v1567
        %v1569 = vshrl.u32 %v1375, 16
        %v1572 = vshrl.u32 %v1376, 16
        %v1574 = vshll.u32 %v1376, 16
        %v1576 = vrot.slane %v1574, 1
        %v1577 = vor.u32 %v1572, %v1576
        %v1579 = vshll.u32 %v1377, 16
        %v1581 = vrot.slane %v1579, 1
        %v1582 = vsel %vm1514, %v1577, %v1581
        %v1583 = vshrl.u32 %v1377, 16
        %v1586 = vshrl.u32 %v1378, 16
        %v1588 = vshll.u32 %v1378, 16
        %v1590 = vrot.slane %v1588, 1
        %v1591 = vor.u32 %v1586, %v1590
        %v1593 = vshll.u32 %v1379, 16
        %v1595 = vrot.slane %v1593, 1
        %v1596 = vsel %vm1514, %v1591, %v1595
        %v1597 = vshrl.u32 %v1379, 16
        %v1600 = vshrl.u32 %v1380, 16
        %v1602 = vshll.u32 %v1380, 16
        %v1604 = vrot.slane %v1602, 1
        %v1605 = vor.u32 %v1600, %v1604
        %v1607 = vshll.u32 %v1381, 16
        %v1609 = vrot.slane %v1607, 1
        %v1610 = vsel %vm1514, %v1605, %v1609
        %v1611 = vshrl.u32 %v1381, 16
        %v1614 = vshrl.u32 %v1382, 16
        %v1616 = vshll.u32 %v1382, 16
        %v1618 = vrot.slane %v1616, 1
        %v1619 = vor.u32 %v1614, %v1618
        %v1621 = vshll.u32 %v1383, 16
        %v1623 = vrot.slane %v1621, 1
        %v1624 = vsel %vm1514, %v1619, %v1623
        %v1625 = vshrl.u32 %v1383, 16
        %v1628 = vshrl.u32 %v1384, 16
        %v1630 = vshll.u32 %v1384, 16
        %v1632 = vrot.slane %v1630, 1
        %v1633 = vor.u32 %v1628, %v1632
        %v1635 = vshll.u32 %v1385, 16
        %v1637 = vrot.slane %v1635, 1
        %v1638 = vsel %vm1514, %v1633, %v1637
        %v1639 = vshrl.u32 %v1385, 16
        %v1642 = vshrl.u32 %v1386, 16
        %v1644 = vshll.u32 %v1386, 16
        %v1646 = vrot.slane %v1644, 1
        %v1647 = vor.u32 %v1642, %v1646
        %v1649 = vshll.u32 %v1387, 16
        %v1651 = vrot.slane %v1649, 1
        %v1652 = vsel %vm1514, %v1647, %v1651
        %v1653 = vshrl.u32 %v1387, 16
        %v1656 = vshrl.u32 %v1388, 16
        %v1658 = vshll.u32 %v1388, 16
        %v1660 = vrot.slane %v1658, 1
        %v1661 = vor.u32 %v1656, %v1660
        %v1663 = vshll.u32 %v1389, 16
        %v1665 = vrot.slane %v1663, 1
        %v1666 = vsel %vm1514, %v1661, %v1665
        %v1667 = vshrl.u32 %v1389, 16
        %v1670 = vshrl.u32 %v1390, 16
        %v1672 = vshll.u32 %v1390, 16
        %v1674 = vrot.slane %v1672, 1
        %v1675 = vor.u32 %v1670, %v1674
        %v1677 = vshll.u32 %v1391, 16
        %v1679 = vrot.slane %v1677, 1
        %v1680 = vsel %vm1514, %v1675, %v1679
        %v1681 = vshrl.u32 %v1391, 16
        %v1684 = vshrl.u32 %v1392, 16
        %v1686 = vshll.u32 %v1392, 16
        %v1688 = vrot.slane %v1686, 1
        %v1689 = vor.u32 %v1684, %v1688
        %v1691 = vshll.u32 %v1393, 16
        %v1693 = vrot.slane %v1691, 1
        %v1694 = vsel %vm1514, %v1689, %v1693
        %v1695 = vshrl.u32 %v1393, 16
        %v1698 = vshrl.u32 %v1394, 16
        %v1700 = vshll.u32 %v1394, 16
        %v1702 = vrot.slane %v1700, 1
        %v1703 = vor.u32 %v1698, %v1702
        %v1705 = vshll.u32 %v1395, 16
        %v1707 = vrot.slane %v1705, 1
        %v1708 = vsel %vm1514, %v1703, %v1707
        %v1709 = vshrl.u32 %v1395, 16
        %v1712 = vshrl.u32 %v1396, 16
        %v1714 = vshll.u32 %v1396, 16
        %v1716 = vrot.slane %v1714, 1
        %v1717 = vor.u32 %v1712, %v1716
        %v1719 = vshll.u32 %v1397, 16
        %v1721 = vrot.slane %v1719, 1
        %v1722 = vsel %vm1514, %v1717, %v1721
        %v1723 = vshrl.u32 %v1397, 16
        %v1726 = vshrl.u32 %v1398, 16
        %v1728 = vshll.u32 %v1398, 16
        %v1730 = vrot.slane %v1728, 1
        %v1731 = vor.u32 %v1726, %v1730
        %v1733 = vshll.u32 %v1399, 16
        %v1735 = vrot.slane %v1733, 1
        %v1736 = vsel %vm1514, %v1731, %v1735
        %v1737 = vshrl.u32 %v1399, 16
        %v1740 = vshrl.u32 %v1400, 16
        %v1742 = vshll.u32 %v1400, 16
        %v1744 = vrot.slane %v1742, 1
        %v1745 = vor.u32 %v1740, %v1744
        %v1747 = vshll.u32 %v1401, 16
        %v1749 = vrot.slane %v1747, 1
        %v1750 = vsel %vm1514, %v1745, %v1749
        %v1751 = vshrl.u32 %v1401, 16
        %v1754 = vshrl.u32 %v1402, 16
        %v1756 = vshll.u32 %v1402, 16
        %v1758 = vrot.slane %v1756, 1
        %v1759 = vor.u32 %v1754, %v1758
        %v1761 = vshll.u32 %v1403, 16
        %v1763 = vrot.slane %v1761, 1
        %v1764 = vsel %vm1514, %v1759, %v1763
        %v1765 = vshrl.u32 %v1403, 16
        %1767 = vrot.lane.b32.xlu0 %v1526, 124
        %v1768 = vpop.permute.xlu0 %1767
        %1769 = vrot.lane.b32.xlu0 %v1527, 124
        %v1770 = vpop.permute.xlu0 %1769
        %1771 = vrot.lane.b32.xlu0 %v1540, 124
        %v1772 = vpop.permute.xlu0 %1771
        %1773 = vrot.lane.b32.xlu0 %v1541, 124
        %v1774 = vpop.permute.xlu0 %1773
        %1775 = vrot.lane.b32.xlu0 %v1554, 124
        %v1776 = vpop.permute.xlu0 %1775
        %1777 = vrot.lane.b32.xlu0 %v1555, 124
        %v1778 = vpop.permute.xlu0 %1777
        %1779 = vrot.lane.b32.xlu0 %v1568, 124
        %v1780 = vpop.permute.xlu0 %1779
        %1781 = vrot.lane.b32.xlu0 %v1569, 124
        %v1782 = vpop.permute.xlu0 %1781
        %1783 = vrot.lane.b32.xlu0 %v1582, 124
        %v1784 = vpop.permute.xlu0 %1783
        %1785 = vrot.lane.b32.xlu0 %v1583, 124
        %v1786 = vpop.permute.xlu0 %1785
        %1787 = vrot.lane.b32.xlu0 %v1596, 124
        %v1788 = vpop.permute.xlu0 %1787
        %1789 = vrot.lane.b32.xlu0 %v1597, 124
        %v1790 = vpop.permute.xlu0 %1789
        %1791 = vrot.lane.b32.xlu0 %v1610, 124
        %v1792 = vpop.permute.xlu0 %1791
        %1793 = vrot.lane.b32.xlu0 %v1611, 124
        %v1794 = vpop.permute.xlu0 %1793
        %1795 = vrot.lane.b32.xlu0 %v1624, 124
        %v1796 = vpop.permute.xlu0 %1795
        %1797 = vrot.lane.b32.xlu0 %v1625, 124
        %v1798 = vpop.permute.xlu0 %1797
        %1799 = vrot.lane.b32.xlu0 %v1638, 124
        %v1800 = vpop.permute.xlu0 %1799
        %1801 = vrot.lane.b32.xlu0 %v1639, 124
        %v1802 = vpop.permute.xlu0 %1801
        %1803 = vrot.lane.b32.xlu0 %v1652, 124
        %v1804 = vpop.permute.xlu0 %1803
        %1805 = vrot.lane.b32.xlu0 %v1653, 124
        %v1806 = vpop.permute.xlu0 %1805
        %1807 = vrot.lane.b32.xlu0 %v1666, 124
        %v1808 = vpop.permute.xlu0 %1807
        %1809 = vrot.lane.b32.xlu0 %v1667, 124
        %v1810 = vpop.permute.xlu0 %1809
        %1811 = vrot.lane.b32.xlu0 %v1680, 124
        %v1812 = vpop.permute.xlu0 %1811
        %1813 = vrot.lane.b32.xlu0 %v1681, 124
        %v1814 = vpop.permute.xlu0 %1813
        %1815 = vrot.lane.b32.xlu0 %v1694, 124
        %v1816 = vpop.permute.xlu0 %1815
        %1817 = vrot.lane.b32.xlu0 %v1695, 124
        %v1818 = vpop.permute.xlu0 %1817
        %1819 = vrot.lane.b32.xlu0 %v1708, 124
        %v1820 = vpop.permute.xlu0 %1819
        %1821 = vrot.lane.b32.xlu0 %v1709, 124
        %v1822 = vpop.permute.xlu0 %1821
        %1823 = vrot.lane.b32.xlu0 %v1722, 124
        %v1824 = vpop.permute.xlu0 %1823
        %1825 = vrot.lane.b32.xlu0 %v1723, 124
        %v1826 = vpop.permute.xlu0 %1825
        %1827 = vrot.lane.b32.xlu0 %v1736, 124
        %v1828 = vpop.permute.xlu0 %1827
        %1829 = vrot.lane.b32.xlu0 %v1737, 124
        %v1830 = vpop.permute.xlu0 %1829
        %1831 = vrot.lane.b32.xlu0 %v1750, 124
        %v1832 = vpop.permute.xlu0 %1831
        %1833 = vrot.lane.b32.xlu0 %v1751, 124
        %v1834 = vpop.permute.xlu0 %1833
        %1835 = vrot.lane.b32.xlu0 %v1764, 124
        %v1836 = vpop.permute.xlu0 %1835
        %1837 = vrot.lane.b32.xlu0 %v1765, 124
        %v1838 = vpop.permute.xlu0 %1837
        %vm1839 = vcmask 1046528
        %v1840 = vrot.slane %v1368, 1
        %v1841 = vrot.slane %v1369, 1
        %v1842 = vsel %vm1839, %v1840, %v1841
        %v1843 = vrot.slane %v1370, 1
        %v1844 = vrot.slane %v1371, 1
        %v1845 = vsel %vm1839, %v1843, %v1844
        %v1846 = vrot.slane %v1372, 1
        %v1847 = vrot.slane %v1373, 1
        %v1848 = vsel %vm1839, %v1846, %v1847
        %v1849 = vrot.slane %v1374, 1
        %v1850 = vrot.slane %v1375, 1
        %v1851 = vsel %vm1839, %v1849, %v1850
        %v1852 = vrot.slane %v1376, 1
        %v1853 = vrot.slane %v1377, 1
        %v1854 = vsel %vm1839, %v1852, %v1853
        %v1855 = vrot.slane %v1378, 1
        %v1856 = vrot.slane %v1379, 1
        %v1857 = vsel %vm1839, %v1855, %v1856
        %v1858 = vrot.slane %v1380, 1
        %v1859 = vrot.slane %v1381, 1
        %v1860 = vsel %vm1839, %v1858, %v1859
        %v1861 = vrot.slane %v1382, 1
        %v1862 = vrot.slane %v1383, 1
        %v1863 = vsel %vm1839, %v1861, %v1862
        %v1864 = vrot.slane %v1384, 1
        %v1865 = vrot.slane %v1385, 1
        %v1866 = vsel %vm1839, %v1864, %v1865
        %v1867 = vrot.slane %v1386, 1
        %v1868 = vrot.slane %v1387, 1
        %v1869 = vsel %vm1839, %v1867, %v1868
        %v1870 = vrot.slane %v1388, 1
        %v1871 = vrot.slane %v1389, 1
        %v1872 = vsel %vm1839, %v1870, %v1871
        %v1873 = vrot.slane %v1390, 1
        %v1874 = vrot.slane %v1391, 1
        %v1875 = vsel %vm1839, %v1873, %v1874
        %v1876 = vrot.slane %v1392, 1
        %v1877 = vrot.slane %v1393, 1
        %v1878 = vsel %vm1839, %v1876, %v1877
        %v1879 = vrot.slane %v1394, 1
        %v1880 = vrot.slane %v1395, 1
        %v1881 = vsel %vm1839, %v1879, %v1880
        %v1882 = vrot.slane %v1396, 1
        %v1883 = vrot.slane %v1397, 1
        %v1884 = vsel %vm1839, %v1882, %v1883
        %v1885 = vrot.slane %v1398, 1
        %v1886 = vrot.slane %v1399, 1
        %v1887 = vsel %vm1839, %v1885, %v1886
        %v1888 = vrot.slane %v1400, 1
        %v1889 = vrot.slane %v1401, 1
        %v1890 = vsel %vm1839, %v1888, %v1889
        %v1891 = vrot.slane %v1402, 1
        %v1892 = vrot.slane %v1403, 1
        %v1893 = vsel %vm1839, %v1891, %v1892
        %v1896 = vsel %vm699, %v1443, %v1768
        %v1899 = vsel %vm699, %v1445, %v1770
        %v1902 = vsel %vm699, %v1447, %v1772
        %v1905 = vsel %vm699, %v1449, %v1774
        %v1908 = vsel %vm699, %v1451, %v1776
        %v1911 = vsel %vm699, %v1453, %v1778
        %v1914 = vsel %vm699, %v1455, %v1780
        %v1917 = vsel %vm699, %v1457, %v1782
        %v1920 = vsel %vm699, %v1459, %v1784
        %v1923 = vsel %vm699, %v1461, %v1786
        %v1926 = vsel %vm699, %v1463, %v1788
        %v1929 = vsel %vm699, %v1465, %v1790
        %v1932 = vsel %vm699, %v1467, %v1792
        %v1935 = vsel %vm699, %v1469, %v1794
        %v1938 = vsel %vm699, %v1471, %v1796
        %v1941 = vsel %vm699, %v1473, %v1798
        %v1944 = vsel %vm699, %v1475, %v1800
        %v1947 = vsel %vm699, %v1477, %v1802
        %v1950 = vsel %vm699, %v1479, %v1804
        %v1953 = vsel %vm699, %v1481, %v1806
        %v1956 = vsel %vm699, %v1483, %v1808
        %v1959 = vsel %vm699, %v1485, %v1810
        %v1962 = vsel %vm699, %v1487, %v1812
        %v1965 = vsel %vm699, %v1489, %v1814
        %v1968 = vsel %vm699, %v1491, %v1816
        %v1971 = vsel %vm699, %v1493, %v1818
        %v1974 = vsel %vm699, %v1495, %v1820
        %v1977 = vsel %vm699, %v1497, %v1822
        %v1980 = vsel %vm699, %v1499, %v1824
        %v1983 = vsel %vm699, %v1501, %v1826
        %v1986 = vsel %vm699, %v1503, %v1828
        %v1989 = vsel %vm699, %v1505, %v1830
        %v1992 = vsel %vm699, %v1507, %v1832
        %v1995 = vsel %vm699, %v1509, %v1834
        %v1998 = vsel %vm699, %v1511, %v1836
        %v2001 = vsel %vm699, %v1513, %v1838
        %vm2002 = vcmask 64512
        %v2004 = vsel %vm2002, %v1896, %v1842
        %v2006 = vsel %vm2002, %v1899, %v1841
        %v2008 = vsel %vm2002, %v1902, %v1845
        %v2010 = vsel %vm2002, %v1905, %v1844
        %v2012 = vsel %vm2002, %v1908, %v1848
        %v2014 = vsel %vm2002, %v1911, %v1847
        %v2016 = vsel %vm2002, %v1914, %v1851
        %v2018 = vsel %vm2002, %v1917, %v1850
        %v2020 = vsel %vm2002, %v1920, %v1854
        %v2022 = vsel %vm2002, %v1923, %v1853
        %v2024 = vsel %vm2002, %v1926, %v1857
        %v2026 = vsel %vm2002, %v1929, %v1856
        %v2028 = vsel %vm2002, %v1932, %v1860
        %v2030 = vsel %vm2002, %v1935, %v1859
        %v2032 = vsel %vm2002, %v1938, %v1863
        %v2034 = vsel %vm2002, %v1941, %v1862
        %v2036 = vsel %vm2002, %v1944, %v1866
        %v2038 = vsel %vm2002, %v1947, %v1865
        %v2040 = vsel %vm2002, %v1950, %v1869
        %v2042 = vsel %vm2002, %v1953, %v1868
        %v2044 = vsel %vm2002, %v1956, %v1872
        %v2046 = vsel %vm2002, %v1959, %v1871
        %v2048 = vsel %vm2002, %v1962, %v1875
        %v2050 = vsel %vm2002, %v1965, %v1874
        %v2052 = vsel %vm2002, %v1968, %v1878
        %v2054 = vsel %vm2002, %v1971, %v1877
        %v2056 = vsel %vm2002, %v1974, %v1881
        %v2058 = vsel %vm2002, %v1977, %v1880
        %v2060 = vsel %vm2002, %v1980, %v1884
        %v2062 = vsel %vm2002, %v1983, %v1883
        %v2064 = vsel %vm2002, %v1986, %v1887
        %v2066 = vsel %vm2002, %v1989, %v1886
        %v2068 = vsel %vm2002, %v1992, %v1890
        %v2070 = vsel %vm2002, %v1995, %v1889
        %v2072 = vsel %vm2002, %v1998, %v1893
        %v2074 = vsel %vm2002, %v2001, %v1892
        %v2075 = vshrl.u32 %v2004, 16
        %v2077 = vshll.u32 %v2004, 16
        %v2079 = vrot.slane %v2077, 1
        %v2080 = vor.u32 %v2075, %v2079
        %v2081 = vshll.u32 %v2006, 16
        %v2083 = vrot.slane %v2081, 1
        %v2084 = vsel %vm1514, %v2080, %v2083
        %v2085 = vshrl.u32 %v2008, 16
        %v2087 = vshll.u32 %v2008, 16
        %v2089 = vrot.slane %v2087, 1
        %v2090 = vor.u32 %v2085, %v2089
        %v2091 = vshll.u32 %v2010, 16
        %v2093 = vrot.slane %v2091, 1
        %v2094 = vsel %vm1514, %v2090, %v2093
        %v2095 = vshrl.u32 %v2012, 16
        %v2097 = vshll.u32 %v2012, 16
        %v2099 = vrot.slane %v2097, 1
        %v2100 = vor.u32 %v2095, %v2099
        %v2101 = vshll.u32 %v2014, 16
        %v2103 = vrot.slane %v2101, 1
        %v2104 = vsel %vm1514, %v2100, %v2103
        %v2105 = vshrl.u32 %v2016, 16
        %v2107 = vshll.u32 %v2016, 16
        %v2109 = vrot.slane %v2107, 1
        %v2110 = vor.u32 %v2105, %v2109
        %v2111 = vshll.u32 %v2018, 16
        %v2113 = vrot.slane %v2111, 1
        %v2114 = vsel %vm1514, %v2110, %v2113
        %v2115 = vshrl.u32 %v2020, 16
        %v2117 = vshll.u32 %v2020, 16
        %v2119 = vrot.slane %v2117, 1
        %v2120 = vor.u32 %v2115, %v2119
        %v2121 = vshll.u32 %v2022, 16
        %v2123 = vrot.slane %v2121, 1
        %v2124 = vsel %vm1514, %v2120, %v2123
        %v2125 = vshrl.u32 %v2024, 16
        %v2127 = vshll.u32 %v2024, 16
        %v2129 = vrot.slane %v2127, 1
        %v2130 = vor.u32 %v2125, %v2129
        %v2131 = vshll.u32 %v2026, 16
        %v2133 = vrot.slane %v2131, 1
        %v2134 = vsel %vm1514, %v2130, %v2133
        %v2135 = vshrl.u32 %v2028, 16
        %v2137 = vshll.u32 %v2028, 16
        %v2139 = vrot.slane %v2137, 1
        %v2140 = vor.u32 %v2135, %v2139
        %v2141 = vshll.u32 %v2030, 16
        %v2143 = vrot.slane %v2141, 1
        %v2144 = vsel %vm1514, %v2140, %v2143
        %v2145 = vshrl.u32 %v2032, 16
        %v2147 = vshll.u32 %v2032, 16
        %v2149 = vrot.slane %v2147, 1
        %v2150 = vor.u32 %v2145, %v2149
        %v2151 = vshll.u32 %v2034, 16
        %v2153 = vrot.slane %v2151, 1
        %v2154 = vsel %vm1514, %v2150, %v2153
        %v2155 = vshrl.u32 %v2036, 16
        %v2157 = vshll.u32 %v2036, 16
        %v2159 = vrot.slane %v2157, 1
        %v2160 = vor.u32 %v2155, %v2159
        %v2161 = vshll.u32 %v2038, 16
        %v2163 = vrot.slane %v2161, 1
        %v2164 = vsel %vm1514, %v2160, %v2163
        %v2165 = vshrl.u32 %v2040, 16
        %v2167 = vshll.u32 %v2040, 16
        %v2169 = vrot.slane %v2167, 1
        %v2170 = vor.u32 %v2165, %v2169
        %v2171 = vshll.u32 %v2042, 16
        %v2173 = vrot.slane %v2171, 1
        %v2174 = vsel %vm1514, %v2170, %v2173
        %v2175 = vshrl.u32 %v2044, 16
        %v2177 = vshll.u32 %v2044, 16
        %v2179 = vrot.slane %v2177, 1
        %v2180 = vor.u32 %v2175, %v2179
        %v2181 = vshll.u32 %v2046, 16
        %v2183 = vrot.slane %v2181, 1
        %v2184 = vsel %vm1514, %v2180, %v2183
        %v2185 = vshrl.u32 %v2048, 16
        %v2187 = vshll.u32 %v2048, 16
        %v2189 = vrot.slane %v2187, 1
        %v2190 = vor.u32 %v2185, %v2189
        %v2191 = vshll.u32 %v2050, 16
        %v2193 = vrot.slane %v2191, 1
        %v2194 = vsel %vm1514, %v2190, %v2193
        %v2195 = vshrl.u32 %v2052, 16
        %v2197 = vshll.u32 %v2052, 16
        %v2199 = vrot.slane %v2197, 1
        %v2200 = vor.u32 %v2195, %v2199
        %v2201 = vshll.u32 %v2054, 16
        %v2203 = vrot.slane %v2201, 1
        %v2204 = vsel %vm1514, %v2200, %v2203
        %v2205 = vshrl.u32 %v2056, 16
        %v2207 = vshll.u32 %v2056, 16
        %v2209 = vrot.slane %v2207, 1
        %v2210 = vor.u32 %v2205, %v2209
        %v2211 = vshll.u32 %v2058, 16
        %v2213 = vrot.slane %v2211, 1
        %v2214 = vsel %vm1514, %v2210, %v2213
        %v2215 = vshrl.u32 %v2060, 16
        %v2217 = vshll.u32 %v2060, 16
        %v2219 = vrot.slane %v2217, 1
        %v2220 = vor.u32 %v2215, %v2219
        %v2221 = vshll.u32 %v2062, 16
        %v2223 = vrot.slane %v2221, 1
        %v2224 = vsel %vm1514, %v2220, %v2223
        %v2225 = vshrl.u32 %v2064, 16
        %v2227 = vshll.u32 %v2064, 16
        %v2229 = vrot.slane %v2227, 1
        %v2230 = vor.u32 %v2225, %v2229
        %v2231 = vshll.u32 %v2066, 16
        %v2233 = vrot.slane %v2231, 1
        %v2234 = vsel %vm1514, %v2230, %v2233
        %v2235 = vld [vmem:[#allocation8] sm:$0xf]
        %v2236 = vld [vmem:[#allocation8 + $0x4] sm:$0x3]
        %v2237 = vshrl.u32 %v2068, 16
        %v2239 = vshll.u32 %v2068, 16
        %v2241 = vrot.slane %v2239, 1
        %v2242 = vor.u32 %v2237, %v2241
        %v2243 = vshll.u32 %v2070, 16
        %v2245 = vrot.slane %v2243, 1
        %v2246 = vsel %vm1514, %v2242, %v2245
        %s2247 = scalar_lea.vmem [#allocation8], 8
        %v2248 = vld [vmem:[%s2247] sm:$0xf]
        %v2249 = vld [vmem:[%s2247 + $0x4] sm:$0x3]
        %v2252 = vunpack.c.l.b16 %v2248
        %v2253 = vunpack.c.l.b16 %v2249
        %v2254 = vpack.c.b16 %v2253, %v2252
        %vm2255 = vcmask 97280
        %v2257 = vsel %vm2255, %v2094, 0
        %v2260 = vsel %vm2255, %v2104, 0
        %v2263 = vsel %vm2255, %v2114, 0
        %v2266 = vsel %vm2255, %v2124, 0
        %v2269 = vsel %vm2255, %v2134, 0
        %v2272 = vsel %vm2255, %v2144, 0
        %v2275 = vsel %vm2255, %v2154, 0
        %v2278 = vsel %vm2255, %v2164, 0
        %v2281 = vsel %vm2255, %v2174, 0
        %v2284 = vsel %vm2255, %v2184, 0
        %v2287 = vsel %vm2255, %v2194, 0
        %v2290 = vsel %vm2255, %v2204, 0
        %v2293 = vsel %vm2255, %v2214, 0
        %v2296 = vsel %vm2255, %v2224, 0
        %v2299 = vsel %vm2255, %v2234, 0
        %v2302 = vsel %vm2255, %v2246, 0
        %v2305 = vsel %vm1175, %v2254, 0
        %2307 = vmatprep.subr.bf16.mxu0 0
        %2308 = vmatpush1.bf16.msra.mxu0 %v2305
        %2309 = vmatprep.subr.bf16.mxu0 0
        %2310 = vmatpush1.bf16.msra.mxu0 0
        %2311 = vmatprep.subr.bf16.mxu0 0
        %2312 = vmatpush1.bf16.msra.mxu0 0
        %2313 = vmatprep.subr.bf16.mxu0 0
        %2314 = vmatpush1.bf16.msra.mxu0 0
        %2315 = vmatprep.subr.bf16.mxu0 0
        %2316 = vmatpush1.bf16.msra.mxu0 0
        %2317 = vmatprep.subr.bf16.mxu0 0
        %2318 = vmatpush1.bf16.msra.mxu0 0
        %2319 = vmatprep.subr.bf16.mxu0 0
        %2320 = vmatpush1.bf16.msra.mxu0 0
        %2321 = vmatprep.subr.bf16.mxu0 0
        %2322 = vmatpush1.bf16.msra.mxu0 0
        %2323 = vmatprep.subr.bf16.mxu0 0
        %2324 = vmatpush1.bf16.msra.mxu0 0
        %2325 = vmatprep.subr.bf16.mxu0 0
        %2326 = vmatpush1.bf16.msra.mxu0 0
        %2327 = vmatprep.subr.bf16.mxu0 0
        %2328 = vmatpush1.bf16.msra.mxu0 0
        %2329 = vmatprep.subr.bf16.mxu0 0
        %2330 = vmatpush1.bf16.msra.mxu0 0
        %2331 = vmatprep.subr.bf16.mxu0 0
        %2332 = vmatpush1.bf16.msra.mxu0 0
        %2333 = vmatprep.subr.bf16.mxu0 0
        %2334 = vmatpush1.bf16.msra.mxu0 0
        %2335 = vmatprep.subr.bf16.mxu0 0
        %2336 = vmatpush1.bf16.msra.mxu0 0
        %2337 = vmatprep.subr.bf16.mxu0 0
        %2338 = vmatpush1.bf16.msra.mxu0 0
        %2339 = vmatprep.mubr.bf16.mxu0 0
        %2340 = vmatmul.mubr.bf16.gmra.mrb[0].mxu0 %v2257
        %v2341 = vpop.f32.mrb[0].mxu0
        %v2342 = vadd.f32 0.0, %v2341
        %v2343 = vpop.f32.mrb[0].mxu0
        %v2344 = vpop.f32.mrb[0].mxu0
        %v2345 = vadd.f32 0.0, %v2344
        %v2346 = vpop.f32.mrb[0].mxu0
        %2347 = vmatprep.mubr.bf16.mxu0 0
        %2348 = vmatmul.mubr.bf16.gmra.mrb[0].mxu0 %v2260
        %v2349 = vpop.f32.mrb[0].mxu0
        %v2350 = vadd.f32 0.0, %v2349
        %v2351 = vpop.f32.mrb[0].mxu0
        %v2352 = vpop.f32.mrb[0].mxu0
        %v2353 = vadd.f32 0.0, %v2352
        %v2354 = vpop.f32.mrb[0].mxu0
        %2355 = vmatprep.mubr.bf16.mxu0 0
        %2356 = vmatmul.mubr.bf16.gmra.mrb[0].mxu0 %v2263
        %v2357 = vpop.f32.mrb[0].mxu0
        %v2358 = vadd.f32 0.0, %v2357
        %v2359 = vpop.f32.mrb[0].mxu0
        %v2360 = vpop.f32.mrb[0].mxu0
        %v2361 = vadd.f32 0.0, %v2360
        %v2362 = vpop.f32.mrb[0].mxu0
        %2363 = vmatprep.mubr.bf16.mxu0 0
        %2364 = vmatmul.mubr.bf16.gmra.mrb[0].mxu0 %v2266
        %v2365 = vpop.f32.mrb[0].mxu0
        %v2366 = vadd.f32 0.0, %v2365
        %v2367 = vpop.f32.mrb[0].mxu0
        %v2368 = vpop.f32.mrb[0].mxu0
        %v2369 = vadd.f32 0.0, %v2368
        %v2370 = vpop.f32.mrb[0].mxu0
        %2371 = vmatprep.mubr.bf16.mxu0 0
        %2372 = vmatmul.mubr.bf16.gmra.mrb[0].mxu0 %v2269
        %v2373 = vpop.f32.mrb[0].mxu0
        %v2374 = vadd.f32 0.0, %v2373
        %v2375 = vpop.f32.mrb[0].mxu0
        %v2376 = vpop.f32.mrb[0].mxu0
        %v2377 = vadd.f32 0.0, %v2376
        %v2378 = vpop.f32.mrb[0].mxu0
        %2379 = vmatprep.mubr.bf16.mxu0 0
        %2380 = vmatmul.mubr.bf16.gmra.mrb[0].mxu0 %v2272
        %v2381 = vpop.f32.mrb[0].mxu0
        %v2382 = vadd.f32 0.0, %v2381
        %v2383 = vpop.f32.mrb[0].mxu0
        %v2384 = vpop.f32.mrb[0].mxu0
        %v2385 = vadd.f32 0.0, %v2384
        %v2386 = vpop.f32.mrb[0].mxu0
        %2387 = vmatprep.mubr.bf16.mxu0 0
        %2388 = vmatmul.mubr.bf16.gmra.mrb[0].mxu0 %v2275
        %v2389 = vpop.f32.mrb[0].mxu0
        %v2390 = vadd.f32 0.0, %v2389
        %v2391 = vpop.f32.mrb[0].mxu0
        %v2392 = vpop.f32.mrb[0].mxu0
        %v2393 = vadd.f32 0.0, %v2392
        %v2394 = vpop.f32.mrb[0].mxu0
        %2395 = vmatprep.mubr.bf16.mxu0 0
        %2396 = vmatmul.mubr.bf16.gmra.mrb[0].mxu0 %v2278
        %v2397 = vpop.f32.mrb[0].mxu0
        %v2398 = vadd.f32 0.0, %v2397
        %v2399 = vpop.f32.mrb[0].mxu0
        %v2400 = vpop.f32.mrb[0].mxu0
        %v2401 = vadd.f32 0.0, %v2400
        %v2402 = vpop.f32.mrb[0].mxu0
        %2403 = vmatprep.mubr.bf16.mxu0 0
        %2404 = vmatmul.mubr.bf16.gmra.mrb[0].mxu0 %v2281
        %v2405 = vpop.f32.mrb[0].mxu0
        %v2406 = vadd.f32 0.0, %v2405
        %v2407 = vpop.f32.mrb[0].mxu0
        %v2408 = vpop.f32.mrb[0].mxu0
        %v2409 = vadd.f32 0.0, %v2408
        %v2410 = vpop.f32.mrb[0].mxu0
        %2411 = vmatprep.mubr.bf16.mxu0 0
        %2412 = vmatmul.mubr.bf16.gmra.mrb[0].mxu0 %v2284
        %v2413 = vpop.f32.mrb[0].mxu0
        %v2414 = vadd.f32 0.0, %v2413
        %v2415 = vpop.f32.mrb[0].mxu0
        %v2416 = vpop.f32.mrb[0].mxu0
        %v2417 = vadd.f32 0.0, %v2416
        %v2418 = vpop.f32.mrb[0].mxu0
        %2419 = vmatprep.mubr.bf16.mxu0 0
        %2420 = vmatmul.mubr.bf16.gmra.mrb[0].mxu0 %v2287
        %v2421 = vpop.f32.mrb[0].mxu0
        %v2422 = vadd.f32 0.0, %v2421
        %v2423 = vpop.f32.mrb[0].mxu0
        %v2424 = vpop.f32.mrb[0].mxu0
        %v2425 = vadd.f32 0.0, %v2424
        %v2426 = vpop.f32.mrb[0].mxu0
        %2427 = vmatprep.mubr.bf16.mxu0 0
        %2428 = vmatmul.mubr.bf16.gmra.mrb[0].mxu0 %v2290
        %v2429 = vpop.f32.mrb[0].mxu0
        %v2430 = vadd.f32 0.0, %v2429
        %v2431 = vpop.f32.mrb[0].mxu0
        %v2432 = vpop.f32.mrb[0].mxu0
        %v2433 = vadd.f32 0.0, %v2432
        %v2434 = vpop.f32.mrb[0].mxu0
        %2435 = vmatprep.mubr.bf16.mxu0 0
        %2436 = vmatmul.mubr.bf16.gmra.mrb[0].mxu0 %v2293
        %v2437 = vpop.f32.mrb[0].mxu0
        %v2438 = vadd.f32 0.0, %v2437
        %v2439 = vpop.f32.mrb[0].mxu0
        %v2440 = vpop.f32.mrb[0].mxu0
        %v2441 = vadd.f32 0.0, %v2440
        %v2442 = vpop.f32.mrb[0].mxu0
        %2443 = vmatprep.mubr.bf16.mxu0 0
        %2444 = vmatmul.mubr.bf16.gmra.mrb[0].mxu0 %v2296
        %v2445 = vpop.f32.mrb[0].mxu0
        %v2446 = vadd.f32 0.0, %v2445
        %v2447 = vpop.f32.mrb[0].mxu0
        %v2448 = vpop.f32.mrb[0].mxu0
        %v2449 = vadd.f32 0.0, %v2448
        %v2450 = vpop.f32.mrb[0].mxu0
        %2451 = vmatprep.mubr.bf16.mxu0 0
        %2452 = vmatmul.mubr.bf16.gmra.mrb[0].mxu0 %v2299
        %v2453 = vpop.f32.mrb[0].mxu0
        %v2454 = vadd.f32 0.0, %v2453
        %v2455 = vpop.f32.mrb[0].mxu0
        %v2456 = vpop.f32.mrb[0].mxu0
        %v2457 = vadd.f32 0.0, %v2456
        %v2458 = vpop.f32.mrb[0].mxu0
        %2459 = vmatprep.mubr.bf16.mxu0 0
        %2460 = vmatmul.mubr.bf16.gmra.mrb[0].mxu0 %v2302
        %v2461 = vpop.f32.mrb[0].mxu0
        %v2462 = vadd.f32 0.0, %v2461
        %v2463 = vpop.f32.mrb[0].mxu0
        %v2464 = vpop.f32.mrb[0].mxu0
        %v2465 = vadd.f32 0.0, %v2464
        %v2466 = vpop.f32.mrb[0].mxu0
        %2467 = vdwg.mxu0
        %v2470 = vunpack.c.l.b16 %v2235
        %v2471 = vunpack.c.l.b16 %v2236
        %v2472 = vpack.c.b16 %v2471, %v2470
        %v2474 = vsel %vm2255, %v2084, 0
        %v2477 = vsel %vm1175, %v2472, 0
        %2479 = vmatprep.subr.bf16.mxu0 0
        %2480 = vmatpush1.bf16.msra.mxu0 %v2477
        %2481 = vmatprep.subr.bf16.mxu0 0
        %2482 = vmatpush1.bf16.msra.mxu0 0
        %2483 = vmatprep.subr.bf16.mxu0 0
        %2484 = vmatpush1.bf16.msra.mxu0 0
        %2485 = vmatprep.subr.bf16.mxu0 0
        %2486 = vmatpush1.bf16.msra.mxu0 0
        %2487 = vmatprep.subr.bf16.mxu0 0
        %2488 = vmatpush1.bf16.msra.mxu0 0
        %2489 = vmatprep.subr.bf16.mxu0 0
        %2490 = vmatpush1.bf16.msra.mxu0 0
        %2491 = vmatprep.subr.bf16.mxu0 0
        %2492 = vmatpush1.bf16.msra.mxu0 0
        %2493 = vmatprep.subr.bf16.mxu0 0
        %2494 = vmatpush1.bf16.msra.mxu0 0
        %2495 = vmatprep.subr.bf16.mxu0 0
        %2496 = vmatpush1.bf16.msra.mxu0 0
        %2497 = vmatprep.subr.bf16.mxu0 0
        %2498 = vmatpush1.bf16.msra.mxu0 0
        %2499 = vmatprep.subr.bf16.mxu0 0
        %2500 = vmatpush1.bf16.msra.mxu0 0
        %2501 = vmatprep.subr.bf16.mxu0 0
        %2502 = vmatpush1.bf16.msra.mxu0 0
        %2503 = vmatprep.subr.bf16.mxu0 0
        %2504 = vmatpush1.bf16.msra.mxu0 0
        %2505 = vmatprep.subr.bf16.mxu0 0
        %2506 = vmatpush1.bf16.msra.mxu0 0
        %2507 = vmatprep.subr.bf16.mxu0 0
        %2508 = vmatpush1.bf16.msra.mxu0 0
        %2509 = vmatprep.subr.bf16.mxu0 0
        %2510 = vmatpush1.bf16.msra.mxu0 0
        %2511 = vmatprep.mubr.bf16.mxu0 0
        %2512 = vmatmul.mubr.bf16.gmra.mrb[0].mxu0 %v2474
        %v2513 = vpop.f32.mrb[0].mxu0
        %v2514 = vadd.f32 %v2342, %v2513
        %v2515 = vpop.f32.mrb[0].mxu0
        %v2516 = vpop.f32.mrb[0].mxu0
        %v2517 = vadd.f32 %v2345, %v2516
        %v2518 = vpop.f32.mrb[0].mxu0
        %2519 = vmatprep.mubr.bf16.mxu0 0
        %2520 = vmatmul.mubr.bf16.gmra.mrb[0].mxu0 %v2257
        %v2521 = vpop.f32.mrb[0].mxu0
        %v2522 = vadd.f32 %v2350, %v2521
        %v2523 = vpop.f32.mrb[0].mxu0
        %v2524 = vpop.f32.mrb[0].mxu0
        %v2525 = vadd.f32 %v2353, %v2524
        %v2526 = vpop.f32.mrb[0].mxu0
        %2527 = vmatprep.mubr.bf16.mxu0 0
        %2528 = vmatmul.mubr.bf16.gmra.mrb[0].mxu0 %v2260
        %v2529 = vpop.f32.mrb[0].mxu0
        %v2530 = vadd.f32 %v2358, %v2529
        %v2531 = vpop.f32.mrb[0].mxu0
        %v2532 = vpop.f32.mrb[0].mxu0
        %v2533 = vadd.f32 %v2361, %v2532
        %v2534 = vpop.f32.mrb[0].mxu0
        %2535 = vmatprep.mubr.bf16.mxu0 0
        %2536 = vmatmul.mubr.bf16.gmra.mrb[0].mxu0 %v2263
        %v2537 = vpop.f32.mrb[0].mxu0
        %v2538 = vadd.f32 %v2366, %v2537
        %v2539 = vpop.f32.mrb[0].mxu0
        %v2540 = vpop.f32.mrb[0].mxu0
        %v2541 = vadd.f32 %v2369, %v2540
        %v2542 = vpop.f32.mrb[0].mxu0
        %2543 = vmatprep.mubr.bf16.mxu0 0
        %2544 = vmatmul.mubr.bf16.gmra.mrb[0].mxu0 %v2266
        %v2545 = vpop.f32.mrb[0].mxu0
        %v2546 = vadd.f32 %v2374, %v2545
        %v2547 = vpop.f32.mrb[0].mxu0
        %v2548 = vpop.f32.mrb[0].mxu0
        %v2549 = vadd.f32 %v2377, %v2548
        %v2550 = vpop.f32.mrb[0].mxu0
        %2551 = vmatprep.mubr.bf16.mxu0 0
        %2552 = vmatmul.mubr.bf16.gmra.mrb[0].mxu0 %v2269
        %v2553 = vpop.f32.mrb[0].mxu0
        %v2554 = vadd.f32 %v2382, %v2553
        %v2555 = vpop.f32.mrb[0].mxu0
        %v2556 = vpop.f32.mrb[0].mxu0
        %v2557 = vadd.f32 %v2385, %v2556
        %v2558 = vpop.f32.mrb[0].mxu0
        %2559 = vmatprep.mubr.bf16.mxu0 0
        %2560 = vmatmul.mubr.bf16.gmra.mrb[0].mxu0 %v2272
        %v2561 = vpop.f32.mrb[0].mxu0
        %v2562 = vadd.f32 %v2390, %v2561
        %v2563 = vpop.f32.mrb[0].mxu0
        %v2564 = vpop.f32.mrb[0].mxu0
        %v2565 = vadd.f32 %v2393, %v2564
        %v2566 = vpop.f32.mrb[0].mxu0
        %2567 = vmatprep.mubr.bf16.mxu0 0
        %2568 = vmatmul.mubr.bf16.gmra.mrb[0].mxu0 %v2275
        %v2569 = vpop.f32.mrb[0].mxu0
        %v2570 = vadd.f32 %v2398, %v2569
        %v2571 = vpop.f32.mrb[0].mxu0
        %v2572 = vpop.f32.mrb[0].mxu0
        %v2573 = vadd.f32 %v2401, %v2572
        %v2574 = vpop.f32.mrb[0].mxu0
        %2575 = vmatprep.mubr.bf16.mxu0 0
        %2576 = vmatmul.mubr.bf16.gmra.mrb[0].mxu0 %v2278
        %v2577 = vpop.f32.mrb[0].mxu0
        %v2578 = vadd.f32 %v2406, %v2577
        %v2579 = vpop.f32.mrb[0].mxu0
        %v2580 = vpop.f32.mrb[0].mxu0
        %v2581 = vadd.f32 %v2409, %v2580
        %v2582 = vpop.f32.mrb[0].mxu0
        %2583 = vmatprep.mubr.bf16.mxu0 0
        %2584 = vmatmul.mubr.bf16.gmra.mrb[0].mxu0 %v2281
        %v2585 = vpop.f32.mrb[0].mxu0
        %v2586 = vadd.f32 %v2414, %v2585
        %v2587 = vpop.f32.mrb[0].mxu0
        %v2588 = vpop.f32.mrb[0].mxu0
        %v2589 = vadd.f32 %v2417, %v2588
        %v2590 = vpop.f32.mrb[0].mxu0
        %2591 = vmatprep.mubr.bf16.mxu0 0
        %2592 = vmatmul.mubr.bf16.gmra.mrb[0].mxu0 %v2284
        %v2593 = vpop.f32.mrb[0].mxu0
        %v2594 = vadd.f32 %v2422, %v2593
        %v2595 = vpop.f32.mrb[0].mxu0
        %v2596 = vpop.f32.mrb[0].mxu0
        %v2597 = vadd.f32 %v2425, %v2596
        %v2598 = vpop.f32.mrb[0].mxu0
        %2599 = vmatprep.mubr.bf16.mxu0 0
        %2600 = vmatmul.mubr.bf16.gmra.mrb[0].mxu0 %v2287
        %v2601 = vpop.f32.mrb[0].mxu0
        %v2602 = vadd.f32 %v2430, %v2601
        %v2603 = vpop.f32.mrb[0].mxu0
        %v2604 = vpop.f32.mrb[0].mxu0
        %v2605 = vadd.f32 %v2433, %v2604
        %v2606 = vpop.f32.mrb[0].mxu0
        %2607 = vmatprep.mubr.bf16.mxu0 0
        %2608 = vmatmul.mubr.bf16.gmra.mrb[0].mxu0 %v2290
        %v2609 = vpop.f32.mrb[0].mxu0
        %v2610 = vadd.f32 %v2438, %v2609
        %v2611 = vpop.f32.mrb[0].mxu0
        %v2612 = vpop.f32.mrb[0].mxu0
        %v2613 = vadd.f32 %v2441, %v2612
        %v2614 = vpop.f32.mrb[0].mxu0
        %2615 = vmatprep.mubr.bf16.mxu0 0
        %2616 = vmatmul.mubr.bf16.gmra.mrb[0].mxu0 %v2293
        %v2617 = vpop.f32.mrb[0].mxu0
        %v2618 = vadd.f32 %v2446, %v2617
        %v2619 = vpop.f32.mrb[0].mxu0
        %v2620 = vpop.f32.mrb[0].mxu0
        %v2621 = vadd.f32 %v2449, %v2620
        %v2622 = vpop.f32.mrb[0].mxu0
        %2623 = vmatprep.mubr.bf16.mxu0 0
        %2624 = vmatmul.mubr.bf16.gmra.mrb[0].mxu0 %v2296
        %v2625 = vpop.f32.mrb[0].mxu0
        %v2626 = vadd.f32 %v2454, %v2625
        %v2627 = vpop.f32.mrb[0].mxu0
        %v2628 = vpop.f32.mrb[0].mxu0
        %v2629 = vadd.f32 %v2457, %v2628
        %v2630 = vpop.f32.mrb[0].mxu0
        %2631 = vmatprep.mubr.bf16.mxu0 0
        %2632 = vmatmul.mubr.bf16.gmra.mrb[0].mxu0 %v2299
        %v2633 = vpop.f32.mrb[0].mxu0
        %v2634 = vadd.f32 %v2462, %v2633
        %v2635 = vpop.f32.mrb[0].mxu0
        %v2636 = vpop.f32.mrb[0].mxu0
        %v2637 = vadd.f32 %v2465, %v2636
        %v2638 = vpop.f32.mrb[0].mxu0
        %2639 = vdwg.mxu0
        %v2640 = vshrl.u32 %v2072, 16
        %v2642 = vshll.u32 %v2072, 16
        %v2644 = vrot.slane %v2642, 1
        %v2645 = vor.u32 %v2640, %v2644
        %v2646 = vshll.u32 %v2074, 16
        %v2648 = vrot.slane %v2646, 1
        %v2649 = vsel %vm1514, %v2645, %v2648
        %s2650 = scalar_lea.vmem [#allocation8], 16
        %v2651 = vld [vmem:[%s2650] sm:$0xf]
        %v2652 = vld [vmem:[%s2650 + $0x4] sm:$0x3]
        %v2655 = vunpack.c.l.b16 %v2651
        %v2656 = vunpack.c.l.b16 %v2652
        %v2657 = vpack.c.b16 %v2656, %v2655
        %v2659 = vsel %vm2255, %v2649, 0
        %v2662 = vsel %vm1175, %v2657, 0
        %2664 = vmatprep.subr.bf16.mxu0 0
        %2665 = vmatpush1.bf16.msra.mxu0 %v2662
        %2666 = vmatprep.subr.bf16.mxu0 0
        %2667 = vmatpush1.bf16.msra.mxu0 0
        %2668 = vmatprep.subr.bf16.mxu0 0
        %2669 = vmatpush1.bf16.msra.mxu0 0
        %2670 = vmatprep.subr.bf16.mxu0 0
        %2671 = vmatpush1.bf16.msra.mxu0 0
        %2672 = vmatprep.subr.bf16.mxu0 0
        %2673 = vmatpush1.bf16.msra.mxu0 0
        %2674 = vmatprep.subr.bf16.mxu0 0
        %2675 = vmatpush1.bf16.msra.mxu0 0
        %2676 = vmatprep.subr.bf16.mxu0 0
        %2677 = vmatpush1.bf16.msra.mxu0 0
        %2678 = vmatprep.subr.bf16.mxu0 0
        %2679 = vmatpush1.bf16.msra.mxu0 0
        %2680 = vmatprep.subr.bf16.mxu0 0
        %2681 = vmatpush1.bf16.msra.mxu0 0
        %2682 = vmatprep.subr.bf16.mxu0 0
        %2683 = vmatpush1.bf16.msra.mxu0 0
        %2684 = vmatprep.subr.bf16.mxu0 0
        %2685 = vmatpush1.bf16.msra.mxu0 0
        %2686 = vmatprep.subr.bf16.mxu0 0
        %2687 = vmatpush1.bf16.msra.mxu0 0
        %2688 = vmatprep.subr.bf16.mxu0 0
        %2689 = vmatpush1.bf16.msra.mxu0 0
        %2690 = vmatprep.subr.bf16.mxu0 0
        %2691 = vmatpush1.bf16.msra.mxu0 0
        %2692 = vmatprep.subr.bf16.mxu0 0
        %2693 = vmatpush1.bf16.msra.mxu0 0
        %2694 = vmatprep.subr.bf16.mxu0 0
        %2695 = vmatpush1.bf16.msra.mxu0 0
        %2696 = vmatprep.mubr.bf16.mxu0 0
        %2697 = vmatmul.mubr.bf16.gmra.mrb[0].mxu0 %v2260
        %v2698 = vpop.f32.mrb[0].mxu0
        %v2699 = vadd.f32 0.0, %v2698
        %v2700 = vpop.f32.mrb[0].mxu0
        %v2701 = vpop.f32.mrb[0].mxu0
        %v2702 = vadd.f32 0.0, %v2701
        %v2703 = vpop.f32.mrb[0].mxu0
        %2704 = vmatprep.mubr.bf16.mxu0 0
        %2705 = vmatmul.mubr.bf16.gmra.mrb[0].mxu0 %v2263
        %v2706 = vpop.f32.mrb[0].mxu0
        %v2707 = vadd.f32 0.0, %v2706
        %v2708 = vpop.f32.mrb[0].mxu0
        %v2709 = vpop.f32.mrb[0].mxu0
        %v2710 = vadd.f32 0.0, %v2709
        %v2711 = vpop.f32.mrb[0].mxu0
        %2712 = vmatprep.mubr.bf16.mxu0 0
        %2713 = vmatmul.mubr.bf16.gmra.mrb[0].mxu0 %v2266
        %v2714 = vpop.f32.mrb[0].mxu0
        %v2715 = vadd.f32 0.0, %v2714
        %v2716 = vpop.f32.mrb[0].mxu0
        %v2717 = vpop.f32.mrb[0].mxu0
        %v2718 = vadd.f32 0.0, %v2717
        %v2719 = vpop.f32.mrb[0].mxu0
        %2720 = vmatprep.mubr.bf16.mxu0 0
        %2721 = vmatmul.mubr.bf16.gmra.mrb[0].mxu0 %v2269
        %v2722 = vpop.f32.mrb[0].mxu0
        %v2723 = vadd.f32 0.0, %v2722
        %v2724 = vpop.f32.mrb[0].mxu0
        %v2725 = vpop.f32.mrb[0].mxu0
        %v2726 = vadd.f32 0.0, %v2725
        %v2727 = vpop.f32.mrb[0].mxu0
        %2728 = vmatprep.mubr.bf16.mxu0 0
        %2729 = vmatmul.mubr.bf16.gmra.mrb[0].mxu0 %v2272
        %v2730 = vpop.f32.mrb[0].mxu0
        %v2731 = vadd.f32 0.0, %v2730
        %v2732 = vpop.f32.mrb[0].mxu0
        %v2733 = vpop.f32.mrb[0].mxu0
        %v2734 = vadd.f32 0.0, %v2733
        %v2735 = vpop.f32.mrb[0].mxu0
        %2736 = vmatprep.mubr.bf16.mxu0 0
        %2737 = vmatmul.mubr.bf16.gmra.mrb[0].mxu0 %v2275
        %v2738 = vpop.f32.mrb[0].mxu0
        %v2739 = vadd.f32 0.0, %v2738
        %v2740 = vpop.f32.mrb[0].mxu0
        %v2741 = vpop.f32.mrb[0].mxu0
        %v2742 = vadd.f32 0.0, %v2741
        %v2743 = vpop.f32.mrb[0].mxu0
        %2744 = vmatprep.mubr.bf16.mxu0 0
        %2745 = vmatmul.mubr.bf16.gmra.mrb[0].mxu0 %v2278
        %v2746 = vpop.f32.mrb[0].mxu0
        %v2747 = vadd.f32 0.0, %v2746
        %v2748 = vpop.f32.mrb[0].mxu0
        %v2749 = vpop.f32.mrb[0].mxu0
        %v2750 = vadd.f32 0.0, %v2749
        %v2751 = vpop.f32.mrb[0].mxu0
        %2752 = vmatprep.mubr.bf16.mxu0 0
        %2753 = vmatmul.mubr.bf16.gmra.mrb[0].mxu0 %v2281
        %v2754 = vpop.f32.mrb[0].mxu0
        %v2755 = vadd.f32 0.0, %v2754
        %v2756 = vpop.f32.mrb[0].mxu0
        %v2757 = vpop.f32.mrb[0].mxu0
        %v2758 = vadd.f32 0.0, %v2757
        %v2759 = vpop.f32.mrb[0].mxu0
        %2760 = vmatprep.mubr.bf16.mxu0 0
        %2761 = vmatmul.mubr.bf16.gmra.mrb[0].mxu0 %v2284
        %v2762 = vpop.f32.mrb[0].mxu0
        %v2763 = vadd.f32 0.0, %v2762
        %v2764 = vpop.f32.mrb[0].mxu0
        %v2765 = vpop.f32.mrb[0].mxu0
        %v2766 = vadd.f32 0.0, %v2765
        %v2767 = vpop.f32.mrb[0].mxu0
        %2768 = vmatprep.mubr.bf16.mxu0 0
        %2769 = vmatmul.mubr.bf16.gmra.mrb[0].mxu0 %v2287
        %v2770 = vpop.f32.mrb[0].mxu0
        %v2771 = vadd.f32 0.0, %v2770
        %v2772 = vpop.f32.mrb[0].mxu0
        %v2773 = vpop.f32.mrb[0].mxu0
        %v2774 = vadd.f32 0.0, %v2773
        %v2775 = vpop.f32.mrb[0].mxu0
        %2776 = vmatprep.mubr.bf16.mxu0 0
        %2777 = vmatmul.mubr.bf16.gmra.mrb[0].mxu0 %v2290
        %v2778 = vpop.f32.mrb[0].mxu0
        %v2779 = vadd.f32 0.0, %v2778
        %v2780 = vpop.f32.mrb[0].mxu0
        %v2781 = vpop.f32.mrb[0].mxu0
        %v2782 = vadd.f32 0.0, %v2781
        %v2783 = vpop.f32.mrb[0].mxu0
        %2784 = vmatprep.mubr.bf16.mxu0 0
        %2785 = vmatmul.mubr.bf16.gmra.mrb[0].mxu0 %v2293
        %v2786 = vpop.f32.mrb[0].mxu0
        %v2787 = vadd.f32 0.0, %v2786
        %v2788 = vpop.f32.mrb[0].mxu0
        %v2789 = vpop.f32.mrb[0].mxu0
        %v2790 = vadd.f32 0.0, %v2789
        %v2791 = vpop.f32.mrb[0].mxu0
        %2792 = vmatprep.mubr.bf16.mxu0 0
        %2793 = vmatmul.mubr.bf16.gmra.mrb[0].mxu0 %v2296
        %v2794 = vpop.f32.mrb[0].mxu0
        %v2795 = vadd.f32 0.0, %v2794
        %v2796 = vpop.f32.mrb[0].mxu0
        %v2797 = vpop.f32.mrb[0].mxu0
        %v2798 = vadd.f32 0.0, %v2797
        %v2799 = vpop.f32.mrb[0].mxu0
        %2800 = vmatprep.mubr.bf16.mxu0 0
        %2801 = vmatmul.mubr.bf16.gmra.mrb[0].mxu0 %v2299
        %v2802 = vpop.f32.mrb[0].mxu0
        %v2803 = vadd.f32 0.0, %v2802
        %v2804 = vpop.f32.mrb[0].mxu0
        %v2805 = vpop.f32.mrb[0].mxu0
        %v2806 = vadd.f32 0.0, %v2805
        %v2807 = vpop.f32.mrb[0].mxu0
        %2808 = vmatprep.mubr.bf16.mxu0 0
        %2809 = vmatmul.mubr.bf16.gmra.mrb[0].mxu0 %v2302
        %v2810 = vpop.f32.mrb[0].mxu0
        %v2811 = vadd.f32 0.0, %v2810
        %v2812 = vpop.f32.mrb[0].mxu0
        %v2813 = vpop.f32.mrb[0].mxu0
        %v2814 = vadd.f32 0.0, %v2813
        %v2815 = vpop.f32.mrb[0].mxu0
        %2816 = vmatprep.mubr.bf16.mxu0 0
        %2817 = vmatmul.mubr.bf16.gmra.mrb[0].mxu0 %v2659
        %v2818 = vpop.f32.mrb[0].mxu0
        %v2819 = vadd.f32 0.0, %v2818
        %v2820 = vpop.f32.mrb[0].mxu0
        %v2821 = vpop.f32.mrb[0].mxu0
        %v2822 = vadd.f32 0.0, %v2821
        %v2823 = vpop.f32.mrb[0].mxu0
        %2824 = vdwg.mxu0
        %v2825 = vadd.f32 %v2514, %v2699
        %v2826 = vadd.f32 %v2517, %v2702
        %v2827 = vadd.f32 %v2522, %v2707
        %v2828 = vadd.f32 %v2525, %v2710
        %v2829 = vadd.f32 %v2530, %v2715
        %v2830 = vadd.f32 %v2533, %v2718
        %v2831 = vadd.f32 %v2538, %v2723
        %v2832 = vadd.f32 %v2541, %v2726
        %v2833 = vadd.f32 %v2546, %v2731
        %v2834 = vadd.f32 %v2549, %v2734
        %v2835 = vadd.f32 %v2554, %v2739
        %v2836 = vadd.f32 %v2557, %v2742
        %v2837 = vadd.f32 %v2562, %v2747
        %v2838 = vadd.f32 %v2565, %v2750
        %v2839 = vadd.f32 %v2570, %v2755
        %v2840 = vadd.f32 %v2573, %v2758
        %v2841 = vadd.f32 %v2578, %v2763
        %v2842 = vadd.f32 %v2581, %v2766
        %v2843 = vadd.f32 %v2586, %v2771
        %v2844 = vadd.f32 %v2589, %v2774
        %v2845 = vadd.f32 %v2594, %v2779
        %v2846 = vadd.f32 %v2597, %v2782
        %v2847 = vadd.f32 %v2602, %v2787
        %v2848 = vadd.f32 %v2605, %v2790
        %v2849 = vadd.f32 %v2610, %v2795
        %v2850 = vadd.f32 %v2613, %v2798
        %v2851 = vadd.f32 %v2618, %v2803
        %v2852 = vadd.f32 %v2621, %v2806
        %v2853 = vadd.f32 %v2626, %v2811
        %v2854 = vadd.f32 %v2629, %v2814
        %v2855 = vadd.f32 %v2634, %v2819
        %v2856 = vadd.f32 %v2637, %v2822
        %v2857 = vld [vmem:[#allocation10] sm:$0x1]
        %v2859 = vlaneseq
        %v2860 = vshrl.u32 %v2859, 7
        %v2861 = vsub.s32 0, %v2860
        %v2862 = vrot.slane %v2857, %v2861
        %v2864 = vadd.f32 %v2825, %v2862
        %v2865 = vadd.f32 %v2826, %v2862
        %v2866 = vadd.f32 %v2827, %v2862
        %v2867 = vadd.f32 %v2828, %v2862
        %v2868 = vadd.f32 %v2829, %v2862
        %v2869 = vadd.f32 %v2830, %v2862
        %v2870 = vadd.f32 %v2831, %v2862
        %v2871 = vadd.f32 %v2832, %v2862
        %v2872 = vadd.f32 %v2833, %v2862
        %v2873 = vadd.f32 %v2834, %v2862
        %v2874 = vadd.f32 %v2835, %v2862
        %v2875 = vadd.f32 %v2836, %v2862
        %v2876 = vadd.f32 %v2837, %v2862
        %v2877 = vadd.f32 %v2838, %v2862
        %v2878 = vadd.f32 %v2839, %v2862
        %v2879 = vadd.f32 %v2840, %v2862
        %v2880 = vadd.f32 %v2841, %v2862
        %v2881 = vadd.f32 %v2842, %v2862
        %v2882 = vadd.f32 %v2843, %v2862
        %v2883 = vadd.f32 %v2844, %v2862
        %v2884 = vadd.f32 %v2845, %v2862
        %v2885 = vadd.f32 %v2846, %v2862
        %v2886 = vadd.f32 %v2847, %v2862
        %v2887 = vadd.f32 %v2848, %v2862
        %v2888 = vadd.f32 %v2849, %v2862
        %v2889 = vadd.f32 %v2850, %v2862
        %v2890 = vadd.f32 %v2851, %v2862
        %v2891 = vadd.f32 %v2852, %v2862
        %v2892 = vadd.f32 %v2853, %v2862
        %v2893 = vadd.f32 %v2854, %v2862
        %v2894 = vadd.f32 %v2855, %v2862
        %v2895 = vadd.f32 %v2856, %v2862
        %v2896 = vmax.f32 %v2864, 0.0
        %v2897 = vmax.f32 %v2865, 0.0
        %v2898 = vmax.f32 %v2866, 0.0
        %v2899 = vmax.f32 %v2867, 0.0
        %v2900 = vmax.f32 %v2868, 0.0
        %v2901 = vmax.f32 %v2869, 0.0
        %v2902 = vmax.f32 %v2870, 0.0
        %v2903 = vmax.f32 %v2871, 0.0
        %v2904 = vmax.f32 %v2872, 0.0
        %v2905 = vmax.f32 %v2873, 0.0
        %v2906 = vmax.f32 %v2874, 0.0
        %v2907 = vmax.f32 %v2875, 0.0
        %v2908 = vmax.f32 %v2876, 0.0
        %v2909 = vmax.f32 %v2877, 0.0
        %v2910 = vmax.f32 %v2878, 0.0
        %v2911 = vmax.f32 %v2879, 0.0
        %v2912 = vmax.f32 %v2880, 0.0
        %v2913 = vmax.f32 %v2881, 0.0
        %v2914 = vmax.f32 %v2882, 0.0
        %v2915 = vmax.f32 %v2883, 0.0
        %v2916 = vmax.f32 %v2884, 0.0
        %v2917 = vmax.f32 %v2885, 0.0
        %v2918 = vmax.f32 %v2886, 0.0
        %v2919 = vmax.f32 %v2887, 0.0
        %v2920 = vmax.f32 %v2888, 0.0
        %v2921 = vmax.f32 %v2889, 0.0
        %v2922 = vmax.f32 %v2890, 0.0
        %v2923 = vmax.f32 %v2891, 0.0
        %v2924 = vmax.f32 %v2892, 0.0
        %v2925 = vmax.f32 %v2893, 0.0
        %v2926 = vmax.f32 %v2894, 0.0
        %v2927 = vmax.f32 %v2895, 0.0
        %2930 = vrot.lane.b32.xlu0 %v1366, 116
        %v2931 = vpop.permute.xlu0 %2930
        %2932 = vrot.lane.b32.xlu0 %v1368, 116
        %v2933 = vpop.permute.xlu0 %2932
        %2934 = vrot.lane.b32.xlu0 %v1370, 116
        %v2935 = vpop.permute.xlu0 %2934
        %2936 = vrot.lane.b32.xlu0 %v1372, 116
        %v2937 = vpop.permute.xlu0 %2936
        %2938 = vrot.lane.b32.xlu0 %v1374, 116
        %v2939 = vpop.permute.xlu0 %2938
        %2940 = vrot.lane.b32.xlu0 %v1376, 116
        %v2941 = vpop.permute.xlu0 %2940
        %2942 = vrot.lane.b32.xlu0 %v1378, 116
        %v2943 = vpop.permute.xlu0 %2942
        %2944 = vrot.lane.b32.xlu0 %v1380, 116
        %v2945 = vpop.permute.xlu0 %2944
        %2946 = vrot.lane.b32.xlu0 %v1382, 116
        %v2947 = vpop.permute.xlu0 %2946
        %2948 = vrot.lane.b32.xlu0 %v1384, 116
        %v2949 = vpop.permute.xlu0 %2948
        %2950 = vrot.lane.b32.xlu0 %v1386, 116
        %v2951 = vpop.permute.xlu0 %2950
        %2952 = vrot.lane.b32.xlu0 %v1388, 116
        %v2953 = vpop.permute.xlu0 %2952
        %2954 = vrot.lane.b32.xlu0 %v1390, 116
        %v2955 = vpop.permute.xlu0 %2954
        %2956 = vrot.lane.b32.xlu0 %v1392, 116
        %v2957 = vpop.permute.xlu0 %2956
        %2958 = vrot.lane.b32.xlu0 %v1394, 116
        %v2959 = vpop.permute.xlu0 %2958
        %2960 = vrot.lane.b32.xlu0 %v1396, 116
        %v2961 = vpop.permute.xlu0 %2960
        %2962 = vrot.lane.b32.xlu0 %v1398, 116
        %v2963 = vpop.permute.xlu0 %2962
        %2964 = vrot.lane.b32.xlu0 %v1400, 116
        %v2965 = vpop.permute.xlu0 %2964
        %2966 = vrot.lane.b32.xlu0 %v1402, 116
        %v2967 = vpop.permute.xlu0 %2966
        %2968 = vrot.lane.b32.xlu0 %v1404, 116
        %v2969 = vpop.permute.xlu0 %2968
        %v2971 = vshrl.u32 %v1366, 16
        %v2973 = vshll.u32 %v1366, 16
        %v2975 = vrot.slane %v2973, 1
        %v2976 = vor.u32 %v2971, %v2975
        %v2978 = vshll.u32 %v1367, 16
        %v2980 = vrot.slane %v2978, 1
        %v2981 = vsel %vm1514, %v2976, %v2980
        %v2983 = vshrl.u32 %v1404, 16
        %v2985 = vshll.u32 %v1404, 16
        %v2987 = vrot.slane %v2985, 1
        %v2988 = vor.u32 %v2983, %v2987
        %v2990 = vshll.u32 %v1405, 16
        %v2992 = vrot.slane %v2990, 1
        %v2993 = vsel %vm1514, %v2988, %v2992
        %2994 = vrot.lane.b32.xlu0 %v2981, 120
        %v2995 = vpop.permute.xlu0 %2994
        %2996 = vrot.lane.b32.xlu0 %v1526, 120
        %v2997 = vpop.permute.xlu0 %2996
        %2998 = vrot.lane.b32.xlu0 %v1540, 120
        %v2999 = vpop.permute.xlu0 %2998
        %3000 = vrot.lane.b32.xlu0 %v1554, 120
        %v3001 = vpop.permute.xlu0 %3000
        %3002 = vrot.lane.b32.xlu0 %v1568, 120
        %v3003 = vpop.permute.xlu0 %3002
        %3004 = vrot.lane.b32.xlu0 %v1582, 120
        %v3005 = vpop.permute.xlu0 %3004
        %3006 = vrot.lane.b32.xlu0 %v1596, 120
        %v3007 = vpop.permute.xlu0 %3006
        %3008 = vrot.lane.b32.xlu0 %v1610, 120
        %v3009 = vpop.permute.xlu0 %3008
        %3010 = vrot.lane.b32.xlu0 %v1624, 120
        %v3011 = vpop.permute.xlu0 %3010
        %3012 = vrot.lane.b32.xlu0 %v1638, 120
        %v3013 = vpop.permute.xlu0 %3012
        %3014 = vrot.lane.b32.xlu0 %v1652, 120
        %v3015 = vpop.permute.xlu0 %3014
        %3016 = vrot.lane.b32.xlu0 %v1666, 120
        %v3017 = vpop.permute.xlu0 %3016
        %3018 = vrot.lane.b32.xlu0 %v1680, 120
        %v3019 = vpop.permute.xlu0 %3018
        %3020 = vrot.lane.b32.xlu0 %v1694, 120
        %v3021 = vpop.permute.xlu0 %3020
        %3022 = vrot.lane.b32.xlu0 %v1708, 120
        %v3023 = vpop.permute.xlu0 %3022
        %3024 = vrot.lane.b32.xlu0 %v1722, 120
        %v3025 = vpop.permute.xlu0 %3024
        %3026 = vrot.lane.b32.xlu0 %v1736, 120
        %v3027 = vpop.permute.xlu0 %3026
        %3028 = vrot.lane.b32.xlu0 %v1750, 120
        %v3029 = vpop.permute.xlu0 %3028
        %3030 = vrot.lane.b32.xlu0 %v1764, 120
        %v3031 = vpop.permute.xlu0 %3030
        %3032 = vrot.lane.b32.xlu0 %v2993, 120
        %v3033 = vpop.permute.xlu0 %3032
        %v3036 = vrot.slane %v1366, 1
        %v3037 = vrot.slane %v1367, 1
        %v3038 = vsel %vm1839, %v3036, %v3037
        %v3039 = vrot.slane %v1404, 1
        %v3040 = vrot.slane %v1405, 1
        %v3041 = vsel %vm1839, %v3039, %v3040
        %3042 = vrot.lane.b32.xlu0 %v3038, 124
        %v3043 = vpop.permute.xlu0 %3042
        %3044 = vrot.lane.b32.xlu0 %v1842, 124
        %v3045 = vpop.permute.xlu0 %3044
        %3046 = vrot.lane.b32.xlu0 %v1845, 124
        %v3047 = vpop.permute.xlu0 %3046
        %3048 = vrot.lane.b32.xlu0 %v1848, 124
        %v3049 = vpop.permute.xlu0 %3048
        %3050 = vrot.lane.b32.xlu0 %v1851, 124
        %v3051 = vpop.permute.xlu0 %3050
        %3052 = vrot.lane.b32.xlu0 %v1854, 124
        %v3053 = vpop.permute.xlu0 %3052
        %3054 = vrot.lane.b32.xlu0 %v1857, 124
        %v3055 = vpop.permute.xlu0 %3054
        %3056 = vrot.lane.b32.xlu0 %v1860, 124
        %v3057 = vpop.permute.xlu0 %3056
        %3058 = vrot.lane.b32.xlu0 %v1863, 124
        %v3059 = vpop.permute.xlu0 %3058
        %3060 = vrot.lane.b32.xlu0 %v1866, 124
        %v3061 = vpop.permute.xlu0 %3060
        %3062 = vrot.lane.b32.xlu0 %v1869, 124
        %v3063 = vpop.permute.xlu0 %3062
        %3064 = vrot.lane.b32.xlu0 %v1872, 124
        %v3065 = vpop.permute.xlu0 %3064
        %3066 = vrot.lane.b32.xlu0 %v1875, 124
        %v3067 = vpop.permute.xlu0 %3066
        %3068 = vrot.lane.b32.xlu0 %v1878, 124
        %v3069 = vpop.permute.xlu0 %3068
        %3070 = vrot.lane.b32.xlu0 %v1881, 124
        %v3071 = vpop.permute.xlu0 %3070
        %3072 = vrot.lane.b32.xlu0 %v1884, 124
        %v3073 = vpop.permute.xlu0 %3072
        %3074 = vrot.lane.b32.xlu0 %v1887, 124
        %v3075 = vpop.permute.xlu0 %3074
        %3076 = vrot.lane.b32.xlu0 %v1890, 124
        %v3077 = vpop.permute.xlu0 %3076
        %3078 = vrot.lane.b32.xlu0 %v1893, 124
        %v3079 = vpop.permute.xlu0 %3078
        %3080 = vrot.lane.b32.xlu0 %v3041, 124
        %v3081 = vpop.permute.xlu0 %3080
        %vm3082 = vsmask.f32 6400
        %v3083 = vrot.slane %v2971, 1
        %v3084 = vrot.slane %v2973, 2
        %v3085 = vor.u32 %v3083, %v3084
        %v3086 = vshrl.u32 %v1367, 16
        %v3088 = vrot.slane %v3086, 1
        %v3089 = vrot.slane %v2978, 2
        %v3090 = vor.u32 %v3088, %v3089
        %v3091 = vsel %vm3082, %v3085, %v3090
        %v3092 = vrot.slane %v1516, 1
        %v3093 = vrot.slane %v1518, 2
        %v3094 = vor.u32 %v3092, %v3093
        %v3095 = vrot.slane %v1527, 1
        %v3096 = vrot.slane %v1523, 2
        %v3097 = vor.u32 %v3095, %v3096
        %v3098 = vsel %vm3082, %v3094, %v3097
        %v3099 = vrot.slane %v1530, 1
        %v3100 = vrot.slane %v1532, 2
        %v3101 = vor.u32 %v3099, %v3100
        %v3102 = vrot.slane %v1541, 1
        %v3103 = vrot.slane %v1537, 2
        %v3104 = vor.u32 %v3102, %v3103
        %v3105 = vsel %vm3082, %v3101, %v3104
        %v3106 = vrot.slane %v1544, 1
        %v3107 = vrot.slane %v1546, 2
        %v3108 = vor.u32 %v3106, %v3107
        %v3109 = vrot.slane %v1555, 1
        %v3110 = vrot.slane %v1551, 2
        %v3111 = vor.u32 %v3109, %v3110
        %v3112 = vsel %vm3082, %v3108, %v3111
        %v3113 = vrot.slane %v1558, 1
        %v3114 = vrot.slane %v1560, 2
        %v3115 = vor.u32 %v3113, %v3114
        %v3116 = vrot.slane %v1569, 1
        %v3117 = vrot.slane %v1565, 2
        %v3118 = vor.u32 %v3116, %v3117
        %v3119 = vsel %vm3082, %v3115, %v3118
        %v3120 = vrot.slane %v1572, 1
        %v3121 = vrot.slane %v1574, 2
        %v3122 = vor.u32 %v3120, %v3121
        %v3123 = vrot.slane %v1583, 1
        %v3124 = vrot.slane %v1579, 2
        %v3125 = vor.u32 %v3123, %v3124
        %v3126 = vsel %vm3082, %v3122, %v3125
        %v3127 = vrot.slane %v1586, 1
        %v3128 = vrot.slane %v1588, 2
        %v3129 = vor.u32 %v3127, %v3128
        %v3130 = vrot.slane %v1597, 1
        %v3131 = vrot.slane %v1593, 2
        %v3132 = vor.u32 %v3130, %v3131
        %v3133 = vsel %vm3082, %v3129, %v3132
        %v3134 = vrot.slane %v1600, 1
        %v3135 = vrot.slane %v1602, 2
        %v3136 = vor.u32 %v3134, %v3135
        %v3137 = vrot.slane %v1611, 1
        %v3138 = vrot.slane %v1607, 2
        %v3139 = vor.u32 %v3137, %v3138
        %v3140 = vsel %vm3082, %v3136, %v3139
        %v3141 = vrot.slane %v1614, 1
        %v3142 = vrot.slane %v1616, 2
        %v3143 = vor.u32 %v3141, %v3142
        %v3144 = vrot.slane %v1625, 1
        %v3145 = vrot.slane %v1621, 2
        %v3146 = vor.u32 %v3144, %v3145
        %v3147 = vsel %vm3082, %v3143, %v3146
        %v3148 = vrot.slane %v1628, 1
        %v3149 = vrot.slane %v1630, 2
        %v3150 = vor.u32 %v3148, %v3149
        %v3151 = vrot.slane %v1639, 1
        %v3152 = vrot.slane %v1635, 2
        %v3153 = vor.u32 %v3151, %v3152
        %v3154 = vsel %vm3082, %v3150, %v3153
        %v3155 = vrot.slane %v1642, 1
        %v3156 = vrot.slane %v1644, 2
        %v3157 = vor.u32 %v3155, %v3156
        %v3158 = vrot.slane %v1653, 1
        %v3159 = vrot.slane %v1649, 2
        %v3160 = vor.u32 %v3158, %v3159
        %v3161 = vsel %vm3082, %v3157, %v3160
        %v3162 = vrot.slane %v1656, 1
        %v3163 = vrot.slane %v1658, 2
        %v3164 = vor.u32 %v3162, %v3163
        %v3165 = vrot.slane %v1667, 1
        %v3166 = vrot.slane %v1663, 2
        %v3167 = vor.u32 %v3165, %v3166
        %v3168 = vsel %vm3082, %v3164, %v3167
        %v3169 = vrot.slane %v1670, 1
        %v3170 = vrot.slane %v1672, 2
        %v3171 = vor.u32 %v3169, %v3170
        %v3172 = vrot.slane %v1681, 1
        %v3173 = vrot.slane %v1677, 2
        %v3174 = vor.u32 %v3172, %v3173
        %v3175 = vsel %vm3082, %v3171, %v3174
        %v3176 = vrot.slane %v1684, 1
        %v3177 = vrot.slane %v1686, 2
        %v3178 = vor.u32 %v3176, %v3177
        %v3179 = vrot.slane %v1695, 1
        %v3180 = vrot.slane %v1691, 2
        %v3181 = vor.u32 %v3179, %v3180
        %v3182 = vsel %vm3082, %v3178, %v3181
        %v3183 = vrot.slane %v1698, 1
        %v3184 = vrot.slane %v1700, 2
        %v3185 = vor.u32 %v3183, %v3184
        %v3186 = vrot.slane %v1709, 1
        %v3187 = vrot.slane %v1705, 2
        %v3188 = vor.u32 %v3186, %v3187
        %v3189 = vsel %vm3082, %v3185, %v3188
        %v3190 = vrot.slane %v1712, 1
        %v3191 = vrot.slane %v1714, 2
        %v3192 = vor.u32 %v3190, %v3191
        %v3193 = vrot.slane %v1723, 1
        %v3194 = vrot.slane %v1719, 2
        %v3195 = vor.u32 %v3193, %v3194
        %v3196 = vsel %vm3082, %v3192, %v3195
        %v3197 = vrot.slane %v1726, 1
        %v3198 = vrot.slane %v1728, 2
        %v3199 = vor.u32 %v3197, %v3198
        %v3200 = vrot.slane %v1737, 1
        %v3201 = vrot.slane %v1733, 2
        %v3202 = vor.u32 %v3200, %v3201
        %v3203 = vsel %vm3082, %v3199, %v3202
        %v3204 = vrot.slane %v1740, 1
        %v3205 = vrot.slane %v1742, 2
        %v3206 = vor.u32 %v3204, %v3205
        %v3207 = vrot.slane %v1751, 1
        %v3208 = vrot.slane %v1747, 2
        %v3209 = vor.u32 %v3207, %v3208
        %v3210 = vsel %vm3082, %v3206, %v3209
        %v3211 = vrot.slane %v1754, 1
        %v3212 = vrot.slane %v1756, 2
        %v3213 = vor.u32 %v3211, %v3212
        %v3214 = vrot.slane %v1765, 1
        %v3215 = vrot.slane %v1761, 2
        %v3216 = vor.u32 %v3214, %v3215
        %v3217 = vsel %vm3082, %v3213, %v3216
        %v3218 = vrot.slane %v2983, 1
        %v3219 = vrot.slane %v2985, 2
        %v3220 = vor.u32 %v3218, %v3219
        %v3221 = vshrl.u32 %v1405, 16
        %v3223 = vrot.slane %v3221, 1
        %v3224 = vrot.slane %v2990, 2
        %v3225 = vor.u32 %v3223, %v3224
        %v3226 = vsel %vm3082, %v3220, %v3225
        %vm3227 = vcmask 1045504
        %v3228 = vrot.slane %v1366, 2
        %v3229 = vrot.slane %v1367, 2
        %v3230 = vsel %vm3227, %v3228, %v3229
        %v3231 = vrot.slane %v1368, 2
        %v3232 = vrot.slane %v1369, 2
        %v3233 = vsel %vm3227, %v3231, %v3232
        %v3234 = vrot.slane %v1370, 2
        %v3235 = vrot.slane %v1371, 2
        %v3236 = vsel %vm3227, %v3234, %v3235
        %v3237 = vrot.slane %v1372, 2
        %v3238 = vrot.slane %v1373, 2
        %v3239 = vsel %vm3227, %v3237, %v3238
        %v3240 = vrot.slane %v1374, 2
        %v3241 = vrot.slane %v1375, 2
        %v3242 = vsel %vm3227, %v3240, %v3241
        %v3243 = vrot.slane %v1376, 2
        %v3244 = vrot.slane %v1377, 2
        %v3245 = vsel %vm3227, %v3243, %v3244
        %v3246 = vrot.slane %v1378, 2
        %v3247 = vrot.slane %v1379, 2
        %v3248 = vsel %vm3227, %v3246, %v3247
        %v3249 = vrot.slane %v1380, 2
        %v3250 = vrot.slane %v1381, 2
        %v3251 = vsel %vm3227, %v3249, %v3250
        %v3252 = vrot.slane %v1382, 2
        %v3253 = vrot.slane %v1383, 2
        %v3254 = vsel %vm3227, %v3252, %v3253
        %v3255 = vrot.slane %v1384, 2
        %v3256 = vrot.slane %v1385, 2
        %v3257 = vsel %vm3227, %v3255, %v3256
        %v3258 = vrot.slane %v1386, 2
        %v3259 = vrot.slane %v1387, 2
        %v3260 = vsel %vm3227, %v3258, %v3259
        %v3261 = vrot.slane %v1388, 2
        %v3262 = vrot.slane %v1389, 2
        %v3263 = vsel %vm3227, %v3261, %v3262
        %v3264 = vrot.slane %v1390, 2
        %v3265 = vrot.slane %v1391, 2
        %v3266 = vsel %vm3227, %v3264, %v3265
        %v3267 = vrot.slane %v1392, 2
        %v3268 = vrot.slane %v1393, 2
        %v3269 = vsel %vm3227, %v3267, %v3268
        %v3270 = vrot.slane %v1394, 2
        %v3271 = vrot.slane %v1395, 2
        %v3272 = vsel %vm3227, %v3270, %v3271
        %v3273 = vrot.slane %v1396, 2
        %v3274 = vrot.slane %v1397, 2
        %v3275 = vsel %vm3227, %v3273, %v3274
        %v3276 = vrot.slane %v1398, 2
        %v3277 = vrot.slane %v1399, 2
        %v3278 = vsel %vm3227, %v3276, %v3277
        %v3279 = vrot.slane %v1400, 2
        %v3280 = vrot.slane %v1401, 2
        %v3281 = vsel %vm3227, %v3279, %v3280
        %v3282 = vrot.slane %v1402, 2
        %v3283 = vrot.slane %v1403, 2
        %v3284 = vsel %vm3227, %v3282, %v3283
        %v3285 = vrot.slane %v1404, 2
        %v3286 = vrot.slane %v1405, 2
        %v3287 = vsel %vm3227, %v3285, %v3286
        %3288 = vrot.lane.b32.xlu0 %v3230, 4
        %v3289 = vpop.permute.xlu0 %3288
        %3290 = vrot.lane.b32.xlu0 %v3233, 4
        %v3291 = vpop.permute.xlu0 %3290
        %3292 = vrot.lane.b32.xlu0 %v3236, 4
        %v3293 = vpop.permute.xlu0 %3292
        %3294 = vrot.lane.b32.xlu0 %v3239, 4
        %v3295 = vpop.permute.xlu0 %3294
        %3296 = vrot.lane.b32.xlu0 %v3242, 4
        %v3297 = vpop.permute.xlu0 %3296
        %3298 = vrot.lane.b32.xlu0 %v3245, 4
        %v3299 = vpop.permute.xlu0 %3298
        %3300 = vrot.lane.b32.xlu0 %v3248, 4
        %v3301 = vpop.permute.xlu0 %3300
        %3302 = vrot.lane.b32.xlu0 %v3251, 4
        %v3303 = vpop.permute.xlu0 %3302
        %3304 = vrot.lane.b32.xlu0 %v3254, 4
        %v3305 = vpop.permute.xlu0 %3304
        %3306 = vrot.lane.b32.xlu0 %v3257, 4
        %v3307 = vpop.permute.xlu0 %3306
        %3308 = vrot.lane.b32.xlu0 %v3260, 4
        %v3309 = vpop.permute.xlu0 %3308
        %3310 = vrot.lane.b32.xlu0 %v3263, 4
        %v3311 = vpop.permute.xlu0 %3310
        %3312 = vrot.lane.b32.xlu0 %v3266, 4
        %v3313 = vpop.permute.xlu0 %3312
        %3314 = vrot.lane.b32.xlu0 %v3269, 4
        %v3315 = vpop.permute.xlu0 %3314
        %3316 = vrot.lane.b32.xlu0 %v3272, 4
        %v3317 = vpop.permute.xlu0 %3316
        %3318 = vrot.lane.b32.xlu0 %v3275, 4
        %v3319 = vpop.permute.xlu0 %3318
        %3320 = vrot.lane.b32.xlu0 %v3278, 4
        %v3321 = vpop.permute.xlu0 %3320
        %3322 = vrot.lane.b32.xlu0 %v3281, 4
        %v3323 = vpop.permute.xlu0 %3322
        %3324 = vrot.lane.b32.xlu0 %v3284, 4
        %v3325 = vpop.permute.xlu0 %3324
        %3326 = vrot.lane.b32.xlu0 %v3287, 4
        %v3327 = vpop.permute.xlu0 %3326
        %v3330 = vsel %vm699, %v2931, %v2995
        %v3333 = vsel %vm699, %v2933, %v2997
        %v3336 = vsel %vm699, %v2935, %v2999
        %v3339 = vsel %vm699, %v2937, %v3001
        %v3342 = vsel %vm699, %v2939, %v3003
        %v3345 = vsel %vm699, %v2941, %v3005
        %v3348 = vsel %vm699, %v2943, %v3007
        %v3351 = vsel %vm699, %v2945, %v3009
        %v3354 = vsel %vm699, %v2947, %v3011
        %v3357 = vsel %vm699, %v2949, %v3013
        %v3360 = vsel %vm699, %v2951, %v3015
        %v3363 = vsel %vm699, %v2953, %v3017
        %v3366 = vsel %vm699, %v2955, %v3019
        %v3369 = vsel %vm699, %v2957, %v3021
        %v3372 = vsel %vm699, %v2959, %v3023
        %v3375 = vsel %vm699, %v2961, %v3025
        %v3378 = vsel %vm699, %v2963, %v3027
        %v3381 = vsel %vm699, %v2965, %v3029
        %v3384 = vsel %vm699, %v2967, %v3031
        %v3387 = vsel %vm699, %v2969, %v3033
        %v3389 = vsel %vm2002, %v3330, %v3043
        %v3391 = vsel %vm2002, %v3333, %v3045
        %v3393 = vsel %vm2002, %v3336, %v3047
        %v3395 = vsel %vm2002, %v3339, %v3049
        %v3397 = vsel %vm2002, %v3342, %v3051
        %v3399 = vsel %vm2002, %v3345, %v3053
        %v3401 = vsel %vm2002, %v3348, %v3055
        %v3403 = vsel %vm2002, %v3351, %v3057
        %v3405 = vsel %vm2002, %v3354, %v3059
        %v3407 = vsel %vm2002, %v3357, %v3061
        %v3409 = vsel %vm2002, %v3360, %v3063
        %v3411 = vsel %vm2002, %v3363, %v3065
        %v3413 = vsel %vm2002, %v3366, %v3067
        %v3415 = vsel %vm2002, %v3369, %v3069
        %v3417 = vsel %vm2002, %v3372, %v3071
        %v3419 = vsel %vm2002, %v3375, %v3073
        %v3421 = vsel %vm2002, %v3378, %v3075
        %v3423 = vsel %vm2002, %v3381, %v3077
        %v3425 = vsel %vm2002, %v3384, %v3079
        %v3427 = vsel %vm2002, %v3387, %v3081
        %v3429 = vsel %vm2255, %v3389, %v3091
        %v3431 = vsel %vm2255, %v3391, %v3098
        %v3433 = vsel %vm2255, %v3393, %v3105
        %v3435 = vsel %vm2255, %v3395, %v3112
        %v3437 = vsel %vm2255, %v3397, %v3119
        %v3439 = vsel %vm2255, %v3399, %v3126
        %v3441 = vsel %vm2255, %v3401, %v3133
        %v3443 = vsel %vm2255, %v3403, %v3140
        %v3445 = vsel %vm2255, %v3405, %v3147
        %v3447 = vsel %vm2255, %v3407, %v3154
        %v3449 = vsel %vm2255, %v3409, %v3161
        %v3451 = vsel %vm2255, %v3411, %v3168
        %v3453 = vsel %vm2255, %v3413, %v3175
        %v3455 = vsel %vm2255, %v3415, %v3182
        %v3457 = vsel %vm2255, %v3417, %v3189
        %v3459 = vsel %vm2255, %v3419, %v3196
        %v3461 = vsel %vm2255, %v3421, %v3203
        %v3463 = vsel %vm2255, %v3423, %v3210
        %v3465 = vsel %vm2255, %v3425, %v3217
        %v3467 = vsel %vm2255, %v3427, %v3226
        %vm3468 = vcmask 130048
        %v3470 = vsel %vm3468, %v3429, %v3289
        %v3472 = vsel %vm3468, %v3431, %v3291
        %v3474 = vsel %vm3468, %v3433, %v3293
        %v3476 = vsel %vm3468, %v3435, %v3295
        %v3478 = vsel %vm3468, %v3437, %v3297
        %v3480 = vsel %vm3468, %v3439, %v3299
        %v3482 = vsel %vm3468, %v3441, %v3301
        %v3484 = vsel %vm3468, %v3443, %v3303
        %v3486 = vsel %vm3468, %v3445, %v3305
        %v3488 = vsel %vm3468, %v3447, %v3307
        %v3490 = vsel %vm3468, %v3449, %v3309
        %v3492 = vsel %vm3468, %v3451, %v3311
        %v3494 = vsel %vm3468, %v3453, %v3313
        %v3496 = vsel %vm3468, %v3455, %v3315
        %v3498 = vsel %vm3468, %v3457, %v3317
        %v3500 = vsel %vm3468, %v3459, %v3319
        %v3502 = vsel %vm3468, %v3461, %v3321
        %v3504 = vsel %vm3468, %v3463, %v3323
        %v3506 = vsel %vm3468, %v3465, %v3325
        %v3508 = vsel %vm3468, %v3467, %v3327
        %v3509 = vld [vmem:[#allocation11] sm:$0xf]
        %v3510 = vld [vmem:[#allocation11 + $0x4] sm:$0xf]
        %v3511 = vld [vmem:[#allocation11 + $0x8] sm:$0x3]
        %s3512 = scalar_lea.vmem [#allocation11], 12
        %v3513 = vld [vmem:[%s3512] sm:$0xf]
        %v3514 = vld [vmem:[%s3512 + $0x4] sm:$0xf]
        %v3515 = vld [vmem:[%s3512 + $0x8] sm:$0x3]
        %v3519 = vunpack.c.l.b16 %v3513
        %v3520 = vunpack.c.l.b16 %v3514
        %v3521 = vunpack.c.l.b16 %v3515
        %v3522 = vpack.c.b16 %v3520, %v3519
        %v3523 = vpack.c.b16 %v3521, %v3521
        %vm3525 = vcmask 162816
        %v3526 = vsel %vm3525, %v3472, 0
        %v3528 = vsel %vm3525, %v3474, 0
        %v3530 = vsel %vm3525, %v3476, 0
        %v3532 = vsel %vm3525, %v3478, 0
        %v3534 = vsel %vm3525, %v3480, 0
        %v3536 = vsel %vm3525, %v3482, 0
        %v3538 = vsel %vm3525, %v3484, 0
        %v3540 = vsel %vm3525, %v3486, 0
        %v3542 = vsel %vm3525, %v3488, 0
        %v3544 = vsel %vm3525, %v3490, 0
        %v3546 = vsel %vm3525, %v3492, 0
        %v3548 = vsel %vm3525, %v3494, 0
        %v3550 = vsel %vm3525, %v3496, 0
        %v3552 = vsel %vm3525, %v3498, 0
        %v3554 = vsel %vm3525, %v3500, 0
        %v3556 = vsel %vm3525, %v3502, 0
        %v3559 = vsel %vm790, %v3523, 0
        %3561 = vmatprep.subr.bf16.mxu0 0
        %3562 = vmatpush1.bf16.msra.mxu0 %v3522
        %3563 = vmatprep.subr.bf16.mxu0 0
        %3564 = vmatpush1.bf16.msra.mxu0 %v3559
        %3565 = vmatprep.subr.bf16.mxu0 0
        %3566 = vmatpush1.bf16.msra.mxu0 0
        %3567 = vmatprep.subr.bf16.mxu0 0
        %3568 = vmatpush1.bf16.msra.mxu0 0
        %3569 = vmatprep.subr.bf16.mxu0 0
        %3570 = vmatpush1.bf16.msra.mxu0 0
        %3571 = vmatprep.subr.bf16.mxu0 0
        %3572 = vmatpush1.bf16.msra.mxu0 0
        %3573 = vmatprep.subr.bf16.mxu0 0
        %3574 = vmatpush1.bf16.msra.mxu0 0
        %3575 = vmatprep.subr.bf16.mxu0 0
        %3576 = vmatpush1.bf16.msra.mxu0 0
        %3577 = vmatprep.subr.bf16.mxu0 0
        %3578 = vmatpush1.bf16.msra.mxu0 0
        %3579 = vmatprep.subr.bf16.mxu0 0
        %3580 = vmatpush1.bf16.msra.mxu0 0
        %3581 = vmatprep.subr.bf16.mxu0 0
        %3582 = vmatpush1.bf16.msra.mxu0 0
        %3583 = vmatprep.subr.bf16.mxu0 0
        %3584 = vmatpush1.bf16.msra.mxu0 0
        %3585 = vmatprep.subr.bf16.mxu0 0
        %3586 = vmatpush1.bf16.msra.mxu0 0
        %3587 = vmatprep.subr.bf16.mxu0 0
        %3588 = vmatpush1.bf16.msra.mxu0 0
        %3589 = vmatprep.subr.bf16.mxu0 0
        %3590 = vmatpush1.bf16.msra.mxu0 0
        %3591 = vmatprep.subr.bf16.mxu0 0
        %3592 = vmatpush1.bf16.msra.mxu0 0
        %3593 = vmatprep.mubr.bf16.mxu0 0
        %3594 = vmatmul.mubr.bf16.gmra.mrb[0].mxu0 %v3526
        %v3595 = vpop.f32.mrb[0].mxu0
        %v3596 = vadd.f32 0.0, %v3595
        %v3597 = vpop.f32.mrb[0].mxu0
        %v3598 = vpop.f32.mrb[0].mxu0
        %v3599 = vadd.f32 0.0, %v3598
        %v3600 = vpop.f32.mrb[0].mxu0
        %3601 = vmatprep.mubr.bf16.mxu0 0
        %3602 = vmatmul.mubr.bf16.gmra.mrb[0].mxu0 %v3528
        %v3603 = vpop.f32.mrb[0].mxu0
        %v3604 = vadd.f32 0.0, %v3603
        %v3605 = vpop.f32.mrb[0].mxu0
        %v3606 = vpop.f32.mrb[0].mxu0
        %v3607 = vadd.f32 0.0, %v3606
        %v3608 = vpop.f32.mrb[0].mxu0
        %3609 = vmatprep.mubr.bf16.mxu0 0
        %3610 = vmatmul.mubr.bf16.gmra.mrb[0].mxu0 %v3530
        %v3611 = vpop.f32.mrb[0].mxu0
        %v3612 = vadd.f32 0.0, %v3611
        %v3613 = vpop.f32.mrb[0].mxu0
        %v3614 = vpop.f32.mrb[0].mxu0
        %v3615 = vadd.f32 0.0, %v3614
        %v3616 = vpop.f32.mrb[0].mxu0
        %3617 = vmatprep.mubr.bf16.mxu0 0
        %3618 = vmatmul.mubr.bf16.gmra.mrb[0].mxu0 %v3532
        %v3619 = vpop.f32.mrb[0].mxu0
        %v3620 = vadd.f32 0.0, %v3619
        %v3621 = vpop.f32.mrb[0].mxu0
        %v3622 = vpop.f32.mrb[0].mxu0
        %v3623 = vadd.f32 0.0, %v3622
        %v3624 = vpop.f32.mrb[0].mxu0
        %3625 = vmatprep.mubr.bf16.mxu0 0
        %3626 = vmatmul.mubr.bf16.gmra.mrb[0].mxu0 %v3534
        %v3627 = vpop.f32.mrb[0].mxu0
        %v3628 = vadd.f32 0.0, %v3627
        %v3629 = vpop.f32.mrb[0].mxu0
        %v3630 = vpop.f32.mrb[0].mxu0
        %v3631 = vadd.f32 0.0, %v3630
        %v3632 = vpop.f32.mrb[0].mxu0
        %3633 = vmatprep.mubr.bf16.mxu0 0
        %3634 = vmatmul.mubr.bf16.gmra.mrb[0].mxu0 %v3536
        %v3635 = vpop.f32.mrb[0].mxu0
        %v3636 = vadd.f32 0.0, %v3635
        %v3637 = vpop.f32.mrb[0].mxu0
        %v3638 = vpop.f32.mrb[0].mxu0
        %v3639 = vadd.f32 0.0, %v3638
        %v3640 = vpop.f32.mrb[0].mxu0
        %3641 = vmatprep.mubr.bf16.mxu0 0
        %3642 = vmatmul.mubr.bf16.gmra.mrb[0].mxu0 %v3538
        %v3643 = vpop.f32.mrb[0].mxu0
        %v3644 = vadd.f32 0.0, %v3643
        %v3645 = vpop.f32.mrb[0].mxu0
        %v3646 = vpop.f32.mrb[0].mxu0
        %v3647 = vadd.f32 0.0, %v3646
        %v3648 = vpop.f32.mrb[0].mxu0
        %3649 = vmatprep.mubr.bf16.mxu0 0
        %3650 = vmatmul.mubr.bf16.gmra.mrb[0].mxu0 %v3540
        %v3651 = vpop.f32.mrb[0].mxu0
        %v3652 = vadd.f32 0.0, %v3651
        %v3653 = vpop.f32.mrb[0].mxu0
        %v3654 = vpop.f32.mrb[0].mxu0
        %v3655 = vadd.f32 0.0, %v3654
        %v3656 = vpop.f32.mrb[0].mxu0
        %3657 = vmatprep.mubr.bf16.mxu0 0
        %3658 = vmatmul.mubr.bf16.gmra.mrb[0].mxu0 %v3542
        %v3659 = vpop.f32.mrb[0].mxu0
        %v3660 = vadd.f32 0.0, %v3659
        %v3661 = vpop.f32.mrb[0].mxu0
        %v3662 = vpop.f32.mrb[0].mxu0
        %v3663 = vadd.f32 0.0, %v3662
        %v3664 = vpop.f32.mrb[0].mxu0
        %3665 = vmatprep.mubr.bf16.mxu0 0
        %3666 = vmatmul.mubr.bf16.gmra.mrb[0].mxu0 %v3544
        %v3667 = vpop.f32.mrb[0].mxu0
        %v3668 = vadd.f32 0.0, %v3667
        %v3669 = vpop.f32.mrb[0].mxu0
        %v3670 = vpop.f32.mrb[0].mxu0
        %v3671 = vadd.f32 0.0, %v3670
        %v3672 = vpop.f32.mrb[0].mxu0
        %3673 = vmatprep.mubr.bf16.mxu0 0
        %3674 = vmatmul.mubr.bf16.gmra.mrb[0].mxu0 %v3546
        %v3675 = vpop.f32.mrb[0].mxu0
        %v3676 = vadd.f32 0.0, %v3675
        %v3677 = vpop.f32.mrb[0].mxu0
        %v3678 = vpop.f32.mrb[0].mxu0
        %v3679 = vadd.f32 0.0, %v3678
        %v3680 = vpop.f32.mrb[0].mxu0
        %3681 = vmatprep.mubr.bf16.mxu0 0
        %3682 = vmatmul.mubr.bf16.gmra.mrb[0].mxu0 %v3548
        %v3683 = vpop.f32.mrb[0].mxu0
        %v3684 = vadd.f32 0.0, %v3683
        %v3685 = vpop.f32.mrb[0].mxu0
        %v3686 = vpop.f32.mrb[0].mxu0
        %v3687 = vadd.f32 0.0, %v3686
        %v3688 = vpop.f32.mrb[0].mxu0
        %3689 = vmatprep.mubr.bf16.mxu0 0
        %3690 = vmatmul.mubr.bf16.gmra.mrb[0].mxu0 %v3550
        %v3691 = vpop.f32.mrb[0].mxu0
        %v3692 = vadd.f32 0.0, %v3691
        %v3693 = vpop.f32.mrb[0].mxu0
        %v3694 = vpop.f32.mrb[0].mxu0
        %v3695 = vadd.f32 0.0, %v3694
        %v3696 = vpop.f32.mrb[0].mxu0
        %3697 = vmatprep.mubr.bf16.mxu0 0
        %3698 = vmatmul.mubr.bf16.gmra.mrb[0].mxu0 %v3552
        %v3699 = vpop.f32.mrb[0].mxu0
        %v3700 = vadd.f32 0.0, %v3699
        %v3701 = vpop.f32.mrb[0].mxu0
        %v3702 = vpop.f32.mrb[0].mxu0
        %v3703 = vadd.f32 0.0, %v3702
        %v3704 = vpop.f32.mrb[0].mxu0
        %3705 = vmatprep.mubr.bf16.mxu0 0
        %3706 = vmatmul.mubr.bf16.gmra.mrb[0].mxu0 %v3554
        %v3707 = vpop.f32.mrb[0].mxu0
        %v3708 = vadd.f32 0.0, %v3707
        %v3709 = vpop.f32.mrb[0].mxu0
        %v3710 = vpop.f32.mrb[0].mxu0
        %v3711 = vadd.f32 0.0, %v3710
        %v3712 = vpop.f32.mrb[0].mxu0
        %3713 = vmatprep.mubr.bf16.mxu0 0
        %3714 = vmatmul.mubr.bf16.gmra.mrb[0].mxu0 %v3556
        %v3715 = vpop.f32.mrb[0].mxu0
        %v3716 = vadd.f32 0.0, %v3715
        %v3717 = vpop.f32.mrb[0].mxu0
        %v3718 = vpop.f32.mrb[0].mxu0
        %v3719 = vadd.f32 0.0, %v3718
        %v3720 = vpop.f32.mrb[0].mxu0
        %3721 = vdwg.mxu0
        %v3725 = vunpack.c.l.b16 %v3509
        %v3726 = vunpack.c.l.b16 %v3510
        %v3727 = vunpack.c.l.b16 %v3511
        %v3728 = vpack.c.b16 %v3726, %v3725
        %v3729 = vpack.c.b16 %v3727, %v3727
        %v3731 = vsel %vm3525, %v3470, 0
        %v3734 = vsel %vm790, %v3729, 0
        %3736 = vmatprep.subr.bf16.mxu0 0
        %3737 = vmatpush1.bf16.msra.mxu0 %v3728
        %3738 = vmatprep.subr.bf16.mxu0 0
        %3739 = vmatpush1.bf16.msra.mxu0 %v3734
        %3740 = vmatprep.subr.bf16.mxu0 0
        %3741 = vmatpush1.bf16.msra.mxu0 0
        %3742 = vmatprep.subr.bf16.mxu0 0
        %3743 = vmatpush1.bf16.msra.mxu0 0
        %3744 = vmatprep.subr.bf16.mxu0 0
        %3745 = vmatpush1.bf16.msra.mxu0 0
        %3746 = vmatprep.subr.bf16.mxu0 0
        %3747 = vmatpush1.bf16.msra.mxu0 0
        %3748 = vmatprep.subr.bf16.mxu0 0
        %3749 = vmatpush1.bf16.msra.mxu0 0
        %3750 = vmatprep.subr.bf16.mxu0 0
        %3751 = vmatpush1.bf16.msra.mxu0 0
        %3752 = vmatprep.subr.bf16.mxu0 0
        %3753 = vmatpush1.bf16.msra.mxu0 0
        %3754 = vmatprep.subr.bf16.mxu0 0
        %3755 = vmatpush1.bf16.msra.mxu0 0
        %3756 = vmatprep.subr.bf16.mxu0 0
        %3757 = vmatpush1.bf16.msra.mxu0 0
        %3758 = vmatprep.subr.bf16.mxu0 0
        %3759 = vmatpush1.bf16.msra.mxu0 0
        %3760 = vmatprep.subr.bf16.mxu0 0
        %3761 = vmatpush1.bf16.msra.mxu0 0
        %3762 = vmatprep.subr.bf16.mxu0 0
        %3763 = vmatpush1.bf16.msra.mxu0 0
        %3764 = vmatprep.subr.bf16.mxu0 0
        %3765 = vmatpush1.bf16.msra.mxu0 0
        %3766 = vmatprep.subr.bf16.mxu0 0
        %3767 = vmatpush1.bf16.msra.mxu0 0
        %3768 = vmatprep.mubr.bf16.mxu0 0
        %3769 = vmatmul.mubr.bf16.gmra.mrb[0].mxu0 %v3731
        %v3770 = vpop.f32.mrb[0].mxu0
        %v3771 = vadd.f32 %v3596, %v3770
        %v3772 = vpop.f32.mrb[0].mxu0
        %v3773 = vpop.f32.mrb[0].mxu0
        %v3774 = vadd.f32 %v3599, %v3773
        %v3775 = vpop.f32.mrb[0].mxu0
        %3776 = vmatprep.mubr.bf16.mxu0 0
        %3777 = vmatmul.mubr.bf16.gmra.mrb[0].mxu0 %v3526
        %v3778 = vpop.f32.mrb[0].mxu0
        %v3779 = vadd.f32 %v3604, %v3778
        %v3780 = vpop.f32.mrb[0].mxu0
        %v3781 = vpop.f32.mrb[0].mxu0
        %v3782 = vadd.f32 %v3607, %v3781
        %v3783 = vpop.f32.mrb[0].mxu0
        %3784 = vmatprep.mubr.bf16.mxu0 0
        %3785 = vmatmul.mubr.bf16.gmra.mrb[0].mxu0 %v3528
        %v3786 = vpop.f32.mrb[0].mxu0
        %v3787 = vadd.f32 %v3612, %v3786
        %v3788 = vpop.f32.mrb[0].mxu0
        %v3789 = vpop.f32.mrb[0].mxu0
        %v3790 = vadd.f32 %v3615, %v3789
        %v3791 = vpop.f32.mrb[0].mxu0
        %3792 = vmatprep.mubr.bf16.mxu0 0
        %3793 = vmatmul.mubr.bf16.gmra.mrb[0].mxu0 %v3530
        %v3794 = vpop.f32.mrb[0].mxu0
        %v3795 = vadd.f32 %v3620, %v3794
        %v3796 = vpop.f32.mrb[0].mxu0
        %v3797 = vpop.f32.mrb[0].mxu0
        %v3798 = vadd.f32 %v3623, %v3797
        %v3799 = vpop.f32.mrb[0].mxu0
        %3800 = vmatprep.mubr.bf16.mxu0 0
        %3801 = vmatmul.mubr.bf16.gmra.mrb[0].mxu0 %v3532
        %v3802 = vpop.f32.mrb[0].mxu0
        %v3803 = vadd.f32 %v3628, %v3802
        %v3804 = vpop.f32.mrb[0].mxu0
        %v3805 = vpop.f32.mrb[0].mxu0
        %v3806 = vadd.f32 %v3631, %v3805
        %v3807 = vpop.f32.mrb[0].mxu0
        %3808 = vmatprep.mubr.bf16.mxu0 0
        %3809 = vmatmul.mubr.bf16.gmra.mrb[0].mxu0 %v3534
        %v3810 = vpop.f32.mrb[0].mxu0
        %v3811 = vadd.f32 %v3636, %v3810
        %v3812 = vpop.f32.mrb[0].mxu0
        %v3813 = vpop.f32.mrb[0].mxu0
        %v3814 = vadd.f32 %v3639, %v3813
        %v3815 = vpop.f32.mrb[0].mxu0
        %3816 = vmatprep.mubr.bf16.mxu0 0
        %3817 = vmatmul.mubr.bf16.gmra.mrb[0].mxu0 %v3536
        %v3818 = vpop.f32.mrb[0].mxu0
        %v3819 = vadd.f32 %v3644, %v3818
        %v3820 = vpop.f32.mrb[0].mxu0
        %v3821 = vpop.f32.mrb[0].mxu0
        %v3822 = vadd.f32 %v3647, %v3821
        %v3823 = vpop.f32.mrb[0].mxu0
        %3824 = vmatprep.mubr.bf16.mxu0 0
        %3825 = vmatmul.mubr.bf16.gmra.mrb[0].mxu0 %v3538
        %v3826 = vpop.f32.mrb[0].mxu0
        %v3827 = vadd.f32 %v3652, %v3826
        %v3828 = vpop.f32.mrb[0].mxu0
        %v3829 = vpop.f32.mrb[0].mxu0
        %v3830 = vadd.f32 %v3655, %v3829
        %v3831 = vpop.f32.mrb[0].mxu0
        %3832 = vmatprep.mubr.bf16.mxu0 0
        %3833 = vmatmul.mubr.bf16.gmra.mrb[0].mxu0 %v3540
        %v3834 = vpop.f32.mrb[0].mxu0
        %v3835 = vadd.f32 %v3660, %v3834
        %v3836 = vpop.f32.mrb[0].mxu0
        %v3837 = vpop.f32.mrb[0].mxu0
        %v3838 = vadd.f32 %v3663, %v3837
        %v3839 = vpop.f32.mrb[0].mxu0
        %3840 = vmatprep.mubr.bf16.mxu0 0
        %3841 = vmatmul.mubr.bf16.gmra.mrb[0].mxu0 %v3542
        %v3842 = vpop.f32.mrb[0].mxu0
        %v3843 = vadd.f32 %v3668, %v3842
        %v3844 = vpop.f32.mrb[0].mxu0
        %v3845 = vpop.f32.mrb[0].mxu0
        %v3846 = vadd.f32 %v3671, %v3845
        %v3847 = vpop.f32.mrb[0].mxu0
        %3848 = vmatprep.mubr.bf16.mxu0 0
        %3849 = vmatmul.mubr.bf16.gmra.mrb[0].mxu0 %v3544
        %v3850 = vpop.f32.mrb[0].mxu0
        %v3851 = vadd.f32 %v3676, %v3850
        %v3852 = vpop.f32.mrb[0].mxu0
        %v3853 = vpop.f32.mrb[0].mxu0
        %v3854 = vadd.f32 %v3679, %v3853
        %v3855 = vpop.f32.mrb[0].mxu0
        %3856 = vmatprep.mubr.bf16.mxu0 0
        %3857 = vmatmul.mubr.bf16.gmra.mrb[0].mxu0 %v3546
        %v3858 = vpop.f32.mrb[0].mxu0
        %v3859 = vadd.f32 %v3684, %v3858
        %v3860 = vpop.f32.mrb[0].mxu0
        %v3861 = vpop.f32.mrb[0].mxu0
        %v3862 = vadd.f32 %v3687, %v3861
        %v3863 = vpop.f32.mrb[0].mxu0
        %3864 = vmatprep.mubr.bf16.mxu0 0
        %3865 = vmatmul.mubr.bf16.gmra.mrb[0].mxu0 %v3548
        %v3866 = vpop.f32.mrb[0].mxu0
        %v3867 = vadd.f32 %v3692, %v3866
        %v3868 = vpop.f32.mrb[0].mxu0
        %v3869 = vpop.f32.mrb[0].mxu0
        %v3870 = vadd.f32 %v3695, %v3869
        %v3871 = vpop.f32.mrb[0].mxu0
        %3872 = vmatprep.mubr.bf16.mxu0 0
        %3873 = vmatmul.mubr.bf16.gmra.mrb[0].mxu0 %v3550
        %v3874 = vpop.f32.mrb[0].mxu0
        %v3875 = vadd.f32 %v3700, %v3874
        %v3876 = vpop.f32.mrb[0].mxu0
        %v3877 = vpop.f32.mrb[0].mxu0
        %v3878 = vadd.f32 %v3703, %v3877
        %v3879 = vpop.f32.mrb[0].mxu0
        %3880 = vmatprep.mubr.bf16.mxu0 0
        %3881 = vmatmul.mubr.bf16.gmra.mrb[0].mxu0 %v3552
        %v3882 = vpop.f32.mrb[0].mxu0
        %v3883 = vadd.f32 %v3708, %v3882
        %v3884 = vpop.f32.mrb[0].mxu0
        %v3885 = vpop.f32.mrb[0].mxu0
        %v3886 = vadd.f32 %v3711, %v3885
        %v3887 = vpop.f32.mrb[0].mxu0
        %3888 = vmatprep.mubr.bf16.mxu0 0
        %3889 = vmatmul.mubr.bf16.gmra.mrb[0].mxu0 %v3554
        %v3890 = vpop.f32.mrb[0].mxu0
        %v3891 = vadd.f32 %v3716, %v3890
        %v3892 = vpop.f32.mrb[0].mxu0
        %v3893 = vpop.f32.mrb[0].mxu0
        %v3894 = vadd.f32 %v3719, %v3893
        %v3895 = vpop.f32.mrb[0].mxu0
        %3896 = vdwg.mxu0
        %s3897 = scalar_lea.vmem [#allocation11], 24
        %v3898 = vld [vmem:[%s3897] sm:$0xf]
        %v3899 = vld [vmem:[%s3897 + $0x4] sm:$0xf]
        %v3900 = vld [vmem:[%s3897 + $0x8] sm:$0x3]
        %v3904 = vunpack.c.l.b16 %v3898
        %v3905 = vunpack.c.l.b16 %v3899
        %v3906 = vunpack.c.l.b16 %v3900
        %v3907 = vpack.c.b16 %v3905, %v3904
        %v3908 = vpack.c.b16 %v3906, %v3906
        %v3910 = vsel %vm3525, %v3504, 0
        %v3913 = vsel %vm790, %v3908, 0
        %3915 = vmatprep.subr.bf16.mxu0 0
        %3916 = vmatpush1.bf16.msra.mxu0 %v3907
        %3917 = vmatprep.subr.bf16.mxu0 0
        %3918 = vmatpush1.bf16.msra.mxu0 %v3913
        %3919 = vmatprep.subr.bf16.mxu0 0
        %3920 = vmatpush1.bf16.msra.mxu0 0
        %3921 = vmatprep.subr.bf16.mxu0 0
        %3922 = vmatpush1.bf16.msra.mxu0 0
        %3923 = vmatprep.subr.bf16.mxu0 0
        %3924 = vmatpush1.bf16.msra.mxu0 0
        %3925 = vmatprep.subr.bf16.mxu0 0
        %3926 = vmatpush1.bf16.msra.mxu0 0
        %3927 = vmatprep.subr.bf16.mxu0 0
        %3928 = vmatpush1.bf16.msra.mxu0 0
        %3929 = vmatprep.subr.bf16.mxu0 0
        %3930 = vmatpush1.bf16.msra.mxu0 0
        %3931 = vmatprep.subr.bf16.mxu0 0
        %3932 = vmatpush1.bf16.msra.mxu0 0
        %3933 = vmatprep.subr.bf16.mxu0 0
        %3934 = vmatpush1.bf16.msra.mxu0 0
        %3935 = vmatprep.subr.bf16.mxu0 0
        %3936 = vmatpush1.bf16.msra.mxu0 0
        %3937 = vmatprep.subr.bf16.mxu0 0
        %3938 = vmatpush1.bf16.msra.mxu0 0
        %3939 = vmatprep.subr.bf16.mxu0 0
        %3940 = vmatpush1.bf16.msra.mxu0 0
        %3941 = vmatprep.subr.bf16.mxu0 0
        %3942 = vmatpush1.bf16.msra.mxu0 0
        %3943 = vmatprep.subr.bf16.mxu0 0
        %3944 = vmatpush1.bf16.msra.mxu0 0
        %3945 = vmatprep.subr.bf16.mxu0 0
        %3946 = vmatpush1.bf16.msra.mxu0 0
        %3947 = vmatprep.mubr.bf16.mxu0 0
        %3948 = vmatmul.mubr.bf16.gmra.mrb[0].mxu0 %v3528
        %v3949 = vpop.f32.mrb[0].mxu0
        %v3950 = vadd.f32 0.0, %v3949
        %v3951 = vpop.f32.mrb[0].mxu0
        %v3952 = vpop.f32.mrb[0].mxu0
        %v3953 = vadd.f32 0.0, %v3952
        %v3954 = vpop.f32.mrb[0].mxu0
        %3955 = vmatprep.mubr.bf16.mxu0 0
        %3956 = vmatmul.mubr.bf16.gmra.mrb[0].mxu0 %v3530
        %v3957 = vpop.f32.mrb[0].mxu0
        %v3958 = vadd.f32 0.0, %v3957
        %v3959 = vpop.f32.mrb[0].mxu0
        %v3960 = vpop.f32.mrb[0].mxu0
        %v3961 = vadd.f32 0.0, %v3960
        %v3962 = vpop.f32.mrb[0].mxu0
        %3963 = vmatprep.mubr.bf16.mxu0 0
        %3964 = vmatmul.mubr.bf16.gmra.mrb[0].mxu0 %v3532
        %v3965 = vpop.f32.mrb[0].mxu0
        %v3966 = vadd.f32 0.0, %v3965
        %v3967 = vpop.f32.mrb[0].mxu0
        %v3968 = vpop.f32.mrb[0].mxu0
        %v3969 = vadd.f32 0.0, %v3968
        %v3970 = vpop.f32.mrb[0].mxu0
        %3971 = vmatprep.mubr.bf16.mxu0 0
        %3972 = vmatmul.mubr.bf16.gmra.mrb[0].mxu0 %v3534
        %v3973 = vpop.f32.mrb[0].mxu0
        %v3974 = vadd.f32 0.0, %v3973
        %v3975 = vpop.f32.mrb[0].mxu0
        %v3976 = vpop.f32.mrb[0].mxu0
        %v3977 = vadd.f32 0.0, %v3976
        %v3978 = vpop.f32.mrb[0].mxu0
        %3979 = vmatprep.mubr.bf16.mxu0 0
        %3980 = vmatmul.mubr.bf16.gmra.mrb[0].mxu0 %v3536
        %v3981 = vpop.f32.mrb[0].mxu0
        %v3982 = vadd.f32 0.0, %v3981
        %v3983 = vpop.f32.mrb[0].mxu0
        %v3984 = vpop.f32.mrb[0].mxu0
        %v3985 = vadd.f32 0.0, %v3984
        %v3986 = vpop.f32.mrb[0].mxu0
        %3987 = vmatprep.mubr.bf16.mxu0 0
        %3988 = vmatmul.mubr.bf16.gmra.mrb[0].mxu0 %v3538
        %v3989 = vpop.f32.mrb[0].mxu0
        %v3990 = vadd.f32 0.0, %v3989
        %v3991 = vpop.f32.mrb[0].mxu0
        %v3992 = vpop.f32.mrb[0].mxu0
        %v3993 = vadd.f32 0.0, %v3992
        %v3994 = vpop.f32.mrb[0].mxu0
        %3995 = vmatprep.mubr.bf16.mxu0 0
        %3996 = vmatmul.mubr.bf16.gmra.mrb[0].mxu0 %v3540
        %v3997 = vpop.f32.mrb[0].mxu0
        %v3998 = vadd.f32 0.0, %v3997
        %v3999 = vpop.f32.mrb[0].mxu0
        %v4000 = vpop.f32.mrb[0].mxu0
        %v4001 = vadd.f32 0.0, %v4000
        %v4002 = vpop.f32.mrb[0].mxu0
        %4003 = vmatprep.mubr.bf16.mxu0 0
        %4004 = vmatmul.mubr.bf16.gmra.mrb[0].mxu0 %v3542
        %v4005 = vpop.f32.mrb[0].mxu0
        %v4006 = vadd.f32 0.0, %v4005
        %v4007 = vpop.f32.mrb[0].mxu0
        %v4008 = vpop.f32.mrb[0].mxu0
        %v4009 = vadd.f32 0.0, %v4008
        %v4010 = vpop.f32.mrb[0].mxu0
        %4011 = vmatprep.mubr.bf16.mxu0 0
        %4012 = vmatmul.mubr.bf16.gmra.mrb[0].mxu0 %v3544
        %v4013 = vpop.f32.mrb[0].mxu0
        %v4014 = vadd.f32 0.0, %v4013
        %v4015 = vpop.f32.mrb[0].mxu0
        %v4016 = vpop.f32.mrb[0].mxu0
        %v4017 = vadd.f32 0.0, %v4016
        %v4018 = vpop.f32.mrb[0].mxu0
        %4019 = vmatprep.mubr.bf16.mxu0 0
        %4020 = vmatmul.mubr.bf16.gmra.mrb[0].mxu0 %v3546
        %v4021 = vpop.f32.mrb[0].mxu0
        %v4022 = vadd.f32 0.0, %v4021
        %v4023 = vpop.f32.mrb[0].mxu0
        %v4024 = vpop.f32.mrb[0].mxu0
        %v4025 = vadd.f32 0.0, %v4024
        %v4026 = vpop.f32.mrb[0].mxu0
        %4027 = vmatprep.mubr.bf16.mxu0 0
        %4028 = vmatmul.mubr.bf16.gmra.mrb[0].mxu0 %v3548
        %v4029 = vpop.f32.mrb[0].mxu0
        %v4030 = vadd.f32 0.0, %v4029
        %v4031 = vpop.f32.mrb[0].mxu0
        %v4032 = vpop.f32.mrb[0].mxu0
        %v4033 = vadd.f32 0.0, %v4032
        %v4034 = vpop.f32.mrb[0].mxu0
        %4035 = vmatprep.mubr.bf16.mxu0 0
        %4036 = vmatmul.mubr.bf16.gmra.mrb[0].mxu0 %v3550
        %v4037 = vpop.f32.mrb[0].mxu0
        %v4038 = vadd.f32 0.0, %v4037
        %v4039 = vpop.f32.mrb[0].mxu0
        %v4040 = vpop.f32.mrb[0].mxu0
        %v4041 = vadd.f32 0.0, %v4040
        %v4042 = vpop.f32.mrb[0].mxu0
        %4043 = vmatprep.mubr.bf16.mxu0 0
        %4044 = vmatmul.mubr.bf16.gmra.mrb[0].mxu0 %v3552
        %v4045 = vpop.f32.mrb[0].mxu0
        %v4046 = vadd.f32 0.0, %v4045
        %v4047 = vpop.f32.mrb[0].mxu0
        %v4048 = vpop.f32.mrb[0].mxu0
        %v4049 = vadd.f32 0.0, %v4048
        %v4050 = vpop.f32.mrb[0].mxu0
        %4051 = vmatprep.mubr.bf16.mxu0 0
        %4052 = vmatmul.mubr.bf16.gmra.mrb[0].mxu0 %v3554
        %v4053 = vpop.f32.mrb[0].mxu0
        %v4054 = vadd.f32 0.0, %v4053
        %v4055 = vpop.f32.mrb[0].mxu0
        %v4056 = vpop.f32.mrb[0].mxu0
        %v4057 = vadd.f32 0.0, %v4056
        %v4058 = vpop.f32.mrb[0].mxu0
        %4059 = vmatprep.mubr.bf16.mxu0 0
        %4060 = vmatmul.mubr.bf16.gmra.mrb[0].mxu0 %v3556
        %v4061 = vpop.f32.mrb[0].mxu0
        %v4062 = vadd.f32 0.0, %v4061
        %v4063 = vpop.f32.mrb[0].mxu0
        %v4064 = vpop.f32.mrb[0].mxu0
        %v4065 = vadd.f32 0.0, %v4064
        %v4066 = vpop.f32.mrb[0].mxu0
        %4067 = vmatprep.mubr.bf16.mxu0 0
        %4068 = vmatmul.mubr.bf16.gmra.mrb[0].mxu0 %v3910
        %v4069 = vpop.f32.mrb[0].mxu0
        %v4070 = vadd.f32 0.0, %v4069
        %v4071 = vpop.f32.mrb[0].mxu0
        %v4072 = vpop.f32.mrb[0].mxu0
        %v4073 = vadd.f32 0.0, %v4072
        %v4074 = vpop.f32.mrb[0].mxu0
        %4075 = vdwg.mxu0
        %v4076 = vadd.f32 %v3771, %v3950
        %v4077 = vadd.f32 %v3774, %v3953
        %v4078 = vadd.f32 %v3779, %v3958
        %v4079 = vadd.f32 %v3782, %v3961
        %v4080 = vadd.f32 %v3787, %v3966
        %v4081 = vadd.f32 %v3790, %v3969
        %v4082 = vadd.f32 %v3795, %v3974
        %v4083 = vadd.f32 %v3798, %v3977
        %v4084 = vadd.f32 %v3803, %v3982
        %v4085 = vadd.f32 %v3806, %v3985
        %v4086 = vadd.f32 %v3811, %v3990
        %v4087 = vadd.f32 %v3814, %v3993
        %v4088 = vadd.f32 %v3819, %v3998
        %v4089 = vadd.f32 %v3822, %v4001
        %v4090 = vadd.f32 %v3827, %v4006
        %v4091 = vadd.f32 %v3830, %v4009
        %v4092 = vadd.f32 %v3835, %v4014
        %v4093 = vadd.f32 %v3838, %v4017
        %v4094 = vadd.f32 %v3843, %v4022
        %v4095 = vadd.f32 %v3846, %v4025
        %v4096 = vadd.f32 %v3851, %v4030
        %v4097 = vadd.f32 %v3854, %v4033
        %v4098 = vadd.f32 %v3859, %v4038
        %v4099 = vadd.f32 %v3862, %v4041
        %v4100 = vadd.f32 %v3867, %v4046
        %v4101 = vadd.f32 %v3870, %v4049
        %v4102 = vadd.f32 %v3875, %v4054
        %v4103 = vadd.f32 %v3878, %v4057
        %v4104 = vadd.f32 %v3883, %v4062
        %v4105 = vadd.f32 %v3886, %v4065
        %v4106 = vadd.f32 %v3891, %v4070
        %v4107 = vadd.f32 %v3894, %v4073
        %s4108 = scalar_lea.vmem [#allocation11], 36
        %v4109 = vld [vmem:[%s4108] sm:$0xf]
        %v4110 = vld [vmem:[%s4108 + $0x4] sm:$0xf]
        %v4111 = vld [vmem:[%s4108 + $0x8] sm:$0x3]
        %v4115 = vunpack.c.l.b16 %v4109
        %v4116 = vunpack.c.l.b16 %v4110
        %v4117 = vunpack.c.l.b16 %v4111
        %v4118 = vpack.c.b16 %v4116, %v4115
        %v4119 = vpack.c.b16 %v4117, %v4117
        %v4121 = vsel %vm3525, %v3506, 0
        %v4124 = vsel %vm790, %v4119, 0
        %4126 = vmatprep.subr.bf16.mxu0 0
        %4127 = vmatpush1.bf16.msra.mxu0 %v4118
        %4128 = vmatprep.subr.bf16.mxu0 0
        %4129 = vmatpush1.bf16.msra.mxu0 %v4124
        %4130 = vmatprep.subr.bf16.mxu0 0
        %4131 = vmatpush1.bf16.msra.mxu0 0
        %4132 = vmatprep.subr.bf16.mxu0 0
        %4133 = vmatpush1.bf16.msra.mxu0 0
        %4134 = vmatprep.subr.bf16.mxu0 0
        %4135 = vmatpush1.bf16.msra.mxu0 0
        %4136 = vmatprep.subr.bf16.mxu0 0
        %4137 = vmatpush1.bf16.msra.mxu0 0
        %4138 = vmatprep.subr.bf16.mxu0 0
        %4139 = vmatpush1.bf16.msra.mxu0 0
        %4140 = vmatprep.subr.bf16.mxu0 0
        %4141 = vmatpush1.bf16.msra.mxu0 0
        %4142 = vmatprep.subr.bf16.mxu0 0
        %4143 = vmatpush1.bf16.msra.mxu0 0
        %4144 = vmatprep.subr.bf16.mxu0 0
        %4145 = vmatpush1.bf16.msra.mxu0 0
        %4146 = vmatprep.subr.bf16.mxu0 0
        %4147 = vmatpush1.bf16.msra.mxu0 0
        %4148 = vmatprep.subr.bf16.mxu0 0
        %4149 = vmatpush1.bf16.msra.mxu0 0
        %4150 = vmatprep.subr.bf16.mxu0 0
        %4151 = vmatpush1.bf16.msra.mxu0 0
        %4152 = vmatprep.subr.bf16.mxu0 0
        %4153 = vmatpush1.bf16.msra.mxu0 0
        %4154 = vmatprep.subr.bf16.mxu0 0
        %4155 = vmatpush1.bf16.msra.mxu0 0
        %4156 = vmatprep.subr.bf16.mxu0 0
        %4157 = vmatpush1.bf16.msra.mxu0 0
        %4158 = vmatprep.mubr.bf16.mxu0 0
        %4159 = vmatmul.mubr.bf16.gmra.mrb[0].mxu0 %v3530
        %v4160 = vpop.f32.mrb[0].mxu0
        %v4161 = vadd.f32 0.0, %v4160
        %v4162 = vpop.f32.mrb[0].mxu0
        %v4163 = vpop.f32.mrb[0].mxu0
        %v4164 = vadd.f32 0.0, %v4163
        %v4165 = vpop.f32.mrb[0].mxu0
        %4166 = vmatprep.mubr.bf16.mxu0 0
        %4167 = vmatmul.mubr.bf16.gmra.mrb[0].mxu0 %v3532
        %v4168 = vpop.f32.mrb[0].mxu0
        %v4169 = vadd.f32 0.0, %v4168
        %v4170 = vpop.f32.mrb[0].mxu0
        %v4171 = vpop.f32.mrb[0].mxu0
        %v4172 = vadd.f32 0.0, %v4171
        %v4173 = vpop.f32.mrb[0].mxu0
        %4174 = vmatprep.mubr.bf16.mxu0 0
        %4175 = vmatmul.mubr.bf16.gmra.mrb[0].mxu0 %v3534
        %v4176 = vpop.f32.mrb[0].mxu0
        %v4177 = vadd.f32 0.0, %v4176
        %v4178 = vpop.f32.mrb[0].mxu0
        %v4179 = vpop.f32.mrb[0].mxu0
        %v4180 = vadd.f32 0.0, %v4179
        %v4181 = vpop.f32.mrb[0].mxu0
        %4182 = vmatprep.mubr.bf16.mxu0 0
        %4183 = vmatmul.mubr.bf16.gmra.mrb[0].mxu0 %v3536
        %v4184 = vpop.f32.mrb[0].mxu0
        %v4185 = vadd.f32 0.0, %v4184
        %v4186 = vpop.f32.mrb[0].mxu0
        %v4187 = vpop.f32.mrb[0].mxu0
        %v4188 = vadd.f32 0.0, %v4187
        %v4189 = vpop.f32.mrb[0].mxu0
        %4190 = vmatprep.mubr.bf16.mxu0 0
        %4191 = vmatmul.mubr.bf16.gmra.mrb[0].mxu0 %v3538
        %v4192 = vpop.f32.mrb[0].mxu0
        %v4193 = vadd.f32 0.0, %v4192
        %v4194 = vpop.f32.mrb[0].mxu0
        %v4195 = vpop.f32.mrb[0].mxu0
        %v4196 = vadd.f32 0.0, %v4195
        %v4197 = vpop.f32.mrb[0].mxu0
        %4198 = vmatprep.mubr.bf16.mxu0 0
        %4199 = vmatmul.mubr.bf16.gmra.mrb[0].mxu0 %v3540
        %v4200 = vpop.f32.mrb[0].mxu0
        %v4201 = vadd.f32 0.0, %v4200
        %v4202 = vpop.f32.mrb[0].mxu0
        %v4203 = vpop.f32.mrb[0].mxu0
        %v4204 = vadd.f32 0.0, %v4203
        %v4205 = vpop.f32.mrb[0].mxu0
        %4206 = vmatprep.mubr.bf16.mxu0 0
        %4207 = vmatmul.mubr.bf16.gmra.mrb[0].mxu0 %v3542
        %v4208 = vpop.f32.mrb[0].mxu0
        %v4209 = vadd.f32 0.0, %v4208
        %v4210 = vpop.f32.mrb[0].mxu0
        %v4211 = vpop.f32.mrb[0].mxu0
        %v4212 = vadd.f32 0.0, %v4211
        %v4213 = vpop.f32.mrb[0].mxu0
        %4214 = vmatprep.mubr.bf16.mxu0 0
        %4215 = vmatmul.mubr.bf16.gmra.mrb[0].mxu0 %v3544
        %v4216 = vpop.f32.mrb[0].mxu0
        %v4217 = vadd.f32 0.0, %v4216
        %v4218 = vpop.f32.mrb[0].mxu0
        %v4219 = vpop.f32.mrb[0].mxu0
        %v4220 = vadd.f32 0.0, %v4219
        %v4221 = vpop.f32.mrb[0].mxu0
        %4222 = vmatprep.mubr.bf16.mxu0 0
        %4223 = vmatmul.mubr.bf16.gmra.mrb[0].mxu0 %v3546
        %v4224 = vpop.f32.mrb[0].mxu0
        %v4225 = vadd.f32 0.0, %v4224
        %v4226 = vpop.f32.mrb[0].mxu0
        %v4227 = vpop.f32.mrb[0].mxu0
        %v4228 = vadd.f32 0.0, %v4227
        %v4229 = vpop.f32.mrb[0].mxu0
        %4230 = vmatprep.mubr.bf16.mxu0 0
        %4231 = vmatmul.mubr.bf16.gmra.mrb[0].mxu0 %v3548
        %v4232 = vpop.f32.mrb[0].mxu0
        %v4233 = vadd.f32 0.0, %v4232
        %v4234 = vpop.f32.mrb[0].mxu0
        %v4235 = vpop.f32.mrb[0].mxu0
        %v4236 = vadd.f32 0.0, %v4235
        %v4237 = vpop.f32.mrb[0].mxu0
        %4238 = vmatprep.mubr.bf16.mxu0 0
        %4239 = vmatmul.mubr.bf16.gmra.mrb[0].mxu0 %v3550
        %v4240 = vpop.f32.mrb[0].mxu0
        %v4241 = vadd.f32 0.0, %v4240
        %v4242 = vpop.f32.mrb[0].mxu0
        %v4243 = vpop.f32.mrb[0].mxu0
        %v4244 = vadd.f32 0.0, %v4243
        %v4245 = vpop.f32.mrb[0].mxu0
        %4246 = vmatprep.mubr.bf16.mxu0 0
        %4247 = vmatmul.mubr.bf16.gmra.mrb[0].mxu0 %v3552
        %v4248 = vpop.f32.mrb[0].mxu0
        %v4249 = vadd.f32 0.0, %v4248
        %v4250 = vpop.f32.mrb[0].mxu0
        %v4251 = vpop.f32.mrb[0].mxu0
        %v4252 = vadd.f32 0.0, %v4251
        %v4253 = vpop.f32.mrb[0].mxu0
        %4254 = vmatprep.mubr.bf16.mxu0 0
        %4255 = vmatmul.mubr.bf16.gmra.mrb[0].mxu0 %v3554
        %v4256 = vpop.f32.mrb[0].mxu0
        %v4257 = vadd.f32 0.0, %v4256
        %v4258 = vpop.f32.mrb[0].mxu0
        %v4259 = vpop.f32.mrb[0].mxu0
        %v4260 = vadd.f32 0.0, %v4259
        %v4261 = vpop.f32.mrb[0].mxu0
        %4262 = vmatprep.mubr.bf16.mxu0 0
        %4263 = vmatmul.mubr.bf16.gmra.mrb[0].mxu0 %v3556
        %v4264 = vpop.f32.mrb[0].mxu0
        %v4265 = vadd.f32 0.0, %v4264
        %v4266 = vpop.f32.mrb[0].mxu0
        %v4267 = vpop.f32.mrb[0].mxu0
        %v4268 = vadd.f32 0.0, %v4267
        %v4269 = vpop.f32.mrb[0].mxu0
        %4270 = vmatprep.mubr.bf16.mxu0 0
        %4271 = vmatmul.mubr.bf16.gmra.mrb[0].mxu0 %v3910
        %v4272 = vpop.f32.mrb[0].mxu0
        %v4273 = vadd.f32 0.0, %v4272
        %v4274 = vpop.f32.mrb[0].mxu0
        %v4275 = vpop.f32.mrb[0].mxu0
        %v4276 = vadd.f32 0.0, %v4275
        %v4277 = vpop.f32.mrb[0].mxu0
        %4278 = vmatprep.mubr.bf16.mxu0 0
        %4279 = vmatmul.mubr.bf16.gmra.mrb[0].mxu0 %v4121
        %v4280 = vpop.f32.mrb[0].mxu0
        %v4281 = vadd.f32 0.0, %v4280
        %v4282 = vpop.f32.mrb[0].mxu0
        %v4283 = vpop.f32.mrb[0].mxu0
        %v4284 = vadd.f32 0.0, %v4283
        %v4285 = vpop.f32.mrb[0].mxu0
        %4286 = vdwg.mxu0
        %v4287 = vadd.f32 %v4076, %v4161
        %v4288 = vadd.f32 %v4077, %v4164
        %v4289 = vadd.f32 %v4078, %v4169
        %v4290 = vadd.f32 %v4079, %v4172
        %v4291 = vadd.f32 %v4080, %v4177
        %v4292 = vadd.f32 %v4081, %v4180
        %v4293 = vadd.f32 %v4082, %v4185
        %v4294 = vadd.f32 %v4083, %v4188
        %v4295 = vadd.f32 %v4084, %v4193
        %v4296 = vadd.f32 %v4085, %v4196
        %v4297 = vadd.f32 %v4086, %v4201
        %v4298 = vadd.f32 %v4087, %v4204
        %v4299 = vadd.f32 %v4088, %v4209
        %v4300 = vadd.f32 %v4089, %v4212
        %v4301 = vadd.f32 %v4090, %v4217
        %v4302 = vadd.f32 %v4091, %v4220
        %v4303 = vadd.f32 %v4092, %v4225
        %v4304 = vadd.f32 %v4093, %v4228
        %v4305 = vadd.f32 %v4094, %v4233
        %v4306 = vadd.f32 %v4095, %v4236
        %v4307 = vadd.f32 %v4096, %v4241
        %v4308 = vadd.f32 %v4097, %v4244
        %v4309 = vadd.f32 %v4098, %v4249
        %v4310 = vadd.f32 %v4099, %v4252
        %v4311 = vadd.f32 %v4100, %v4257
        %v4312 = vadd.f32 %v4101, %v4260
        %v4313 = vadd.f32 %v4102, %v4265
        %v4314 = vadd.f32 %v4103, %v4268
        %v4315 = vadd.f32 %v4104, %v4273
        %v4316 = vadd.f32 %v4105, %v4276
        %v4317 = vadd.f32 %v4106, %v4281
        %v4318 = vadd.f32 %v4107, %v4284
        %s4319 = scalar_lea.vmem [#allocation11], 48
        %v4320 = vld [vmem:[%s4319] sm:$0xf]
        %v4321 = vld [vmem:[%s4319 + $0x4] sm:$0xf]
        %v4322 = vld [vmem:[%s4319 + $0x8] sm:$0x3]
        %v4326 = vunpack.c.l.b16 %v4320
        %v4327 = vunpack.c.l.b16 %v4321
        %v4328 = vunpack.c.l.b16 %v4322
        %v4329 = vpack.c.b16 %v4327, %v4326
        %v4330 = vpack.c.b16 %v4328, %v4328
        %v4332 = vsel %vm3525, %v3508, 0
        %v4335 = vsel %vm790, %v4330, 0
        %4337 = vmatprep.subr.bf16.mxu0 0
        %4338 = vmatpush1.bf16.msra.mxu0 %v4329
        %4339 = vmatprep.subr.bf16.mxu0 0
        %4340 = vmatpush1.bf16.msra.mxu0 %v4335
        %4341 = vmatprep.subr.bf16.mxu0 0
        %4342 = vmatpush1.bf16.msra.mxu0 0
        %4343 = vmatprep.subr.bf16.mxu0 0
        %4344 = vmatpush1.bf16.msra.mxu0 0
        %4345 = vmatprep.subr.bf16.mxu0 0
        %4346 = vmatpush1.bf16.msra.mxu0 0
        %4347 = vmatprep.subr.bf16.mxu0 0
        %4348 = vmatpush1.bf16.msra.mxu0 0
        %4349 = vmatprep.subr.bf16.mxu0 0
        %4350 = vmatpush1.bf16.msra.mxu0 0
        %4351 = vmatprep.subr.bf16.mxu0 0
        %4352 = vmatpush1.bf16.msra.mxu0 0
        %4353 = vmatprep.subr.bf16.mxu0 0
        %4354 = vmatpush1.bf16.msra.mxu0 0
        %4355 = vmatprep.subr.bf16.mxu0 0
        %4356 = vmatpush1.bf16.msra.mxu0 0
        %4357 = vmatprep.subr.bf16.mxu0 0
        %4358 = vmatpush1.bf16.msra.mxu0 0
        %4359 = vmatprep.subr.bf16.mxu0 0
        %4360 = vmatpush1.bf16.msra.mxu0 0
        %4361 = vmatprep.subr.bf16.mxu0 0
        %4362 = vmatpush1.bf16.msra.mxu0 0
        %4363 = vmatprep.subr.bf16.mxu0 0
        %4364 = vmatpush1.bf16.msra.mxu0 0
        %4365 = vmatprep.subr.bf16.mxu0 0
        %4366 = vmatpush1.bf16.msra.mxu0 0
        %4367 = vmatprep.subr.bf16.mxu0 0
        %4368 = vmatpush1.bf16.msra.mxu0 0
        %4369 = vmatprep.mubr.bf16.mxu0 0
        %4370 = vmatmul.mubr.bf16.gmra.mrb[0].mxu0 %v3532
        %v4371 = vpop.f32.mrb[0].mxu0
        %v4372 = vadd.f32 0.0, %v4371
        %v4373 = vpop.f32.mrb[0].mxu0
        %v4374 = vpop.f32.mrb[0].mxu0
        %v4375 = vadd.f32 0.0, %v4374
        %v4376 = vpop.f32.mrb[0].mxu0
        %4377 = vmatprep.mubr.bf16.mxu0 0
        %4378 = vmatmul.mubr.bf16.gmra.mrb[0].mxu0 %v3534
        %v4379 = vpop.f32.mrb[0].mxu0
        %v4380 = vadd.f32 0.0, %v4379
        %v4381 = vpop.f32.mrb[0].mxu0
        %v4382 = vpop.f32.mrb[0].mxu0
        %v4383 = vadd.f32 0.0, %v4382
        %v4384 = vpop.f32.mrb[0].mxu0
        %4385 = vmatprep.mubr.bf16.mxu0 0
        %4386 = vmatmul.mubr.bf16.gmra.mrb[0].mxu0 %v3536
        %v4387 = vpop.f32.mrb[0].mxu0
        %v4388 = vadd.f32 0.0, %v4387
        %v4389 = vpop.f32.mrb[0].mxu0
        %v4390 = vpop.f32.mrb[0].mxu0
        %v4391 = vadd.f32 0.0, %v4390
        %v4392 = vpop.f32.mrb[0].mxu0
        %4393 = vmatprep.mubr.bf16.mxu0 0
        %4394 = vmatmul.mubr.bf16.gmra.mrb[0].mxu0 %v3538
        %v4395 = vpop.f32.mrb[0].mxu0
        %v4396 = vadd.f32 0.0, %v4395
        %v4397 = vpop.f32.mrb[0].mxu0
        %v4398 = vpop.f32.mrb[0].mxu0
        %v4399 = vadd.f32 0.0, %v4398
        %v4400 = vpop.f32.mrb[0].mxu0
        %4401 = vmatprep.mubr.bf16.mxu0 0
        %4402 = vmatmul.mubr.bf16.gmra.mrb[0].mxu0 %v3540
        %v4403 = vpop.f32.mrb[0].mxu0
        %v4404 = vadd.f32 0.0, %v4403
        %v4405 = vpop.f32.mrb[0].mxu0
        %v4406 = vpop.f32.mrb[0].mxu0
        %v4407 = vadd.f32 0.0, %v4406
        %v4408 = vpop.f32.mrb[0].mxu0
        %4409 = vmatprep.mubr.bf16.mxu0 0
        %4410 = vmatmul.mubr.bf16.gmra.mrb[0].mxu0 %v3542
        %v4411 = vpop.f32.mrb[0].mxu0
        %v4412 = vadd.f32 0.0, %v4411
        %v4413 = vpop.f32.mrb[0].mxu0
        %v4414 = vpop.f32.mrb[0].mxu0
        %v4415 = vadd.f32 0.0, %v4414
        %v4416 = vpop.f32.mrb[0].mxu0
        %4417 = vmatprep.mubr.bf16.mxu0 0
        %4418 = vmatmul.mubr.bf16.gmra.mrb[0].mxu0 %v3544
        %v4419 = vpop.f32.mrb[0].mxu0
        %v4420 = vadd.f32 0.0, %v4419
        %v4421 = vpop.f32.mrb[0].mxu0
        %v4422 = vpop.f32.mrb[0].mxu0
        %v4423 = vadd.f32 0.0, %v4422
        %v4424 = vpop.f32.mrb[0].mxu0
        %4425 = vmatprep.mubr.bf16.mxu0 0
        %4426 = vmatmul.mubr.bf16.gmra.mrb[0].mxu0 %v3546
        %v4427 = vpop.f32.mrb[0].mxu0
        %v4428 = vadd.f32 0.0, %v4427
        %v4429 = vpop.f32.mrb[0].mxu0
        %v4430 = vpop.f32.mrb[0].mxu0
        %v4431 = vadd.f32 0.0, %v4430
        %v4432 = vpop.f32.mrb[0].mxu0
        %4433 = vmatprep.mubr.bf16.mxu0 0
        %4434 = vmatmul.mubr.bf16.gmra.mrb[0].mxu0 %v3548
        %v4435 = vpop.f32.mrb[0].mxu0
        %v4436 = vadd.f32 0.0, %v4435
        %v4437 = vpop.f32.mrb[0].mxu0
        %v4438 = vpop.f32.mrb[0].mxu0
        %v4439 = vadd.f32 0.0, %v4438
        %v4440 = vpop.f32.mrb[0].mxu0
        %4441 = vmatprep.mubr.bf16.mxu0 0
        %4442 = vmatmul.mubr.bf16.gmra.mrb[0].mxu0 %v3550
        %v4443 = vpop.f32.mrb[0].mxu0
        %v4444 = vadd.f32 0.0, %v4443
        %v4445 = vpop.f32.mrb[0].mxu0
        %v4446 = vpop.f32.mrb[0].mxu0
        %v4447 = vadd.f32 0.0, %v4446
        %v4448 = vpop.f32.mrb[0].mxu0
        %4449 = vmatprep.mubr.bf16.mxu0 0
        %4450 = vmatmul.mubr.bf16.gmra.mrb[0].mxu0 %v3552
        %v4451 = vpop.f32.mrb[0].mxu0
        %v4452 = vadd.f32 0.0, %v4451
        %v4453 = vpop.f32.mrb[0].mxu0
        %v4454 = vpop.f32.mrb[0].mxu0
        %v4455 = vadd.f32 0.0, %v4454
        %v4456 = vpop.f32.mrb[0].mxu0
        %4457 = vmatprep.mubr.bf16.mxu0 0
        %4458 = vmatmul.mubr.bf16.gmra.mrb[0].mxu0 %v3554
        %v4459 = vpop.f32.mrb[0].mxu0
        %v4460 = vadd.f32 0.0, %v4459
        %v4461 = vpop.f32.mrb[0].mxu0
        %v4462 = vpop.f32.mrb[0].mxu0
        %v4463 = vadd.f32 0.0, %v4462
        %v4464 = vpop.f32.mrb[0].mxu0
        %4465 = vmatprep.mubr.bf16.mxu0 0
        %4466 = vmatmul.mubr.bf16.gmra.mrb[0].mxu0 %v3556
        %v4467 = vpop.f32.mrb[0].mxu0
        %v4468 = vadd.f32 0.0, %v4467
        %v4469 = vpop.f32.mrb[0].mxu0
        %v4470 = vpop.f32.mrb[0].mxu0
        %v4471 = vadd.f32 0.0, %v4470
        %v4472 = vpop.f32.mrb[0].mxu0
        %4473 = vmatprep.mubr.bf16.mxu0 0
        %4474 = vmatmul.mubr.bf16.gmra.mrb[0].mxu0 %v3910
        %v4475 = vpop.f32.mrb[0].mxu0
        %v4476 = vadd.f32 0.0, %v4475
        %v4477 = vpop.f32.mrb[0].mxu0
        %v4478 = vpop.f32.mrb[0].mxu0
        %v4479 = vadd.f32 0.0, %v4478
        %v4480 = vpop.f32.mrb[0].mxu0
        %4481 = vmatprep.mubr.bf16.mxu0 0
        %4482 = vmatmul.mubr.bf16.gmra.mrb[0].mxu0 %v4121
        %v4483 = vpop.f32.mrb[0].mxu0
        %v4484 = vadd.f32 0.0, %v4483
        %v4485 = vpop.f32.mrb[0].mxu0
        %v4486 = vpop.f32.mrb[0].mxu0
        %v4487 = vadd.f32 0.0, %v4486
        %v4488 = vpop.f32.mrb[0].mxu0
        %4489 = vmatprep.mubr.bf16.mxu0 0
        %4490 = vmatmul.mubr.bf16.gmra.mrb[0].mxu0 %v4332
        %v4491 = vpop.f32.mrb[0].mxu0
        %v4492 = vadd.f32 0.0, %v4491
        %v4493 = vpop.f32.mrb[0].mxu0
        %v4494 = vpop.f32.mrb[0].mxu0
        %v4495 = vadd.f32 0.0, %v4494
        %v4496 = vpop.f32.mrb[0].mxu0
        %4497 = vdwg.mxu0
        %v4498 = vadd.f32 %v4287, %v4372
        %v4499 = vadd.f32 %v4288, %v4375
        %v4500 = vadd.f32 %v4289, %v4380
        %v4501 = vadd.f32 %v4290, %v4383
        %v4502 = vadd.f32 %v4291, %v4388
        %v4503 = vadd.f32 %v4292, %v4391
        %v4504 = vadd.f32 %v4293, %v4396
        %v4505 = vadd.f32 %v4294, %v4399
        %v4506 = vadd.f32 %v4295, %v4404
        %v4507 = vadd.f32 %v4296, %v4407
        %v4508 = vadd.f32 %v4297, %v4412
        %v4509 = vadd.f32 %v4298, %v4415
        %v4510 = vadd.f32 %v4299, %v4420
        %v4511 = vadd.f32 %v4300, %v4423
        %v4512 = vadd.f32 %v4301, %v4428
        %v4513 = vadd.f32 %v4302, %v4431
        %v4514 = vadd.f32 %v4303, %v4436
        %v4515 = vadd.f32 %v4304, %v4439
        %v4516 = vadd.f32 %v4305, %v4444
        %v4517 = vadd.f32 %v4306, %v4447
        %v4518 = vadd.f32 %v4307, %v4452
        %v4519 = vadd.f32 %v4308, %v4455
        %v4520 = vadd.f32 %v4309, %v4460
        %v4521 = vadd.f32 %v4310, %v4463
        %v4522 = vadd.f32 %v4311, %v4468
        %v4523 = vadd.f32 %v4312, %v4471
        %v4524 = vadd.f32 %v4313, %v4476
        %v4525 = vadd.f32 %v4314, %v4479
        %v4526 = vadd.f32 %v4315, %v4484
        %v4527 = vadd.f32 %v4316, %v4487
        %v4528 = vadd.f32 %v4317, %v4492
        %v4529 = vadd.f32 %v4318, %v4495
        %v4530 = vld [vmem:[#allocation13] sm:$0x1]
        %v4532 = vlaneseq
        %v4533 = vshrl.u32 %v4532, 7
        %v4534 = vsub.s32 0, %v4533
        %v4535 = vrot.slane %v4530, %v4534
        %v4537 = vadd.f32 %v4498, %v4535
        %v4538 = vadd.f32 %v4499, %v4535
        %v4539 = vadd.f32 %v4500, %v4535
        %v4540 = vadd.f32 %v4501, %v4535
        %v4541 = vadd.f32 %v4502, %v4535
        %v4542 = vadd.f32 %v4503, %v4535
        %v4543 = vadd.f32 %v4504, %v4535
        %v4544 = vadd.f32 %v4505, %v4535
        %v4545 = vadd.f32 %v4506, %v4535
        %v4546 = vadd.f32 %v4507, %v4535
        %v4547 = vadd.f32 %v4508, %v4535
        %v4548 = vadd.f32 %v4509, %v4535
        %v4549 = vadd.f32 %v4510, %v4535
        %v4550 = vadd.f32 %v4511, %v4535
        %v4551 = vadd.f32 %v4512, %v4535
        %v4552 = vadd.f32 %v4513, %v4535
        %v4553 = vadd.f32 %v4514, %v4535
        %v4554 = vadd.f32 %v4515, %v4535
        %v4555 = vadd.f32 %v4516, %v4535
        %v4556 = vadd.f32 %v4517, %v4535
        %v4557 = vadd.f32 %v4518, %v4535
        %v4558 = vadd.f32 %v4519, %v4535
        %v4559 = vadd.f32 %v4520, %v4535
        %v4560 = vadd.f32 %v4521, %v4535
        %v4561 = vadd.f32 %v4522, %v4535
        %v4562 = vadd.f32 %v4523, %v4535
        %v4563 = vadd.f32 %v4524, %v4535
        %v4564 = vadd.f32 %v4525, %v4535
        %v4565 = vadd.f32 %v4526, %v4535
        %v4566 = vadd.f32 %v4527, %v4535
        %v4567 = vadd.f32 %v4528, %v4535
        %v4568 = vadd.f32 %v4529, %v4535
        %v4569 = vmax.f32 %v4537, 0.0
        %v4570 = vmax.f32 %v4538, 0.0
        %v4571 = vmax.f32 %v4539, 0.0
        %v4572 = vmax.f32 %v4540, 0.0
        %v4573 = vmax.f32 %v4541, 0.0
        %v4574 = vmax.f32 %v4542, 0.0
        %v4575 = vmax.f32 %v4543, 0.0
        %v4576 = vmax.f32 %v4544, 0.0
        %v4577 = vmax.f32 %v4545, 0.0
        %v4578 = vmax.f32 %v4546, 0.0
        %v4579 = vmax.f32 %v4547, 0.0
        %v4580 = vmax.f32 %v4548, 0.0
        %v4581 = vmax.f32 %v4549, 0.0
        %v4582 = vmax.f32 %v4550, 0.0
        %v4583 = vmax.f32 %v4551, 0.0
        %v4584 = vmax.f32 %v4552, 0.0
        %v4585 = vmax.f32 %v4553, 0.0
        %v4586 = vmax.f32 %v4554, 0.0
        %v4587 = vmax.f32 %v4555, 0.0
        %v4588 = vmax.f32 %v4556, 0.0
        %v4589 = vmax.f32 %v4557, 0.0
        %v4590 = vmax.f32 %v4558, 0.0
        %v4591 = vmax.f32 %v4559, 0.0
        %v4592 = vmax.f32 %v4560, 0.0
        %v4593 = vmax.f32 %v4561, 0.0
        %v4594 = vmax.f32 %v4562, 0.0
        %v4595 = vmax.f32 %v4563, 0.0
        %v4596 = vmax.f32 %v4564, 0.0
        %v4597 = vmax.f32 %v4565, 0.0
        %v4598 = vmax.f32 %v4566, 0.0
        %v4599 = vmax.f32 %v4567, 0.0
        %v4600 = vmax.f32 %v4568, 0.0
        %v4601 = vsel %vm1340, %v462, 4286644096
        %v4602 = vsel %vm1341, %v463, 4286644096
        %v4603 = vsel %vm1342, %v464, 4286644096
        %v4604 = vsel %vm1343, %v465, 4286644096
        %v4605 = vsel %vm1344, %v466, 4286644096
        %v4606 = vsel %vm1345, %v467, 4286644096
        %v4607 = vsel %vm1343, %v468, 4286644096
        %v4608 = vsel %vm1344, %v469, 4286644096
        %v4609 = vsel %vm1345, %v470, 4286644096
        %v4610 = vsel %vm1343, %v471, 4286644096
        %v4611 = vsel %vm1344, %v472, 4286644096
        %v4612 = vsel %vm1345, %v473, 4286644096
        %v4613 = vsel %vm1343, %v474, 4286644096
        %v4614 = vsel %vm1344, %v475, 4286644096
        %v4615 = vsel %vm1345, %v476, 4286644096
        %v4616 = vsel %vm1343, %v477, 4286644096
        %v4617 = vsel %vm1344, %v478, 4286644096
        %v4618 = vsel %vm1345, %v479, 4286644096
        %v4619 = vsel %vm1343, %v480, 4286644096
        %v4620 = vsel %vm1344, %v481, 4286644096
        %v4621 = vsel %vm1345, %v482, 4286644096
        %v4622 = vsel %vm1343, %v483, 4286644096
        %v4623 = vsel %vm1344, %v484, 4286644096
        %v4624 = vsel %vm1345, %v485, 4286644096
        %v4625 = vsel %vm1343, %v486, 4286644096
        %v4626 = vsel %vm1344, %v487, 4286644096
        %v4627 = vsel %vm1345, %v488, 4286644096
        %v4628 = vsel %vm1343, %v489, 4286644096
        %v4629 = vsel %vm1344, %v490, 4286644096
        %v4630 = vsel %vm1345, %v491, 4286644096
        %v4631 = vsel %vm1343, %v492, 4286644096
        %v4632 = vsel %vm1344, %v493, 4286644096
        %v4633 = vsel %vm1345, %v494, 4286644096
        %v4634 = vsel %vm1343, %v495, 4286644096
        %v4635 = vsel %vm1344, %v496, 4286644096
        %v4636 = vsel %vm1345, %v497, 4286644096
        %v4637 = vsel %vm1343, %v498, 4286644096
        %v4638 = vsel %vm1344, %v499, 4286644096
        %v4639 = vsel %vm1345, %v500, 4286644096
        %v4640 = vsel %vm1343, %v501, 4286644096
        %v4641 = vsel %vm1344, %v502, 4286644096
        %v4642 = vsel %vm1345, %v503, 4286644096
        %v4643 = vsel %vm1343, %v504, 4286644096
        %v4644 = vsel %vm1344, %v505, 4286644096
        %v4645 = vsel %vm1345, %v506, 4286644096
        %v4646 = vsel %vm1343, %v507, 4286644096
        %v4647 = vsel %vm1344, %v508, 4286644096
        %v4648 = vsel %vm1345, %v509, 4286644096
        %v4649 = vsel %vm1343, %v510, 4286644096
        %v4650 = vsel %vm1344, %v511, 4286644096
        %v4651 = vsel %vm1345, %v512, 4286644096
        %v4652 = vsel %vm1340, %v513, 4286644096
        %v4653 = vsel %vm1341, %v514, 4286644096
        %v4654 = vsel %vm1342, %v515, 4286644096
        %v4655 = vmax.bf16 %v4601, %v4604
        %v4656 = vmax.bf16 %v4602, %v4605
        %v4657 = vmax.bf16 %v4603, %v4606
        %v4658 = vmax.bf16 %v4604, %v4607
        %v4659 = vmax.bf16 %v4605, %v4608
        %v4660 = vmax.bf16 %v4606, %v4609
        %v4661 = vmax.bf16 %v4607, %v4610
        %v4662 = vmax.bf16 %v4608, %v4611
        %v4663 = vmax.bf16 %v4609, %v4612
        %v4664 = vmax.bf16 %v4610, %v4613
        %v4665 = vmax.bf16 %v4611, %v4614
        %v4666 = vmax.bf16 %v4612, %v4615
        %v4667 = vmax.bf16 %v4613, %v4616
        %v4668 = vmax.bf16 %v4614, %v4617
        %v4669 = vmax.bf16 %v4615, %v4618
        %v4670 = vmax.bf16 %v4616, %v4619
        %v4671 = vmax.bf16 %v4617, %v4620
        %v4672 = vmax.bf16 %v4618, %v4621
        %v4673 = vmax.bf16 %v4619, %v4622
        %v4674 = vmax.bf16 %v4620, %v4623
        %v4675 = vmax.bf16 %v4621, %v4624
        %v4676 = vmax.bf16 %v4622, %v4625
        %v4677 = vmax.bf16 %v4623, %v4626
        %v4678 = vmax.bf16 %v4624, %v4627
        %v4679 = vmax.bf16 %v4625, %v4628
        %v4680 = vmax.bf16 %v4626, %v4629
        %v4681 = vmax.bf16 %v4627, %v4630
        %v4682 = vmax.bf16 %v4628, %v4631
        %v4683 = vmax.bf16 %v4629, %v4632
        %v4684 = vmax.bf16 %v4630, %v4633
        %v4685 = vmax.bf16 %v4631, %v4634
        %v4686 = vmax.bf16 %v4632, %v4635
        %v4687 = vmax.bf16 %v4633, %v4636
        %v4688 = vmax.bf16 %v4634, %v4637
        %v4689 = vmax.bf16 %v4635, %v4638
        %v4690 = vmax.bf16 %v4636, %v4639
        %v4691 = vmax.bf16 %v4637, %v4640
        %v4692 = vmax.bf16 %v4638, %v4641
        %v4693 = vmax.bf16 %v4639, %v4642
        %v4694 = vmax.bf16 %v4640, %v4643
        %v4695 = vmax.bf16 %v4641, %v4644
        %v4696 = vmax.bf16 %v4642, %v4645
        %v4697 = vmax.bf16 %v4643, %v4646
        %v4698 = vmax.bf16 %v4644, %v4647
        %v4699 = vmax.bf16 %v4645, %v4648
        %v4700 = vmax.bf16 %v4646, %v4649
        %v4701 = vmax.bf16 %v4647, %v4650
        %v4702 = vmax.bf16 %v4648, %v4651
        %v4703 = vmax.bf16 %v4655, %v4607
        %v4704 = vmax.bf16 %v4656, %v4608
        %v4705 = vmax.bf16 %v4657, %v4609
        %v4706 = vmax.bf16 %v4658, %v4610
        %v4707 = vmax.bf16 %v4659, %v4611
        %v4708 = vmax.bf16 %v4660, %v4612
        %v4709 = vmax.bf16 %v4661, %v4613
        %v4710 = vmax.bf16 %v4662, %v4614
        %v4711 = vmax.bf16 %v4663, %v4615
        %v4712 = vmax.bf16 %v4664, %v4616
        %v4713 = vmax.bf16 %v4665, %v4617
        %v4714 = vmax.bf16 %v4666, %v4618
        %v4715 = vmax.bf16 %v4667, %v4619
        %v4716 = vmax.bf16 %v4668, %v4620
        %v4717 = vmax.bf16 %v4669, %v4621
        %v4718 = vmax.bf16 %v4670, %v4622
        %v4719 = vmax.bf16 %v4671, %v4623
        %v4720 = vmax.bf16 %v4672, %v4624
        %v4721 = vmax.bf16 %v4673, %v4625
        %v4722 = vmax.bf16 %v4674, %v4626
        %v4723 = vmax.bf16 %v4675, %v4627
        %v4724 = vmax.bf16 %v4676, %v4628
        %v4725 = vmax.bf16 %v4677, %v4629
        %v4726 = vmax.bf16 %v4678, %v4630
        %v4727 = vmax.bf16 %v4679, %v4631
        %v4728 = vmax.bf16 %v4680, %v4632
        %v4729 = vmax.bf16 %v4681, %v4633
        %v4730 = vmax.bf16 %v4682, %v4634
        %v4731 = vmax.bf16 %v4683, %v4635
        %v4732 = vmax.bf16 %v4684, %v4636
        %v4733 = vmax.bf16 %v4685, %v4637
        %v4734 = vmax.bf16 %v4686, %v4638
        %v4735 = vmax.bf16 %v4687, %v4639
        %v4736 = vmax.bf16 %v4688, %v4640
        %v4737 = vmax.bf16 %v4689, %v4641
        %v4738 = vmax.bf16 %v4690, %v4642
        %v4739 = vmax.bf16 %v4691, %v4643
        %v4740 = vmax.bf16 %v4692, %v4644
        %v4741 = vmax.bf16 %v4693, %v4645
        %v4742 = vmax.bf16 %v4694, %v4646
        %v4743 = vmax.bf16 %v4695, %v4647
        %v4744 = vmax.bf16 %v4696, %v4648
        %v4745 = vmax.bf16 %v4697, %v4649
        %v4746 = vmax.bf16 %v4698, %v4650
        %v4747 = vmax.bf16 %v4699, %v4651
        %v4748 = vmax.bf16 %v4700, %v4652
        %v4749 = vmax.bf16 %v4701, %v4653
        %v4750 = vmax.bf16 %v4702, %v4654
        %vm4751 = vsmask.f32 3328
        %vm4752 = vsmask.f32 7440
        %vm4753 = vmor %vm4751, %vm4752
        %v4755 = vshrl.u32 %v4703, 16
        %v4757 = vrot.slane %v4755, 4
        %v4758 = vshll.u32 %v4703, 16
        %v4760 = vrot.slane %v4758, 5
        %v4761 = vor.u32 %v4757, %v4760
        %v4762 = vrot.slane %v4761, 4
        %v4764 = vshll.u32 %v4704, 16
        %v4766 = vrot.slane %v4764, 5
        %v4767 = vsel %vm4753, %v4762, %v4766
        %v4768 = vshrl.u32 %v4704, 16
        %v4770 = vrot.slane %v4768, 4
        %v4771 = vor.u32 %v4770, %v4766
        %v4772 = vrot.slane %v4771, 4
        %v4774 = vshll.u32 %v4705, 16
        %v4776 = vrot.slane %v4774, 5
        %v4777 = vsel %vm4753, %v4772, %v4776
        %v4778 = vshrl.u32 %v4705, 16
        %v4780 = vrot.slane %v4778, 4
        %v4781 = vrot.slane %v4780, 4
        %v4783 = vshrl.u32 %v4706, 16
        %v4785 = vrot.slane %v4783, 4
        %v4786 = vshll.u32 %v4706, 16
        %v4788 = vrot.slane %v4786, 5
        %v4789 = vor.u32 %v4785, %v4788
        %v4790 = vrot.slane %v4789, 4
        %v4792 = vshll.u32 %v4707, 16
        %v4794 = vrot.slane %v4792, 5
        %v4795 = vsel %vm4753, %v4790, %v4794
        %v4796 = vshrl.u32 %v4707, 16
        %v4798 = vrot.slane %v4796, 4
        %v4799 = vor.u32 %v4798, %v4794
        %v4800 = vrot.slane %v4799, 4
        %v4802 = vshll.u32 %v4708, 16
        %v4804 = vrot.slane %v4802, 5
        %v4805 = vsel %vm4753, %v4800, %v4804
        %v4806 = vshrl.u32 %v4708, 16
        %v4808 = vrot.slane %v4806, 4
        %v4809 = vrot.slane %v4808, 4
        %v4811 = vshrl.u32 %v4709, 16
        %v4813 = vrot.slane %v4811, 4
        %v4814 = vshll.u32 %v4709, 16
        %v4816 = vrot.slane %v4814, 5
        %v4817 = vor.u32 %v4813, %v4816
        %v4818 = vrot.slane %v4817, 4
        %v4820 = vshll.u32 %v4710, 16
        %v4822 = vrot.slane %v4820, 5
        %v4823 = vsel %vm4753, %v4818, %v4822
        %v4824 = vshrl.u32 %v4710, 16
        %v4826 = vrot.slane %v4824, 4
        %v4827 = vor.u32 %v4826, %v4822
        %v4828 = vrot.slane %v4827, 4
        %v4830 = vshll.u32 %v4711, 16
        %v4832 = vrot.slane %v4830, 5
        %v4833 = vsel %vm4753, %v4828, %v4832
        %v4834 = vshrl.u32 %v4711, 16
        %v4836 = vrot.slane %v4834, 4
        %v4837 = vrot.slane %v4836, 4
        %v4839 = vshrl.u32 %v4712, 16
        %v4841 = vrot.slane %v4839, 4
        %v4842 = vshll.u32 %v4712, 16
        %v4844 = vrot.slane %v4842, 5
        %v4845 = vor.u32 %v4841, %v4844
        %v4846 = vrot.slane %v4845, 4
        %v4848 = vshll.u32 %v4713, 16
        %v4850 = vrot.slane %v4848, 5
        %v4851 = vsel %vm4753, %v4846, %v4850
        %v4852 = vshrl.u32 %v4713, 16
        %v4854 = vrot.slane %v4852, 4
        %v4855 = vor.u32 %v4854, %v4850
        %v4856 = vrot.slane %v4855, 4
        %v4858 = vshll.u32 %v4714, 16
        %v4860 = vrot.slane %v4858, 5
        %v4861 = vsel %vm4753, %v4856, %v4860
        %v4862 = vshrl.u32 %v4714, 16
        %v4864 = vrot.slane %v4862, 4
        %v4865 = vrot.slane %v4864, 4
        %v4867 = vshrl.u32 %v4715, 16
        %v4869 = vrot.slane %v4867, 4
        %v4870 = vshll.u32 %v4715, 16
        %v4872 = vrot.slane %v4870, 5
        %v4873 = vor.u32 %v4869, %v4872
        %v4874 = vrot.slane %v4873, 4
        %v4876 = vshll.u32 %v4716, 16
        %v4878 = vrot.slane %v4876, 5
        %v4879 = vsel %vm4753, %v4874, %v4878
        %v4880 = vshrl.u32 %v4716, 16
        %v4882 = vrot.slane %v4880, 4
        %v4883 = vor.u32 %v4882, %v4878
        %v4884 = vrot.slane %v4883, 4
        %v4886 = vshll.u32 %v4717, 16
        %v4888 = vrot.slane %v4886, 5
        %v4889 = vsel %vm4753, %v4884, %v4888
        %v4890 = vshrl.u32 %v4717, 16
        %v4892 = vrot.slane %v4890, 4
        %v4893 = vrot.slane %v4892, 4
        %v4895 = vshrl.u32 %v4718, 16
        %v4897 = vrot.slane %v4895, 4
        %v4898 = vshll.u32 %v4718, 16
        %v4900 = vrot.slane %v4898, 5
        %v4901 = vor.u32 %v4897, %v4900
        %v4902 = vrot.slane %v4901, 4
        %v4904 = vshll.u32 %v4719, 16
        %v4906 = vrot.slane %v4904, 5
        %v4907 = vsel %vm4753, %v4902, %v4906
        %v4908 = vshrl.u32 %v4719, 16
        %v4910 = vrot.slane %v4908, 4
        %v4911 = vor.u32 %v4910, %v4906
        %v4912 = vrot.slane %v4911, 4
        %v4914 = vshll.u32 %v4720, 16
        %v4916 = vrot.slane %v4914, 5
        %v4917 = vsel %vm4753, %v4912, %v4916
        %v4918 = vshrl.u32 %v4720, 16
        %v4920 = vrot.slane %v4918, 4
        %v4921 = vrot.slane %v4920, 4
        %v4923 = vshrl.u32 %v4721, 16
        %v4925 = vrot.slane %v4923, 4
        %v4926 = vshll.u32 %v4721, 16
        %v4928 = vrot.slane %v4926, 5
        %v4929 = vor.u32 %v4925, %v4928
        %v4930 = vrot.slane %v4929, 4
        %v4932 = vshll.u32 %v4722, 16
        %v4934 = vrot.slane %v4932, 5
        %v4935 = vsel %vm4753, %v4930, %v4934
        %v4936 = vshrl.u32 %v4722, 16
        %v4938 = vrot.slane %v4936, 4
        %v4939 = vor.u32 %v4938, %v4934
        %v4940 = vrot.slane %v4939, 4
        %v4942 = vshll.u32 %v4723, 16
        %v4944 = vrot.slane %v4942, 5
        %v4945 = vsel %vm4753, %v4940, %v4944
        %v4946 = vshrl.u32 %v4723, 16
        %v4948 = vrot.slane %v4946, 4
        %v4949 = vrot.slane %v4948, 4
        %v4951 = vshrl.u32 %v4724, 16
        %v4953 = vrot.slane %v4951, 4
        %v4954 = vshll.u32 %v4724, 16
        %v4956 = vrot.slane %v4954, 5
        %v4957 = vor.u32 %v4953, %v4956
        %v4958 = vrot.slane %v4957, 4
        %v4960 = vshll.u32 %v4725, 16
        %v4962 = vrot.slane %v4960, 5
        %v4963 = vsel %vm4753, %v4958, %v4962
        %v4964 = vshrl.u32 %v4725, 16
        %v4966 = vrot.slane %v4964, 4
        %v4967 = vor.u32 %v4966, %v4962
        %v4968 = vrot.slane %v4967, 4
        %v4970 = vshll.u32 %v4726, 16
        %v4972 = vrot.slane %v4970, 5
        %v4973 = vsel %vm4753, %v4968, %v4972
        %v4974 = vshrl.u32 %v4726, 16
        %v4976 = vrot.slane %v4974, 4
        %v4977 = vrot.slane %v4976, 4
        %v4979 = vshrl.u32 %v4727, 16
        %v4981 = vrot.slane %v4979, 4
        %v4982 = vshll.u32 %v4727, 16
        %v4984 = vrot.slane %v4982, 5
        %v4985 = vor.u32 %v4981, %v4984
        %v4986 = vrot.slane %v4985, 4
        %v4988 = vshll.u32 %v4728, 16
        %v4990 = vrot.slane %v4988, 5
        %v4991 = vsel %vm4753, %v4986, %v4990
        %v4992 = vshrl.u32 %v4728, 16
        %v4994 = vrot.slane %v4992, 4
        %v4995 = vor.u32 %v4994, %v4990
        %v4996 = vrot.slane %v4995, 4
        %v4998 = vshll.u32 %v4729, 16
        %v5000 = vrot.slane %v4998, 5
        %v5001 = vsel %vm4753, %v4996, %v5000
        %v5002 = vshrl.u32 %v4729, 16
        %v5004 = vrot.slane %v5002, 4
        %v5005 = vrot.slane %v5004, 4
        %v5007 = vshrl.u32 %v4730, 16
        %v5009 = vrot.slane %v5007, 4
        %v5010 = vshll.u32 %v4730, 16
        %v5012 = vrot.slane %v5010, 5
        %v5013 = vor.u32 %v5009, %v5012
        %v5014 = vrot.slane %v5013, 4
        %v5016 = vshll.u32 %v4731, 16
        %v5018 = vrot.slane %v5016, 5
        %v5019 = vsel %vm4753, %v5014, %v5018
        %v5020 = vshrl.u32 %v4731, 16
        %v5022 = vrot.slane %v5020, 4
        %v5023 = vor.u32 %v5022, %v5018
        %v5024 = vrot.slane %v5023, 4
        %v5026 = vshll.u32 %v4732, 16
        %v5028 = vrot.slane %v5026, 5
        %v5029 = vsel %vm4753, %v5024, %v5028
        %v5030 = vshrl.u32 %v4732, 16
        %v5032 = vrot.slane %v5030, 4
        %v5033 = vrot.slane %v5032, 4
        %v5035 = vshrl.u32 %v4733, 16
        %v5037 = vrot.slane %v5035, 4
        %v5038 = vshll.u32 %v4733, 16
        %v5040 = vrot.slane %v5038, 5
        %v5041 = vor.u32 %v5037, %v5040
        %v5042 = vrot.slane %v5041, 4
        %v5044 = vshll.u32 %v4734, 16
        %v5046 = vrot.slane %v5044, 5
        %v5047 = vsel %vm4753, %v5042, %v5046
        %v5048 = vshrl.u32 %v4734, 16
        %v5050 = vrot.slane %v5048, 4
        %v5051 = vor.u32 %v5050, %v5046
        %v5052 = vrot.slane %v5051, 4
        %v5054 = vshll.u32 %v4735, 16
        %v5056 = vrot.slane %v5054, 5
        %v5057 = vsel %vm4753, %v5052, %v5056
        %v5058 = vshrl.u32 %v4735, 16
        %v5060 = vrot.slane %v5058, 4
        %v5061 = vrot.slane %v5060, 4
        %v5063 = vshrl.u32 %v4736, 16
        %v5065 = vrot.slane %v5063, 4
        %v5066 = vshll.u32 %v4736, 16
        %v5068 = vrot.slane %v5066, 5
        %v5069 = vor.u32 %v5065, %v5068
        %v5070 = vrot.slane %v5069, 4
        %v5072 = vshll.u32 %v4737, 16
        %v5074 = vrot.slane %v5072, 5
        %v5075 = vsel %vm4753, %v5070, %v5074
        %v5076 = vshrl.u32 %v4737, 16
        %v5078 = vrot.slane %v5076, 4
        %v5079 = vor.u32 %v5078, %v5074
        %v5080 = vrot.slane %v5079, 4
        %v5082 = vshll.u32 %v4738, 16
        %v5084 = vrot.slane %v5082, 5
        %v5085 = vsel %vm4753, %v5080, %v5084
        %v5086 = vshrl.u32 %v4738, 16
        %v5088 = vrot.slane %v5086, 4
        %v5089 = vrot.slane %v5088, 4
        %v5091 = vshrl.u32 %v4739, 16
        %v5093 = vrot.slane %v5091, 4
        %v5094 = vshll.u32 %v4739, 16
        %v5096 = vrot.slane %v5094, 5
        %v5097 = vor.u32 %v5093, %v5096
        %v5098 = vrot.slane %v5097, 4
        %v5100 = vshll.u32 %v4740, 16
        %v5102 = vrot.slane %v5100, 5
        %v5103 = vsel %vm4753, %v5098, %v5102
        %v5104 = vshrl.u32 %v4740, 16
        %v5106 = vrot.slane %v5104, 4
        %v5107 = vor.u32 %v5106, %v5102
        %v5108 = vrot.slane %v5107, 4
        %v5110 = vshll.u32 %v4741, 16
        %v5112 = vrot.slane %v5110, 5
        %v5113 = vsel %vm4753, %v5108, %v5112
        %v5114 = vshrl.u32 %v4741, 16
        %v5116 = vrot.slane %v5114, 4
        %v5117 = vrot.slane %v5116, 4
        %v5119 = vshrl.u32 %v4742, 16
        %v5121 = vrot.slane %v5119, 4
        %v5122 = vshll.u32 %v4742, 16
        %v5124 = vrot.slane %v5122, 5
        %v5125 = vor.u32 %v5121, %v5124
        %v5126 = vrot.slane %v5125, 4
        %v5128 = vshll.u32 %v4743, 16
        %v5130 = vrot.slane %v5128, 5
        %v5131 = vsel %vm4753, %v5126, %v5130
        %v5132 = vshrl.u32 %v4743, 16
        %v5134 = vrot.slane %v5132, 4
        %v5135 = vor.u32 %v5134, %v5130
        %v5136 = vrot.slane %v5135, 4
        %v5138 = vshll.u32 %v4744, 16
        %v5140 = vrot.slane %v5138, 5
        %v5141 = vsel %vm4753, %v5136, %v5140
        %v5142 = vshrl.u32 %v4744, 16
        %v5144 = vrot.slane %v5142, 4
        %v5145 = vrot.slane %v5144, 4
        %v5147 = vshrl.u32 %v4745, 16
        %v5149 = vrot.slane %v5147, 4
        %v5150 = vshll.u32 %v4745, 16
        %v5152 = vrot.slane %v5150, 5
        %v5153 = vor.u32 %v5149, %v5152
        %v5154 = vrot.slane %v5153, 4
        %v5156 = vshll.u32 %v4746, 16
        %v5158 = vrot.slane %v5156, 5
        %v5159 = vsel %vm4753, %v5154, %v5158
        %v5160 = vshrl.u32 %v4746, 16
        %v5162 = vrot.slane %v5160, 4
        %v5163 = vor.u32 %v5162, %v5158
        %v5164 = vrot.slane %v5163, 4
        %v5166 = vshll.u32 %v4747, 16
        %v5168 = vrot.slane %v5166, 5
        %v5169 = vsel %vm4753, %v5164, %v5168
        %v5170 = vshrl.u32 %v4747, 16
        %v5172 = vrot.slane %v5170, 4
        %v5173 = vrot.slane %v5172, 4
        %v5175 = vshrl.u32 %v4748, 16
        %v5177 = vrot.slane %v5175, 4
        %v5178 = vshll.u32 %v4748, 16
        %v5180 = vrot.slane %v5178, 5
        %v5181 = vor.u32 %v5177, %v5180
        %v5182 = vrot.slane %v5181, 4
        %v5184 = vshll.u32 %v4749, 16
        %v5186 = vrot.slane %v5184, 5
        %v5187 = vsel %vm4753, %v5182, %v5186
        %v5188 = vshrl.u32 %v4749, 16
        %v5190 = vrot.slane %v5188, 4
        %v5191 = vor.u32 %v5190, %v5186
        %v5192 = vrot.slane %v5191, 4
        %v5194 = vshll.u32 %v4750, 16
        %v5196 = vrot.slane %v5194, 5
        %v5197 = vsel %vm4753, %v5192, %v5196
        %v5198 = vshrl.u32 %v4750, 16
        %v5200 = vrot.slane %v5198, 4
        %v5201 = vrot.slane %v5200, 4
        %v5250 = vmax.bf16 %v4703, %v4767
        %v5251 = vmax.bf16 %v4704, %v4777
        %v5252 = vmax.bf16 %v4705, %v4781
        %v5253 = vmax.bf16 %v4706, %v4795
        %v5254 = vmax.bf16 %v4707, %v4805
        %v5255 = vmax.bf16 %v4708, %v4809
        %v5256 = vmax.bf16 %v4709, %v4823
        %v5257 = vmax.bf16 %v4710, %v4833
        %v5258 = vmax.bf16 %v4711, %v4837
        %v5259 = vmax.bf16 %v4712, %v4851
        %v5260 = vmax.bf16 %v4713, %v4861
        %v5261 = vmax.bf16 %v4714, %v4865
        %v5262 = vmax.bf16 %v4715, %v4879
        %v5263 = vmax.bf16 %v4716, %v4889
        %v5264 = vmax.bf16 %v4717, %v4893
        %v5265 = vmax.bf16 %v4718, %v4907
        %v5266 = vmax.bf16 %v4719, %v4917
        %v5267 = vmax.bf16 %v4720, %v4921
        %v5268 = vmax.bf16 %v4721, %v4935
        %v5269 = vmax.bf16 %v4722, %v4945
        %v5270 = vmax.bf16 %v4723, %v4949
        %v5271 = vmax.bf16 %v4724, %v4963
        %v5272 = vmax.bf16 %v4725, %v4973
        %v5273 = vmax.bf16 %v4726, %v4977
        %v5274 = vmax.bf16 %v4727, %v4991
        %v5275 = vmax.bf16 %v4728, %v5001
        %v5276 = vmax.bf16 %v4729, %v5005
        %v5277 = vmax.bf16 %v4730, %v5019
        %v5278 = vmax.bf16 %v4731, %v5029
        %v5279 = vmax.bf16 %v4732, %v5033
        %v5280 = vmax.bf16 %v4733, %v5047
        %v5281 = vmax.bf16 %v4734, %v5057
        %v5282 = vmax.bf16 %v4735, %v5061
        %v5283 = vmax.bf16 %v4736, %v5075
        %v5284 = vmax.bf16 %v4737, %v5085
        %v5285 = vmax.bf16 %v4738, %v5089
        %v5286 = vmax.bf16 %v4739, %v5103
        %v5287 = vmax.bf16 %v4740, %v5113
        %v5288 = vmax.bf16 %v4741, %v5117
        %v5289 = vmax.bf16 %v4742, %v5131
        %v5290 = vmax.bf16 %v4743, %v5141
        %v5291 = vmax.bf16 %v4744, %v5145
        %v5292 = vmax.bf16 %v4745, %v5159
        %v5293 = vmax.bf16 %v4746, %v5169
        %v5294 = vmax.bf16 %v4747, %v5173
        %v5295 = vmax.bf16 %v4748, %v5187
        %v5296 = vmax.bf16 %v4749, %v5197
        %v5297 = vmax.bf16 %v4750, %v5201
        %vm5346 = vcmask 1042432
        %vm5347 = vcmask 1046532
        %vm5348 = vmor %vm5346, %vm5347
        %v5349 = vrot.slane %v4703, 5
        %v5350 = vrot.slane %v5349, 4
        %v5351 = vrot.slane %v4704, 5
        %v5352 = vsel %vm5348, %v5350, %v5351
        %v5353 = vrot.slane %v5351, 4
        %v5354 = vrot.slane %v4705, 5
        %v5355 = vsel %vm5348, %v5353, %v5354
        %v5356 = vrot.slane %v5354, 4
        %v5357 = vrot.slane %v4706, 5
        %v5358 = vrot.slane %v5357, 4
        %v5359 = vrot.slane %v4707, 5
        %v5360 = vsel %vm5348, %v5358, %v5359
        %v5361 = vrot.slane %v5359, 4
        %v5362 = vrot.slane %v4708, 5
        %v5363 = vsel %vm5348, %v5361, %v5362
        %v5364 = vrot.slane %v5362, 4
        %v5365 = vrot.slane %v4709, 5
        %v5366 = vrot.slane %v5365, 4
        %v5367 = vrot.slane %v4710, 5
        %v5368 = vsel %vm5348, %v5366, %v5367
        %v5369 = vrot.slane %v5367, 4
        %v5370 = vrot.slane %v4711, 5
        %v5371 = vsel %vm5348, %v5369, %v5370
        %v5372 = vrot.slane %v5370, 4
        %v5373 = vrot.slane %v4712, 5
        %v5374 = vrot.slane %v5373, 4
        %v5375 = vrot.slane %v4713, 5
        %v5376 = vsel %vm5348, %v5374, %v5375
        %v5377 = vrot.slane %v5375, 4
        %v5378 = vrot.slane %v4714, 5
        %v5379 = vsel %vm5348, %v5377, %v5378
        %v5380 = vrot.slane %v5378, 4
        %v5381 = vrot.slane %v4715, 5
        %v5382 = vrot.slane %v5381, 4
        %v5383 = vrot.slane %v4716, 5
        %v5384 = vsel %vm5348, %v5382, %v5383
        %v5385 = vrot.slane %v5383, 4
        %v5386 = vrot.slane %v4717, 5
        %v5387 = vsel %vm5348, %v5385, %v5386
        %v5388 = vrot.slane %v5386, 4
        %v5389 = vrot.slane %v4718, 5
        %v5390 = vrot.slane %v5389, 4
        %v5391 = vrot.slane %v4719, 5
        %v5392 = vsel %vm5348, %v5390, %v5391
        %v5393 = vrot.slane %v5391, 4
        %v5394 = vrot.slane %v4720, 5
        %v5395 = vsel %vm5348, %v5393, %v5394
        %v5396 = vrot.slane %v5394, 4
        %v5397 = vrot.slane %v4721, 5
        %v5398 = vrot.slane %v5397, 4
        %v5399 = vrot.slane %v4722, 5
        %v5400 = vsel %vm5348, %v5398, %v5399
        %v5401 = vrot.slane %v5399, 4
        %v5402 = vrot.slane %v4723, 5
        %v5403 = vsel %vm5348, %v5401, %v5402
        %v5404 = vrot.slane %v5402, 4
        %v5405 = vrot.slane %v4724, 5
        %v5406 = vrot.slane %v5405, 4
        %v5407 = vrot.slane %v4725, 5
        %v5408 = vsel %vm5348, %v5406, %v5407
        %v5409 = vrot.slane %v5407, 4
        %v5410 = vrot.slane %v4726, 5
        %v5411 = vsel %vm5348, %v5409, %v5410
        %v5412 = vrot.slane %v5410, 4
        %v5413 = vrot.slane %v4727, 5
        %v5414 = vrot.slane %v5413, 4
        %v5415 = vrot.slane %v4728, 5
        %v5416 = vsel %vm5348, %v5414, %v5415
        %v5417 = vrot.slane %v5415, 4
        %v5418 = vrot.slane %v4729, 5
        %v5419 = vsel %vm5348, %v5417, %v5418
        %v5420 = vrot.slane %v5418, 4
        %v5421 = vrot.slane %v4730, 5
        %v5422 = vrot.slane %v5421, 4
        %v5423 = vrot.slane %v4731, 5
        %v5424 = vsel %vm5348, %v5422, %v5423
        %v5425 = vrot.slane %v5423, 4
        %v5426 = vrot.slane %v4732, 5
        %v5427 = vsel %vm5348, %v5425, %v5426
        %v5428 = vrot.slane %v5426, 4
        %v5429 = vrot.slane %v4733, 5
        %v5430 = vrot.slane %v5429, 4
        %v5431 = vrot.slane %v4734, 5
        %v5432 = vsel %vm5348, %v5430, %v5431
        %v5433 = vrot.slane %v5431, 4
        %v5434 = vrot.slane %v4735, 5
        %v5435 = vsel %vm5348, %v5433, %v5434
        %v5436 = vrot.slane %v5434, 4
        %v5437 = vrot.slane %v4736, 5
        %v5438 = vrot.slane %v5437, 4
        %v5439 = vrot.slane %v4737, 5
        %v5440 = vsel %vm5348, %v5438, %v5439
        %v5441 = vrot.slane %v5439, 4
        %v5442 = vrot.slane %v4738, 5
        %v5443 = vsel %vm5348, %v5441, %v5442
        %v5444 = vrot.slane %v5442, 4
        %v5445 = vrot.slane %v4739, 5
        %v5446 = vrot.slane %v5445, 4
        %v5447 = vrot.slane %v4740, 5
        %v5448 = vsel %vm5348, %v5446, %v5447
        %v5449 = vrot.slane %v5447, 4
        %v5450 = vrot.slane %v4741, 5
        %v5451 = vsel %vm5348, %v5449, %v5450
        %v5452 = vrot.slane %v5450, 4
        %v5453 = vrot.slane %v4742, 5
        %v5454 = vrot.slane %v5453, 4
        %v5455 = vrot.slane %v4743, 5
        %v5456 = vsel %vm5348, %v5454, %v5455
        %v5457 = vrot.slane %v5455, 4
        %v5458 = vrot.slane %v4744, 5
        %v5459 = vsel %vm5348, %v5457, %v5458
        %v5460 = vrot.slane %v5458, 4
        %v5461 = vrot.slane %v4745, 5
        %v5462 = vrot.slane %v5461, 4
        %v5463 = vrot.slane %v4746, 5
        %v5464 = vsel %vm5348, %v5462, %v5463
        %v5465 = vrot.slane %v5463, 4
        %v5466 = vrot.slane %v4747, 5
        %v5467 = vsel %vm5348, %v5465, %v5466
        %v5468 = vrot.slane %v5466, 4
        %v5469 = vrot.slane %v4748, 5
        %v5470 = vrot.slane %v5469, 4
        %v5471 = vrot.slane %v4749, 5
        %v5472 = vsel %vm5348, %v5470, %v5471
        %v5473 = vrot.slane %v5471, 4
        %v5474 = vrot.slane %v4750, 5
        %v5475 = vsel %vm5348, %v5473, %v5474
        %v5476 = vrot.slane %v5474, 4
        %v5525 = vmax.bf16 %v5250, %v5352
        %v5526 = vmax.bf16 %v5251, %v5355
        %v5527 = vmax.bf16 %v5252, %v5356
        %v5528 = vmax.bf16 %v5253, %v5360
        %v5529 = vmax.bf16 %v5254, %v5363
        %v5530 = vmax.bf16 %v5255, %v5364
        %v5531 = vmax.bf16 %v5256, %v5368
        %v5532 = vmax.bf16 %v5257, %v5371
        %v5533 = vmax.bf16 %v5258, %v5372
        %v5534 = vmax.bf16 %v5259, %v5376
        %v5535 = vmax.bf16 %v5260, %v5379
        %v5536 = vmax.bf16 %v5261, %v5380
        %v5537 = vmax.bf16 %v5262, %v5384
        %v5538 = vmax.bf16 %v5263, %v5387
        %v5539 = vmax.bf16 %v5264, %v5388
        %v5540 = vmax.bf16 %v5265, %v5392
        %v5541 = vmax.bf16 %v5266, %v5395
        %v5542 = vmax.bf16 %v5267, %v5396
        %v5543 = vmax.bf16 %v5268, %v5400
        %v5544 = vmax.bf16 %v5269, %v5403
        %v5545 = vmax.bf16 %v5270, %v5404
        %v5546 = vmax.bf16 %v5271, %v5408
        %v5547 = vmax.bf16 %v5272, %v5411
        %v5548 = vmax.bf16 %v5273, %v5412
        %v5549 = vmax.bf16 %v5274, %v5416
        %v5550 = vmax.bf16 %v5275, %v5419
        %v5551 = vmax.bf16 %v5276, %v5420
        %v5552 = vmax.bf16 %v5277, %v5424
        %v5553 = vmax.bf16 %v5278, %v5427
        %v5554 = vmax.bf16 %v5279, %v5428
        %v5555 = vmax.bf16 %v5280, %v5432
        %v5556 = vmax.bf16 %v5281, %v5435
        %v5557 = vmax.bf16 %v5282, %v5436
        %v5558 = vmax.bf16 %v5283, %v5440
        %v5559 = vmax.bf16 %v5284, %v5443
        %v5560 = vmax.bf16 %v5285, %v5444
        %v5561 = vmax.bf16 %v5286, %v5448
        %v5562 = vmax.bf16 %v5287, %v5451
        %v5563 = vmax.bf16 %v5288, %v5452
        %v5564 = vmax.bf16 %v5289, %v5456
        %v5565 = vmax.bf16 %v5290, %v5459
        %v5566 = vmax.bf16 %v5291, %v5460
        %v5567 = vmax.bf16 %v5292, %v5464
        %v5568 = vmax.bf16 %v5293, %v5467
        %v5569 = vmax.bf16 %v5294, %v5468
        %v5570 = vmax.bf16 %v5295, %v5472
        %v5571 = vmax.bf16 %v5296, %v5475
        %v5572 = vmax.bf16 %v5297, %v5476
        %v5574 = vshrl.u32 %v5525, 16
        %v5576 = vrot.slane %v5574, 4
        %v5577 = vshll.u32 %v5525, 16
        %v5579 = vrot.slane %v5577, 5
        %v5580 = vor.u32 %v5576, %v5579
        %v5581 = vrot.slane %v5580, 4
        %v5583 = vshll.u32 %v5526, 16
        %v5585 = vrot.slane %v5583, 5
        %v5586 = vsel %vm4753, %v5581, %v5585
        %v5587 = vshrl.u32 %v5526, 16
        %v5589 = vrot.slane %v5587, 4
        %v5590 = vor.u32 %v5589, %v5585
        %v5591 = vrot.slane %v5590, 4
        %v5593 = vshll.u32 %v5527, 16
        %v5595 = vrot.slane %v5593, 5
        %v5596 = vsel %vm4753, %v5591, %v5595
        %v5598 = vshrl.u32 %v5528, 16
        %v5600 = vrot.slane %v5598, 4
        %v5601 = vshll.u32 %v5528, 16
        %v5603 = vrot.slane %v5601, 5
        %v5604 = vor.u32 %v5600, %v5603
        %v5605 = vrot.slane %v5604, 4
        %v5607 = vshll.u32 %v5529, 16
        %v5609 = vrot.slane %v5607, 5
        %v5610 = vsel %vm4753, %v5605, %v5609
        %v5611 = vshrl.u32 %v5529, 16
        %v5613 = vrot.slane %v5611, 4
        %v5614 = vor.u32 %v5613, %v5609
        %v5615 = vrot.slane %v5614, 4
        %v5617 = vshll.u32 %v5530, 16
        %v5619 = vrot.slane %v5617, 5
        %v5620 = vsel %vm4753, %v5615, %v5619
        %v5622 = vshrl.u32 %v5531, 16
        %v5624 = vrot.slane %v5622, 4
        %v5625 = vshll.u32 %v5531, 16
        %v5627 = vrot.slane %v5625, 5
        %v5628 = vor.u32 %v5624, %v5627
        %v5629 = vrot.slane %v5628, 4
        %v5631 = vshll.u32 %v5532, 16
        %v5633 = vrot.slane %v5631, 5
        %v5634 = vsel %vm4753, %v5629, %v5633
        %v5635 = vshrl.u32 %v5532, 16
        %v5637 = vrot.slane %v5635, 4
        %v5638 = vor.u32 %v5637, %v5633
        %v5639 = vrot.slane %v5638, 4
        %v5641 = vshll.u32 %v5533, 16
        %v5643 = vrot.slane %v5641, 5
        %v5644 = vsel %vm4753, %v5639, %v5643
        %v5646 = vshrl.u32 %v5534, 16
        %v5648 = vrot.slane %v5646, 4
        %v5649 = vshll.u32 %v5534, 16
        %v5651 = vrot.slane %v5649, 5
        %v5652 = vor.u32 %v5648, %v5651
        %v5653 = vrot.slane %v5652, 4
        %v5655 = vshll.u32 %v5535, 16
        %v5657 = vrot.slane %v5655, 5
        %v5658 = vsel %vm4753, %v5653, %v5657
        %v5659 = vshrl.u32 %v5535, 16
        %v5661 = vrot.slane %v5659, 4
        %v5662 = vor.u32 %v5661, %v5657
        %v5663 = vrot.slane %v5662, 4
        %v5665 = vshll.u32 %v5536, 16
        %v5667 = vrot.slane %v5665, 5
        %v5668 = vsel %vm4753, %v5663, %v5667
        %v5670 = vshrl.u32 %v5537, 16
        %v5672 = vrot.slane %v5670, 4
        %v5673 = vshll.u32 %v5537, 16
        %v5675 = vrot.slane %v5673, 5
        %v5676 = vor.u32 %v5672, %v5675
        %v5677 = vrot.slane %v5676, 4
        %v5679 = vshll.u32 %v5538, 16
        %v5681 = vrot.slane %v5679, 5
        %v5682 = vsel %vm4753, %v5677, %v5681
        %v5683 = vshrl.u32 %v5538, 16
        %v5685 = vrot.slane %v5683, 4
        %v5686 = vor.u32 %v5685, %v5681
        %v5687 = vrot.slane %v5686, 4
        %v5689 = vshll.u32 %v5539, 16
        %v5691 = vrot.slane %v5689, 5
        %v5692 = vsel %vm4753, %v5687, %v5691
        %v5694 = vshrl.u32 %v5540, 16
        %v5696 = vrot.slane %v5694, 4
        %v5697 = vshll.u32 %v5540, 16
        %v5699 = vrot.slane %v5697, 5
        %v5700 = vor.u32 %v5696, %v5699
        %v5701 = vrot.slane %v5700, 4
        %v5703 = vshll.u32 %v5541, 16
        %v5705 = vrot.slane %v5703, 5
        %v5706 = vsel %vm4753, %v5701, %v5705
        %v5707 = vshrl.u32 %v5541, 16
        %v5709 = vrot.slane %v5707, 4
        %v5710 = vor.u32 %v5709, %v5705
        %v5711 = vrot.slane %v5710, 4
        %v5713 = vshll.u32 %v5542, 16
        %v5715 = vrot.slane %v5713, 5
        %v5716 = vsel %vm4753, %v5711, %v5715
        %v5718 = vshrl.u32 %v5543, 16
        %v5720 = vrot.slane %v5718, 4
        %v5721 = vshll.u32 %v5543, 16
        %v5723 = vrot.slane %v5721, 5
        %v5724 = vor.u32 %v5720, %v5723
        %v5725 = vrot.slane %v5724, 4
        %v5727 = vshll.u32 %v5544, 16
        %v5729 = vrot.slane %v5727, 5
        %v5730 = vsel %vm4753, %v5725, %v5729
        %v5731 = vshrl.u32 %v5544, 16
        %v5733 = vrot.slane %v5731, 4
        %v5734 = vor.u32 %v5733, %v5729
        %v5735 = vrot.slane %v5734, 4
        %v5737 = vshll.u32 %v5545, 16
        %v5739 = vrot.slane %v5737, 5
        %v5740 = vsel %vm4753, %v5735, %v5739
        %v5742 = vshrl.u32 %v5546, 16
        %v5744 = vrot.slane %v5742, 4
        %v5745 = vshll.u32 %v5546, 16
        %v5747 = vrot.slane %v5745, 5
        %v5748 = vor.u32 %v5744, %v5747
        %v5749 = vrot.slane %v5748, 4
        %v5751 = vshll.u32 %v5547, 16
        %v5753 = vrot.slane %v5751, 5
        %v5754 = vsel %vm4753, %v5749, %v5753
        %v5755 = vshrl.u32 %v5547, 16
        %v5757 = vrot.slane %v5755, 4
        %v5758 = vor.u32 %v5757, %v5753
        %v5759 = vrot.slane %v5758, 4
        %v5761 = vshll.u32 %v5548, 16
        %v5763 = vrot.slane %v5761, 5
        %v5764 = vsel %vm4753, %v5759, %v5763
        %v5766 = vshrl.u32 %v5549, 16
        %v5768 = vrot.slane %v5766, 4
        %v5769 = vshll.u32 %v5549, 16
        %v5771 = vrot.slane %v5769, 5
        %v5772 = vor.u32 %v5768, %v5771
        %v5773 = vrot.slane %v5772, 4
        %v5775 = vshll.u32 %v5550, 16
        %v5777 = vrot.slane %v5775, 5
        %v5778 = vsel %vm4753, %v5773, %v5777
        %v5779 = vshrl.u32 %v5550, 16
        %v5781 = vrot.slane %v5779, 4
        %v5782 = vor.u32 %v5781, %v5777
        %v5783 = vrot.slane %v5782, 4
        %v5785 = vshll.u32 %v5551, 16
        %v5787 = vrot.slane %v5785, 5
        %v5788 = vsel %vm4753, %v5783, %v5787
        %v5790 = vshrl.u32 %v5552, 16
        %v5792 = vrot.slane %v5790, 4
        %v5793 = vshll.u32 %v5552, 16
        %v5795 = vrot.slane %v5793, 5
        %v5796 = vor.u32 %v5792, %v5795
        %v5797 = vrot.slane %v5796, 4
        %v5799 = vshll.u32 %v5553, 16
        %v5801 = vrot.slane %v5799, 5
        %v5802 = vsel %vm4753, %v5797, %v5801
        %v5803 = vshrl.u32 %v5553, 16
        %v5805 = vrot.slane %v5803, 4
        %v5806 = vor.u32 %v5805, %v5801
        %v5807 = vrot.slane %v5806, 4
        %v5809 = vshll.u32 %v5554, 16
        %v5811 = vrot.slane %v5809, 5
        %v5812 = vsel %vm4753, %v5807, %v5811
        %v5814 = vshrl.u32 %v5555, 16
        %v5816 = vrot.slane %v5814, 4
        %v5817 = vshll.u32 %v5555, 16
        %v5819 = vrot.slane %v5817, 5
        %v5820 = vor.u32 %v5816, %v5819
        %v5821 = vrot.slane %v5820, 4
        %v5823 = vshll.u32 %v5556, 16
        %v5825 = vrot.slane %v5823, 5
        %v5826 = vsel %vm4753, %v5821, %v5825
        %v5827 = vshrl.u32 %v5556, 16
        %v5829 = vrot.slane %v5827, 4
        %v5830 = vor.u32 %v5829, %v5825
        %v5831 = vrot.slane %v5830, 4
        %v5833 = vshll.u32 %v5557, 16
        %v5835 = vrot.slane %v5833, 5
        %v5836 = vsel %vm4753, %v5831, %v5835
        %v5838 = vshrl.u32 %v5558, 16
        %v5840 = vrot.slane %v5838, 4
        %v5841 = vshll.u32 %v5558, 16
        %v5843 = vrot.slane %v5841, 5
        %v5844 = vor.u32 %v5840, %v5843
        %v5845 = vrot.slane %v5844, 4
        %v5847 = vshll.u32 %v5559, 16
        %v5849 = vrot.slane %v5847, 5
        %v5850 = vsel %vm4753, %v5845, %v5849
        %v5851 = vshrl.u32 %v5559, 16
        %v5853 = vrot.slane %v5851, 4
        %v5854 = vor.u32 %v5853, %v5849
        %v5855 = vrot.slane %v5854, 4
        %v5857 = vshll.u32 %v5560, 16
        %v5859 = vrot.slane %v5857, 5
        %v5860 = vsel %vm4753, %v5855, %v5859
        %v5862 = vshrl.u32 %v5561, 16
        %v5864 = vrot.slane %v5862, 4
        %v5865 = vshll.u32 %v5561, 16
        %v5867 = vrot.slane %v5865, 5
        %v5868 = vor.u32 %v5864, %v5867
        %v5869 = vrot.slane %v5868, 4
        %v5871 = vshll.u32 %v5562, 16
        %v5873 = vrot.slane %v5871, 5
        %v5874 = vsel %vm4753, %v5869, %v5873
        %v5875 = vshrl.u32 %v5562, 16
        %v5877 = vrot.slane %v5875, 4
        %v5878 = vor.u32 %v5877, %v5873
        %v5879 = vrot.slane %v5878, 4
        %v5881 = vshll.u32 %v5563, 16
        %v5883 = vrot.slane %v5881, 5
        %v5884 = vsel %vm4753, %v5879, %v5883
        %v5886 = vshrl.u32 %v5564, 16
        %v5888 = vrot.slane %v5886, 4
        %v5889 = vshll.u32 %v5564, 16
        %v5891 = vrot.slane %v5889, 5
        %v5892 = vor.u32 %v5888, %v5891
        %v5893 = vrot.slane %v5892, 4
        %v5895 = vshll.u32 %v5565, 16
        %v5897 = vrot.slane %v5895, 5
        %v5898 = vsel %vm4753, %v5893, %v5897
        %v5899 = vshrl.u32 %v5565, 16
        %v5901 = vrot.slane %v5899, 4
        %v5902 = vor.u32 %v5901, %v5897
        %v5903 = vrot.slane %v5902, 4
        %v5905 = vshll.u32 %v5566, 16
        %v5907 = vrot.slane %v5905, 5
        %v5908 = vsel %vm4753, %v5903, %v5907
        %v5910 = vshrl.u32 %v5567, 16
        %v5912 = vrot.slane %v5910, 4
        %v5913 = vshll.u32 %v5567, 16
        %v5915 = vrot.slane %v5913, 5
        %v5916 = vor.u32 %v5912, %v5915
        %v5917 = vrot.slane %v5916, 4
        %v5919 = vshll.u32 %v5568, 16
        %v5921 = vrot.slane %v5919, 5
        %v5922 = vsel %vm4753, %v5917, %v5921
        %v5923 = vshrl.u32 %v5568, 16
        %v5925 = vrot.slane %v5923, 4
        %v5926 = vor.u32 %v5925, %v5921
        %v5927 = vrot.slane %v5926, 4
        %v5929 = vshll.u32 %v5569, 16
        %v5931 = vrot.slane %v5929, 5
        %v5932 = vsel %vm4753, %v5927, %v5931
        %v5934 = vshrl.u32 %v5570, 16
        %v5936 = vrot.slane %v5934, 4
        %v5937 = vshll.u32 %v5570, 16
        %v5939 = vrot.slane %v5937, 5
        %v5940 = vor.u32 %v5936, %v5939
        %v5941 = vrot.slane %v5940, 4
        %v5943 = vshll.u32 %v5571, 16
        %v5945 = vrot.slane %v5943, 5
        %v5946 = vsel %vm4753, %v5941, %v5945
        %v5947 = vshrl.u32 %v5571, 16
        %v5949 = vrot.slane %v5947, 4
        %v5950 = vor.u32 %v5949, %v5945
        %v5951 = vrot.slane %v5950, 4
        %v5953 = vshll.u32 %v5572, 16
        %v5955 = vrot.slane %v5953, 5
        %v5956 = vsel %vm4753, %v5951, %v5955
        %v5957 = vld [vmem:[#allocation14] sm:$0x3]
        %v5958 = vld [vmem:[#allocation16] sm:$0x1]
        %v5960 = vlaneseq
        %v5961 = vshrl.u32 %v5960, 7
        %v5962 = vsub.s32 0, %v5961
        %v5963 = vrot.slane %v5958, %v5962
        %v5965 = vunpack.c.l.b16 %v5586
        %v5966 = vunpack.c.l.b16 %v5596
        %v5967 = vunpack.c.l.b16 %v5610
        %v5968 = vunpack.c.l.b16 %v5620
        %v5969 = vunpack.c.l.b16 %v5634
        %v5970 = vunpack.c.l.b16 %v5644
        %v5971 = vunpack.c.l.b16 %v5658
        %v5972 = vunpack.c.l.b16 %v5668
        %v5973 = vunpack.c.l.b16 %v5682
        %v5974 = vunpack.c.l.b16 %v5692
        %v5975 = vunpack.c.l.b16 %v5706
        %v5976 = vunpack.c.l.b16 %v5716
        %v5977 = vunpack.c.l.b16 %v5730
        %v5978 = vunpack.c.l.b16 %v5740
        %v5979 = vunpack.c.l.b16 %v5754
        %v5980 = vunpack.c.l.b16 %v5764
        %v5981 = vunpack.c.l.b16 %v5778
        %v5982 = vunpack.c.l.b16 %v5788
        %v5983 = vunpack.c.l.b16 %v5802
        %v5984 = vunpack.c.l.b16 %v5812
        %v5985 = vunpack.c.l.b16 %v5826
        %v5986 = vunpack.c.l.b16 %v5836
        %v5987 = vunpack.c.l.b16 %v5850
        %v5988 = vunpack.c.l.b16 %v5860
        %v5989 = vunpack.c.l.b16 %v5874
        %v5990 = vunpack.c.l.b16 %v5884
        %v5991 = vunpack.c.l.b16 %v5898
        %v5992 = vunpack.c.l.b16 %v5908
        %v5993 = vunpack.c.l.b16 %v5922
        %v5994 = vunpack.c.l.b16 %v5932
        %v5995 = vunpack.c.l.b16 %v5946
        %v5996 = vunpack.c.l.b16 %v5956
        %v5997 = vpack.c.b16 %v5966, %v5965
        %v5998 = vpack.c.b16 %v5968, %v5967
        %v5999 = vpack.c.b16 %v5970, %v5969
        %v6000 = vpack.c.b16 %v5972, %v5971
        %v6001 = vpack.c.b16 %v5974, %v5973
        %v6002 = vpack.c.b16 %v5976, %v5975
        %v6003 = vpack.c.b16 %v5978, %v5977
        %v6004 = vpack.c.b16 %v5980, %v5979
        %v6005 = vpack.c.b16 %v5982, %v5981
        %v6006 = vpack.c.b16 %v5984, %v5983
        %v6007 = vpack.c.b16 %v5986, %v5985
        %v6008 = vpack.c.b16 %v5988, %v5987
        %v6009 = vpack.c.b16 %v5990, %v5989
        %v6010 = vpack.c.b16 %v5992, %v5991
        %v6011 = vpack.c.b16 %v5994, %v5993
        %v6012 = vpack.c.b16 %v5996, %v5995
        %v6014 = vsel %vm699, %v5997, 0
        %v6017 = vsel %vm699, %v5998, 0
        %v6020 = vsel %vm699, %v5999, 0
        %v6023 = vsel %vm699, %v6000, 0
        %v6026 = vsel %vm699, %v6001, 0
        %v6029 = vsel %vm699, %v6002, 0
        %v6032 = vsel %vm699, %v6003, 0
        %v6035 = vsel %vm699, %v6004, 0
        %v6038 = vsel %vm699, %v6005, 0
        %v6041 = vsel %vm699, %v6006, 0
        %v6044 = vsel %vm699, %v6007, 0
        %v6047 = vsel %vm699, %v6008, 0
        %v6050 = vsel %vm699, %v6009, 0
        %v6053 = vsel %vm699, %v6010, 0
        %v6056 = vsel %vm699, %v6011, 0
        %v6059 = vsel %vm699, %v6012, 0
        %v6062 = vsel %vm790, %v5957, 0
        %6064 = vmatprep.subr.bf16.mxu0 0
        %6065 = vmatpush1.bf16.msra.mxu0 %v6062
        %6066 = vmatprep.subr.bf16.mxu0 0
        %6067 = vmatpush1.bf16.msra.mxu0 0
        %6068 = vmatprep.subr.bf16.mxu0 0
        %6069 = vmatpush1.bf16.msra.mxu0 0
        %6070 = vmatprep.subr.bf16.mxu0 0
        %6071 = vmatpush1.bf16.msra.mxu0 0
        %6072 = vmatprep.subr.bf16.mxu0 0
        %6073 = vmatpush1.bf16.msra.mxu0 0
        %6074 = vmatprep.subr.bf16.mxu0 0
        %6075 = vmatpush1.bf16.msra.mxu0 0
        %6076 = vmatprep.subr.bf16.mxu0 0
        %6077 = vmatpush1.bf16.msra.mxu0 0
        %6078 = vmatprep.subr.bf16.mxu0 0
        %6079 = vmatpush1.bf16.msra.mxu0 0
        %6080 = vmatprep.subr.bf16.mxu0 0
        %6081 = vmatpush1.bf16.msra.mxu0 0
        %6082 = vmatprep.subr.bf16.mxu0 0
        %6083 = vmatpush1.bf16.msra.mxu0 0
        %6084 = vmatprep.subr.bf16.mxu0 0
        %6085 = vmatpush1.bf16.msra.mxu0 0
        %6086 = vmatprep.subr.bf16.mxu0 0
        %6087 = vmatpush1.bf16.msra.mxu0 0
        %6088 = vmatprep.subr.bf16.mxu0 0
        %6089 = vmatpush1.bf16.msra.mxu0 0
        %6090 = vmatprep.subr.bf16.mxu0 0
        %6091 = vmatpush1.bf16.msra.mxu0 0
        %6092 = vmatprep.subr.bf16.mxu0 0
        %6093 = vmatpush1.bf16.msra.mxu0 0
        %6094 = vmatprep.subr.bf16.mxu0 0
        %6095 = vmatpush1.bf16.msra.mxu0 0
        %6096 = vmatprep.mubr.bf16.mxu0 0
        %6097 = vmatmul.mubr.bf16.gmra.mrb[0].mxu0 %v6014
        %v6098 = vpop.f32.mrb[0].mxu0
        %v6099 = vadd.f32 %v5963, %v6098
        %v6100 = vpop.f32.mrb[0].mxu0
        %v6101 = vpop.f32.mrb[0].mxu0
        %v6102 = vadd.f32 %v5963, %v6101
        %v6103 = vpop.f32.mrb[0].mxu0
        %6104 = vmatprep.mubr.bf16.mxu0 0
        %6105 = vmatmul.mubr.bf16.gmra.mrb[0].mxu0 %v6017
        %v6106 = vpop.f32.mrb[0].mxu0
        %v6107 = vadd.f32 %v5963, %v6106
        %v6108 = vpop.f32.mrb[0].mxu0
        %v6109 = vpop.f32.mrb[0].mxu0
        %v6110 = vadd.f32 %v5963, %v6109
        %v6111 = vpop.f32.mrb[0].mxu0
        %6112 = vmatprep.mubr.bf16.mxu0 0
        %6113 = vmatmul.mubr.bf16.gmra.mrb[0].mxu0 %v6020
        %v6114 = vpop.f32.mrb[0].mxu0
        %v6115 = vadd.f32 %v5963, %v6114
        %v6116 = vpop.f32.mrb[0].mxu0
        %v6117 = vpop.f32.mrb[0].mxu0
        %v6118 = vadd.f32 %v5963, %v6117
        %v6119 = vpop.f32.mrb[0].mxu0
        %6120 = vmatprep.mubr.bf16.mxu0 0
        %6121 = vmatmul.mubr.bf16.gmra.mrb[0].mxu0 %v6023
        %v6122 = vpop.f32.mrb[0].mxu0
        %v6123 = vadd.f32 %v5963, %v6122
        %v6124 = vpop.f32.mrb[0].mxu0
        %v6125 = vpop.f32.mrb[0].mxu0
        %v6126 = vadd.f32 %v5963, %v6125
        %v6127 = vpop.f32.mrb[0].mxu0
        %6128 = vmatprep.mubr.bf16.mxu0 0
        %6129 = vmatmul.mubr.bf16.gmra.mrb[0].mxu0 %v6026
        %v6130 = vpop.f32.mrb[0].mxu0
        %v6131 = vadd.f32 %v5963, %v6130
        %v6132 = vpop.f32.mrb[0].mxu0
        %v6133 = vpop.f32.mrb[0].mxu0
        %v6134 = vadd.f32 %v5963, %v6133
        %v6135 = vpop.f32.mrb[0].mxu0
        %6136 = vmatprep.mubr.bf16.mxu0 0
        %6137 = vmatmul.mubr.bf16.gmra.mrb[0].mxu0 %v6029
        %v6138 = vpop.f32.mrb[0].mxu0
        %v6139 = vadd.f32 %v5963, %v6138
        %v6140 = vpop.f32.mrb[0].mxu0
        %v6141 = vpop.f32.mrb[0].mxu0
        %v6142 = vadd.f32 %v5963, %v6141
        %v6143 = vpop.f32.mrb[0].mxu0
        %6144 = vmatprep.mubr.bf16.mxu0 0
        %6145 = vmatmul.mubr.bf16.gmra.mrb[0].mxu0 %v6032
        %v6146 = vpop.f32.mrb[0].mxu0
        %v6147 = vadd.f32 %v5963, %v6146
        %v6148 = vpop.f32.mrb[0].mxu0
        %v6149 = vpop.f32.mrb[0].mxu0
        %v6150 = vadd.f32 %v5963, %v6149
        %v6151 = vpop.f32.mrb[0].mxu0
        %6152 = vmatprep.mubr.bf16.mxu0 0
        %6153 = vmatmul.mubr.bf16.gmra.mrb[0].mxu0 %v6035
        %v6154 = vpop.f32.mrb[0].mxu0
        %v6155 = vadd.f32 %v5963, %v6154
        %v6156 = vpop.f32.mrb[0].mxu0
        %v6157 = vpop.f32.mrb[0].mxu0
        %v6158 = vadd.f32 %v5963, %v6157
        %v6159 = vpop.f32.mrb[0].mxu0
        %6160 = vmatprep.mubr.bf16.mxu0 0
        %6161 = vmatmul.mubr.bf16.gmra.mrb[0].mxu0 %v6038
        %v6162 = vpop.f32.mrb[0].mxu0
        %v6163 = vadd.f32 %v5963, %v6162
        %v6164 = vpop.f32.mrb[0].mxu0
        %v6165 = vpop.f32.mrb[0].mxu0
        %v6166 = vadd.f32 %v5963, %v6165
        %v6167 = vpop.f32.mrb[0].mxu0
        %6168 = vmatprep.mubr.bf16.mxu0 0
        %6169 = vmatmul.mubr.bf16.gmra.mrb[0].mxu0 %v6041
        %v6170 = vpop.f32.mrb[0].mxu0
        %v6171 = vadd.f32 %v5963, %v6170
        %v6172 = vpop.f32.mrb[0].mxu0
        %v6173 = vpop.f32.mrb[0].mxu0
        %v6174 = vadd.f32 %v5963, %v6173
        %v6175 = vpop.f32.mrb[0].mxu0
        %6176 = vmatprep.mubr.bf16.mxu0 0
        %6177 = vmatmul.mubr.bf16.gmra.mrb[0].mxu0 %v6044
        %v6178 = vpop.f32.mrb[0].mxu0
        %v6179 = vadd.f32 %v5963, %v6178
        %v6180 = vpop.f32.mrb[0].mxu0
        %v6181 = vpop.f32.mrb[0].mxu0
        %v6182 = vadd.f32 %v5963, %v6181
        %v6183 = vpop.f32.mrb[0].mxu0
        %6184 = vmatprep.mubr.bf16.mxu0 0
        %6185 = vmatmul.mubr.bf16.gmra.mrb[0].mxu0 %v6047
        %v6186 = vpop.f32.mrb[0].mxu0
        %v6187 = vadd.f32 %v5963, %v6186
        %v6188 = vpop.f32.mrb[0].mxu0
        %v6189 = vpop.f32.mrb[0].mxu0
        %v6190 = vadd.f32 %v5963, %v6189
        %v6191 = vpop.f32.mrb[0].mxu0
        %6192 = vmatprep.mubr.bf16.mxu0 0
        %6193 = vmatmul.mubr.bf16.gmra.mrb[0].mxu0 %v6050
        %v6194 = vpop.f32.mrb[0].mxu0
        %v6195 = vadd.f32 %v5963, %v6194
        %v6196 = vpop.f32.mrb[0].mxu0
        %v6197 = vpop.f32.mrb[0].mxu0
        %v6198 = vadd.f32 %v5963, %v6197
        %v6199 = vpop.f32.mrb[0].mxu0
        %6200 = vmatprep.mubr.bf16.mxu0 0
        %6201 = vmatmul.mubr.bf16.gmra.mrb[0].mxu0 %v6053
        %v6202 = vpop.f32.mrb[0].mxu0
        %v6203 = vadd.f32 %v5963, %v6202
        %v6204 = vpop.f32.mrb[0].mxu0
        %v6205 = vpop.f32.mrb[0].mxu0
        %v6206 = vadd.f32 %v5963, %v6205
        %v6207 = vpop.f32.mrb[0].mxu0
        %6208 = vmatprep.mubr.bf16.mxu0 0
        %6209 = vmatmul.mubr.bf16.gmra.mrb[0].mxu0 %v6056
        %v6210 = vpop.f32.mrb[0].mxu0
        %v6211 = vadd.f32 %v5963, %v6210
        %v6212 = vpop.f32.mrb[0].mxu0
        %v6213 = vpop.f32.mrb[0].mxu0
        %v6214 = vadd.f32 %v5963, %v6213
        %v6215 = vpop.f32.mrb[0].mxu0
        %6216 = vmatprep.mubr.bf16.mxu0 0
        %6217 = vmatmul.mubr.bf16.gmra.mrb[0].mxu0 %v6059
        %v6218 = vpop.f32.mrb[0].mxu0
        %v6219 = vadd.f32 %v5963, %v6218
        %v6220 = vpop.f32.mrb[0].mxu0
        %v6221 = vpop.f32.mrb[0].mxu0
        %v6222 = vadd.f32 %v5963, %v6221
        %v6223 = vpop.f32.mrb[0].mxu0
        %6224 = vdwg.mxu0
        %v6225 = vmax.f32 %v6099, 0.0
        %v6226 = vmax.f32 %v6102, 0.0
        %v6227 = vmax.f32 %v6107, 0.0
        %v6228 = vmax.f32 %v6110, 0.0
        %v6229 = vmax.f32 %v6115, 0.0
        %v6230 = vmax.f32 %v6118, 0.0
        %v6231 = vmax.f32 %v6123, 0.0
        %v6232 = vmax.f32 %v6126, 0.0
        %v6233 = vmax.f32 %v6131, 0.0
        %v6234 = vmax.f32 %v6134, 0.0
        %v6235 = vmax.f32 %v6139, 0.0
        %v6236 = vmax.f32 %v6142, 0.0
        %v6237 = vmax.f32 %v6147, 0.0
        %v6238 = vmax.f32 %v6150, 0.0
        %v6239 = vmax.f32 %v6155, 0.0
        %v6240 = vmax.f32 %v6158, 0.0
        %v6241 = vmax.f32 %v6163, 0.0
        %v6242 = vmax.f32 %v6166, 0.0
        %v6243 = vmax.f32 %v6171, 0.0
        %v6244 = vmax.f32 %v6174, 0.0
        %v6245 = vmax.f32 %v6179, 0.0
        %v6246 = vmax.f32 %v6182, 0.0
        %v6247 = vmax.f32 %v6187, 0.0
        %v6248 = vmax.f32 %v6190, 0.0
        %v6249 = vmax.f32 %v6195, 0.0
        %v6250 = vmax.f32 %v6198, 0.0
        %v6251 = vmax.f32 %v6203, 0.0
        %v6252 = vmax.f32 %v6206, 0.0
        %v6253 = vmax.f32 %v6211, 0.0
        %v6254 = vmax.f32 %v6214, 0.0
        %v6255 = vmax.f32 %v6219, 0.0
        %v6256 = vmax.f32 %v6222, 0.0
        %6289 = vrot.lane.b32.xlu0 %v2896, 8
        %v6290 = vpop.permute.xlu0 %6289
        %6291 = vrot.lane.b32.xlu0 %v2897, 8
        %v6292 = vpop.permute.xlu0 %6291
        %6293 = vrot.lane.b32.xlu0 %v2898, 8
        %v6294 = vpop.permute.xlu0 %6293
        %6295 = vrot.lane.b32.xlu0 %v2899, 8
        %v6296 = vpop.permute.xlu0 %6295
        %6297 = vrot.lane.b32.xlu0 %v2900, 8
        %v6298 = vpop.permute.xlu0 %6297
        %6299 = vrot.lane.b32.xlu0 %v2901, 8
        %v6300 = vpop.permute.xlu0 %6299
        %6301 = vrot.lane.b32.xlu0 %v2902, 8
        %v6302 = vpop.permute.xlu0 %6301
        %6303 = vrot.lane.b32.xlu0 %v2903, 8
        %v6304 = vpop.permute.xlu0 %6303
        %6305 = vrot.lane.b32.xlu0 %v2904, 8
        %v6306 = vpop.permute.xlu0 %6305
        %6307 = vrot.lane.b32.xlu0 %v2905, 8
        %v6308 = vpop.permute.xlu0 %6307
        %6309 = vrot.lane.b32.xlu0 %v2906, 8
        %v6310 = vpop.permute.xlu0 %6309
        %6311 = vrot.lane.b32.xlu0 %v2907, 8
        %v6312 = vpop.permute.xlu0 %6311
        %6313 = vrot.lane.b32.xlu0 %v2908, 8
        %v6314 = vpop.permute.xlu0 %6313
        %6315 = vrot.lane.b32.xlu0 %v2909, 8
        %v6316 = vpop.permute.xlu0 %6315
        %6317 = vrot.lane.b32.xlu0 %v2910, 8
        %v6318 = vpop.permute.xlu0 %6317
        %6319 = vrot.lane.b32.xlu0 %v2911, 8
        %v6320 = vpop.permute.xlu0 %6319
        %6321 = vrot.lane.b32.xlu0 %v2912, 8
        %v6322 = vpop.permute.xlu0 %6321
        %6323 = vrot.lane.b32.xlu0 %v2913, 8
        %v6324 = vpop.permute.xlu0 %6323
        %6325 = vrot.lane.b32.xlu0 %v2914, 8
        %v6326 = vpop.permute.xlu0 %6325
        %6327 = vrot.lane.b32.xlu0 %v2915, 8
        %v6328 = vpop.permute.xlu0 %6327
        %6329 = vrot.lane.b32.xlu0 %v2916, 8
        %v6330 = vpop.permute.xlu0 %6329
        %6331 = vrot.lane.b32.xlu0 %v2917, 8
        %v6332 = vpop.permute.xlu0 %6331
        %6333 = vrot.lane.b32.xlu0 %v2918, 8
        %v6334 = vpop.permute.xlu0 %6333
        %6335 = vrot.lane.b32.xlu0 %v2919, 8
        %v6336 = vpop.permute.xlu0 %6335
        %6337 = vrot.lane.b32.xlu0 %v2920, 8
        %v6338 = vpop.permute.xlu0 %6337
        %6339 = vrot.lane.b32.xlu0 %v2921, 8
        %v6340 = vpop.permute.xlu0 %6339
        %6341 = vrot.lane.b32.xlu0 %v2922, 8
        %v6342 = vpop.permute.xlu0 %6341
        %6343 = vrot.lane.b32.xlu0 %v2923, 8
        %v6344 = vpop.permute.xlu0 %6343
        %6345 = vrot.lane.b32.xlu0 %v2924, 8
        %v6346 = vpop.permute.xlu0 %6345
        %6347 = vrot.lane.b32.xlu0 %v2925, 8
        %v6348 = vpop.permute.xlu0 %6347
        %6349 = vrot.lane.b32.xlu0 %v2926, 8
        %v6350 = vpop.permute.xlu0 %6349
        %6351 = vrot.lane.b32.xlu0 %v2927, 8
        %v6352 = vpop.permute.xlu0 %6351
        %6417 = vrot.lane.b32.xlu0 %v4569, 16
        %v6418 = vpop.permute.xlu0 %6417
        %6419 = vrot.lane.b32.xlu0 %v4570, 16
        %v6420 = vpop.permute.xlu0 %6419
        %6421 = vrot.lane.b32.xlu0 %v4571, 16
        %v6422 = vpop.permute.xlu0 %6421
        %6423 = vrot.lane.b32.xlu0 %v4572, 16
        %v6424 = vpop.permute.xlu0 %6423
        %6425 = vrot.lane.b32.xlu0 %v4573, 16
        %v6426 = vpop.permute.xlu0 %6425
        %6427 = vrot.lane.b32.xlu0 %v4574, 16
        %v6428 = vpop.permute.xlu0 %6427
        %6429 = vrot.lane.b32.xlu0 %v4575, 16
        %v6430 = vpop.permute.xlu0 %6429
        %6431 = vrot.lane.b32.xlu0 %v4576, 16
        %v6432 = vpop.permute.xlu0 %6431
        %6433 = vrot.lane.b32.xlu0 %v4577, 16
        %v6434 = vpop.permute.xlu0 %6433
        %6435 = vrot.lane.b32.xlu0 %v4578, 16
        %v6436 = vpop.permute.xlu0 %6435
        %6437 = vrot.lane.b32.xlu0 %v4579, 16
        %v6438 = vpop.permute.xlu0 %6437
        %6439 = vrot.lane.b32.xlu0 %v4580, 16
        %v6440 = vpop.permute.xlu0 %6439
        %6441 = vrot.lane.b32.xlu0 %v4581, 16
        %v6442 = vpop.permute.xlu0 %6441
        %6443 = vrot.lane.b32.xlu0 %v4582, 16
        %v6444 = vpop.permute.xlu0 %6443
        %6445 = vrot.lane.b32.xlu0 %v4583, 16
        %v6446 = vpop.permute.xlu0 %6445
        %6447 = vrot.lane.b32.xlu0 %v4584, 16
        %v6448 = vpop.permute.xlu0 %6447
        %6449 = vrot.lane.b32.xlu0 %v4585, 16
        %v6450 = vpop.permute.xlu0 %6449
        %6451 = vrot.lane.b32.xlu0 %v4586, 16
        %v6452 = vpop.permute.xlu0 %6451
        %6453 = vrot.lane.b32.xlu0 %v4587, 16
        %v6454 = vpop.permute.xlu0 %6453
        %6455 = vrot.lane.b32.xlu0 %v4588, 16
        %v6456 = vpop.permute.xlu0 %6455
        %6457 = vrot.lane.b32.xlu0 %v4589, 16
        %v6458 = vpop.permute.xlu0 %6457
        %6459 = vrot.lane.b32.xlu0 %v4590, 16
        %v6460 = vpop.permute.xlu0 %6459
        %6461 = vrot.lane.b32.xlu0 %v4591, 16
        %v6462 = vpop.permute.xlu0 %6461
        %6463 = vrot.lane.b32.xlu0 %v4592, 16
        %v6464 = vpop.permute.xlu0 %6463
        %6465 = vrot.lane.b32.xlu0 %v4593, 16
        %v6466 = vpop.permute.xlu0 %6465
        %6467 = vrot.lane.b32.xlu0 %v4594, 16
        %v6468 = vpop.permute.xlu0 %6467
        %6469 = vrot.lane.b32.xlu0 %v4595, 16
        %v6470 = vpop.permute.xlu0 %6469
        %6471 = vrot.lane.b32.xlu0 %v4596, 16
        %v6472 = vpop.permute.xlu0 %6471
        %6473 = vrot.lane.b32.xlu0 %v4597, 16
        %v6474 = vpop.permute.xlu0 %6473
        %6475 = vrot.lane.b32.xlu0 %v4598, 16
        %v6476 = vpop.permute.xlu0 %6475
        %6477 = vrot.lane.b32.xlu0 %v4599, 16
        %v6478 = vpop.permute.xlu0 %6477
        %6479 = vrot.lane.b32.xlu0 %v4600, 16
        %v6480 = vpop.permute.xlu0 %6479
        %6545 = vrot.lane.b32.xlu0 %v6225, 24
        %v6546 = vpop.permute.xlu0 %6545
        %6547 = vrot.lane.b32.xlu0 %v6226, 24
        %v6548 = vpop.permute.xlu0 %6547
        %6549 = vrot.lane.b32.xlu0 %v6227, 24
        %v6550 = vpop.permute.xlu0 %6549
        %6551 = vrot.lane.b32.xlu0 %v6228, 24
        %v6552 = vpop.permute.xlu0 %6551
        %6553 = vrot.lane.b32.xlu0 %v6229, 24
        %v6554 = vpop.permute.xlu0 %6553
        %6555 = vrot.lane.b32.xlu0 %v6230, 24
        %v6556 = vpop.permute.xlu0 %6555
        %6557 = vrot.lane.b32.xlu0 %v6231, 24
        %v6558 = vpop.permute.xlu0 %6557
        %6559 = vrot.lane.b32.xlu0 %v6232, 24
        %v6560 = vpop.permute.xlu0 %6559
        %6561 = vrot.lane.b32.xlu0 %v6233, 24
        %v6562 = vpop.permute.xlu0 %6561
        %6563 = vrot.lane.b32.xlu0 %v6234, 24
        %v6564 = vpop.permute.xlu0 %6563
        %6565 = vrot.lane.b32.xlu0 %v6235, 24
        %v6566 = vpop.permute.xlu0 %6565
        %6567 = vrot.lane.b32.xlu0 %v6236, 24
        %v6568 = vpop.permute.xlu0 %6567
        %6569 = vrot.lane.b32.xlu0 %v6237, 24
        %v6570 = vpop.permute.xlu0 %6569
        %6571 = vrot.lane.b32.xlu0 %v6238, 24
        %v6572 = vpop.permute.xlu0 %6571
        %6573 = vrot.lane.b32.xlu0 %v6239, 24
        %v6574 = vpop.permute.xlu0 %6573
        %6575 = vrot.lane.b32.xlu0 %v6240, 24
        %v6576 = vpop.permute.xlu0 %6575
        %6577 = vrot.lane.b32.xlu0 %v6241, 24
        %v6578 = vpop.permute.xlu0 %6577
        %6579 = vrot.lane.b32.xlu0 %v6242, 24
        %v6580 = vpop.permute.xlu0 %6579
        %6581 = vrot.lane.b32.xlu0 %v6243, 24
        %v6582 = vpop.permute.xlu0 %6581
        %6583 = vrot.lane.b32.xlu0 %v6244, 24
        %v6584 = vpop.permute.xlu0 %6583
        %6585 = vrot.lane.b32.xlu0 %v6245, 24
        %v6586 = vpop.permute.xlu0 %6585
        %6587 = vrot.lane.b32.xlu0 %v6246, 24
        %v6588 = vpop.permute.xlu0 %6587
        %6589 = vrot.lane.b32.xlu0 %v6247, 24
        %v6590 = vpop.permute.xlu0 %6589
        %6591 = vrot.lane.b32.xlu0 %v6248, 24
        %v6592 = vpop.permute.xlu0 %6591
        %6593 = vrot.lane.b32.xlu0 %v6249, 24
        %v6594 = vpop.permute.xlu0 %6593
        %6595 = vrot.lane.b32.xlu0 %v6250, 24
        %v6596 = vpop.permute.xlu0 %6595
        %6597 = vrot.lane.b32.xlu0 %v6251, 24
        %v6598 = vpop.permute.xlu0 %6597
        %6599 = vrot.lane.b32.xlu0 %v6252, 24
        %v6600 = vpop.permute.xlu0 %6599
        %6601 = vrot.lane.b32.xlu0 %v6253, 24
        %v6602 = vpop.permute.xlu0 %6601
        %6603 = vrot.lane.b32.xlu0 %v6254, 24
        %v6604 = vpop.permute.xlu0 %6603
        %6605 = vrot.lane.b32.xlu0 %v6255, 24
        %v6606 = vpop.permute.xlu0 %6605
        %6607 = vrot.lane.b32.xlu0 %v6256, 24
        %v6608 = vpop.permute.xlu0 %6607
        %v6641 = vsel %vm2002, %v1178, %v6290
        %v6642 = vsel %vm2002, %v1180, %v6292
        %v6643 = vsel %vm2002, %v1183, %v6294
        %v6644 = vsel %vm2002, %v1185, %v6296
        %v6645 = vsel %vm2002, %v1188, %v6298
        %v6646 = vsel %vm2002, %v1190, %v6300
        %v6647 = vsel %vm2002, %v1193, %v6302
        %v6648 = vsel %vm2002, %v1195, %v6304
        %v6649 = vsel %vm2002, %v1198, %v6306
        %v6650 = vsel %vm2002, %v1200, %v6308
        %v6651 = vsel %vm2002, %v1203, %v6310
        %v6652 = vsel %vm2002, %v1205, %v6312
        %v6653 = vsel %vm2002, %v1208, %v6314
        %v6654 = vsel %vm2002, %v1210, %v6316
        %v6655 = vsel %vm2002, %v1213, %v6318
        %v6656 = vsel %vm2002, %v1215, %v6320
        %v6657 = vsel %vm2002, %v1218, %v6322
        %v6658 = vsel %vm2002, %v1220, %v6324
        %v6659 = vsel %vm2002, %v1223, %v6326
        %v6660 = vsel %vm2002, %v1225, %v6328
        %v6661 = vsel %vm2002, %v1228, %v6330
        %v6662 = vsel %vm2002, %v1230, %v6332
        %v6663 = vsel %vm2002, %v1233, %v6334
        %v6664 = vsel %vm2002, %v1235, %v6336
        %v6665 = vsel %vm2002, %v1238, %v6338
        %v6666 = vsel %vm2002, %v1240, %v6340
        %v6667 = vsel %vm2002, %v1243, %v6342
        %v6668 = vsel %vm2002, %v1245, %v6344
        %v6669 = vsel %vm2002, %v1248, %v6346
        %v6670 = vsel %vm2002, %v1250, %v6348
        %v6671 = vsel %vm2002, %v1253, %v6350
        %v6672 = vsel %vm2002, %v1255, %v6352
        %v6673 = vsel %vm3468, %v6641, %v6418
        %v6674 = vsel %vm3468, %v6642, %v6420
        %v6675 = vsel %vm3468, %v6643, %v6422
        %v6676 = vsel %vm3468, %v6644, %v6424
        %v6677 = vsel %vm3468, %v6645, %v6426
        %v6678 = vsel %vm3468, %v6646, %v6428
        %v6679 = vsel %vm3468, %v6647, %v6430
        %v6680 = vsel %vm3468, %v6648, %v6432
        %v6681 = vsel %vm3468, %v6649, %v6434
        %v6682 = vsel %vm3468, %v6650, %v6436
        %v6683 = vsel %vm3468, %v6651, %v6438
        %v6684 = vsel %vm3468, %v6652, %v6440
        %v6685 = vsel %vm3468, %v6653, %v6442
        %v6686 = vsel %vm3468, %v6654, %v6444
        %v6687 = vsel %vm3468, %v6655, %v6446
        %v6688 = vsel %vm3468, %v6656, %v6448
        %v6689 = vsel %vm3468, %v6657, %v6450
        %v6690 = vsel %vm3468, %v6658, %v6452
        %v6691 = vsel %vm3468, %v6659, %v6454
        %v6692 = vsel %vm3468, %v6660, %v6456
        %v6693 = vsel %vm3468, %v6661, %v6458
        %v6694 = vsel %vm3468, %v6662, %v6460
        %v6695 = vsel %vm3468, %v6663, %v6462
        %v6696 = vsel %vm3468, %v6664, %v6464
        %v6697 = vsel %vm3468, %v6665, %v6466
        %v6698 = vsel %vm3468, %v6666, %v6468
        %v6699 = vsel %vm3468, %v6667, %v6470
        %v6700 = vsel %vm3468, %v6668, %v6472
        %v6701 = vsel %vm3468, %v6669, %v6474
        %v6702 = vsel %vm3468, %v6670, %v6476
        %v6703 = vsel %vm3468, %v6671, %v6478
        %v6704 = vsel %vm3468, %v6672, %v6480
        %vm6705 = vcmask 195584
        %v6706 = vsel %vm6705, %v6673, %v6546
        %v6707 = vsel %vm6705, %v6674, %v6548
        %v6708 = vsel %vm6705, %v6675, %v6550
        %v6709 = vsel %vm6705, %v6676, %v6552
        %v6710 = vsel %vm6705, %v6677, %v6554
        %v6711 = vsel %vm6705, %v6678, %v6556
        %v6712 = vsel %vm6705, %v6679, %v6558
        %v6713 = vsel %vm6705, %v6680, %v6560
        %v6714 = vsel %vm6705, %v6681, %v6562
        %v6715 = vsel %vm6705, %v6682, %v6564
        %v6716 = vsel %vm6705, %v6683, %v6566
        %v6717 = vsel %vm6705, %v6684, %v6568
        %v6718 = vsel %vm6705, %v6685, %v6570
        %v6719 = vsel %vm6705, %v6686, %v6572
        %v6720 = vsel %vm6705, %v6687, %v6574
        %v6721 = vsel %vm6705, %v6688, %v6576
        %v6722 = vsel %vm6705, %v6689, %v6578
        %v6723 = vsel %vm6705, %v6690, %v6580
        %v6724 = vsel %vm6705, %v6691, %v6582
        %v6725 = vsel %vm6705, %v6692, %v6584
        %v6726 = vsel %vm6705, %v6693, %v6586
        %v6727 = vsel %vm6705, %v6694, %v6588
        %v6728 = vsel %vm6705, %v6695, %v6590
        %v6729 = vsel %vm6705, %v6696, %v6592
        %v6730 = vsel %vm6705, %v6697, %v6594
        %v6731 = vsel %vm6705, %v6698, %v6596
        %v6732 = vsel %vm6705, %v6699, %v6598
        %v6733 = vsel %vm6705, %v6700, %v6600
        %v6734 = vsel %vm6705, %v6701, %v6602
        %v6735 = vsel %vm6705, %v6702, %v6604
        %v6736 = vsel %vm6705, %v6703, %v6606
        %v6737 = vsel %vm6705, %v6704, %v6608
        %6738 = vst [vmem:[%s454] sm:$0xff] %v6706
        %6739 = vst [vmem:[%s454 + $0x8] sm:$0xff] %v6707
        %6740 = vst [vmem:[%s454 + $0x10] sm:$0xff] %v6708
        %6741 = vst [vmem:[%s454 + $0x18] sm:$0xff] %v6709
        %6742 = vst [vmem:[%s454 + $0x20] sm:$0xff] %v6710
        %6743 = vst [vmem:[%s454 + $0x28] sm:$0xff] %v6711
        %6744 = vst [vmem:[%s454 + $0x30] sm:$0xff] %v6712
        %6745 = vst [vmem:[%s454 + $0x38] sm:$0xff] %v6713
        %6746 = vst [vmem:[%s454 + $0x40] sm:$0xff] %v6714
        %6747 = vst [vmem:[%s454 + $0x48] sm:$0xff] %v6715
        %6748 = vst [vmem:[%s454 + $0x50] sm:$0xff] %v6716
        %6749 = vst [vmem:[%s454 + $0x58] sm:$0xff] %v6717
        %6750 = vst [vmem:[%s454 + $0x60] sm:$0xff] %v6718
        %6751 = vst [vmem:[%s454 + $0x68] sm:$0xff] %v6719
        %6752 = vst [vmem:[%s454 + $0x70] sm:$0xff] %v6720
        %6753 = vst [vmem:[%s454 + $0x78] sm:$0xff] %v6721
        %6754 = vst [vmem:[%s454 + $0x80] sm:$0xff] %v6722
        %6755 = vst [vmem:[%s454 + $0x88] sm:$0xff] %v6723
        %6756 = vst [vmem:[%s454 + $0x90] sm:$0xff] %v6724
        %6757 = vst [vmem:[%s454 + $0x98] sm:$0xff] %v6725
        %6758 = vst [vmem:[%s454 + $0xa0] sm:$0xff] %v6726
        %6759 = vst [vmem:[%s454 + $0xa8] sm:$0xff] %v6727
        %6760 = vst [vmem:[%s454 + $0xb0] sm:$0xff] %v6728
        %6761 = vst [vmem:[%s454 + $0xb8] sm:$0xff] %v6729
        %6762 = vst [vmem:[%s454 + $0xc0] sm:$0xff] %v6730
        %6763 = vst [vmem:[%s454 + $0xc8] sm:$0xff] %v6731
        %6764 = vst [vmem:[%s454 + $0xd0] sm:$0xff] %v6732
        %6765 = vst [vmem:[%s454 + $0xd8] sm:$0xff] %v6733
        %6766 = vst [vmem:[%s454 + $0xe0] sm:$0xff] %v6734
        %6767 = vst [vmem:[%s454 + $0xe8] sm:$0xff] %v6735
        %6768 = vst [vmem:[%s454 + $0xf0] sm:$0xff] %v6736
        %6769 = vst [vmem:[%s454 + $0xf8] sm:$0xff] %v6737
        %s6770 = sand.u32 %s232, 1
        %s6771 = scalar_lea.sflag [#allocation4], %s6770
        %s6772 = sand.u32 %s232, 1
        %s6773 = smul.addr %s6772, 256
        %s6774 = scalar_lea.vmem [#allocation17], %s6773
        // Predicated region
        $region93: #{tpu_custom_call.1} parent=55 // pred_check
          %p6775 = pneg %p242
        $region94: #{tpu_custom_call.1} parent=55 // pred_check_branch
          %6777 = sbr.rel (%p6775) target = $region96
        $region95: #{tpu_custom_call.1} parent=55 // pred_region
          %s6779 = ssub.s32 4096, 4096
          %6780 = vsyncadd %s6771, %s6779
          %s6781 = smul.addr %s30, 32
          %s6782 = smul.addr %s6781, 128
          %s6783 = scalar_lea.hbm %s9, %s6782
          %s6784 = sshll.u32 %s6774, 4
          %s6785 = int_to_ptr.vmem [resolvable:$true] %s6784
          %6790 = dma.vmem_to_hbm [thread:$0]  %s6785, 4096, %s6783, %s6771, 128, 128, 8
        $region96: #{tpu_custom_call.1} parent=55 // pred_fallthru
          _
      $region56: #{tpu_custom_call.1} parent=5 // pred_fallthru
        _
      %p6791 = scmp.le.s32.totalorder 2, %s25
      // Predicated region
      $region97: #{tpu_custom_call.1} parent=5 // pred_check
        %p6792 = pneg %p6791
      $region98: #{tpu_custom_call.1} parent=5 // pred_check_branch
        %6794 = sbr.rel (%p6792) target = $region100
      $region99: #{tpu_custom_call.1} parent=5 // pred_region
        %s6795 = ssub.s32 %s25, 2
        // Predicated region
        $region101: #{tpu_custom_call.1} parent=99 // pred_check
          %p6796 = pneg %p248
        $region102: #{tpu_custom_call.1} parent=99 // pred_check_branch
          %6798 = sbr.rel (%p6796) target = $region104
        $region103: #{tpu_custom_call.1} parent=99 // pred_region
          %s6799 = sand.u32 %s233, 1
          %s6800 = scalar_lea.sflag [#allocation4], %s6799
          %s6801 = sand.u32 %s233, 1
          %s6802 = smul.addr %s6801, 256
          %s6803 = scalar_lea.vmem [#allocation17], %s6802
          %6804 = dma.done %s6800, 4096
        $region104: #{tpu_custom_call.1} parent=99 // pred_fallthru
          _
      $region100: #{tpu_custom_call.1} parent=5 // pred_fallthru
        _
    $region6: #{tpu_custom_call.1} parent=1 // loop_footer
      %s29 = sadd.s32 1, %s25
    $region7: #{tpu_custom_call.1} parent=1 // loop_footer_branch
      %24 = sbr.rel target = $region3
    $region8: #{tpu_custom_call.1} parent=1 // loop_exit
      _
    %6805 = vsyncpa [#allocation3], 1
    %s6806 = scalar_lea.sflag [#allocation3], 1
    %6807 = vsyncpa %s6806, 1
    %6808 = vsyncpa [#allocation6], 1
    %6809 = vsyncpa [#allocation9], 1
    %6810 = vsyncpa [#allocation12], 1
    %6811 = vsyncpa [#allocation15], 1
    %6812 = vsyncpa [#allocation4], 1
    %s6813 = scalar_lea.sflag [#allocation4], 1
    %6814 = vsyncpa %s6813, 1

</llo_original>
